<compile_context>
chip_gen: v7x
topology: tpu7x:2x2x1
jax: 0.10.0
libtpu: 0.0.40
codegen_flags: <defaults>
</compile_context>

<pallas_src>
import functools
import math

import jax
import jax.numpy as jnp
from jax.experimental import pallas as pl
from jax.experimental.pallas import tpu as pltpu

LRELU_SLOPE = 0.2
INV_SQRT2 = 1.0 / math.sqrt(2.0)


# --------------------------------------------------------------------------- #
# in-kernel helpers
# --------------------------------------------------------------------------- #

def _im2col_w(v):
    """(r, W, C) -> (r, W, 3C): stack input columns c-1, c, c+1 (zero outside)
    along lanes so the 3x3 conv becomes one K = 3*C matmul per kernel row."""
    z = jnp.zeros_like(v[:, :1, :])
    left = jnp.concatenate([z, v[:, :-1, :]], axis=1)     # input col c-1 (dx=0)
    right = jnp.concatenate([v[:, 1:, :], z], axis=1)     # input col c+1 (dx=2)
    return jnp.concatenate([left, v, right], axis=-1)


def _hblur_ref(ref):
    """Horizontal [1,3,3,1]/8 stride-2 filter over the replication-padded row.
    Even/odd column phases are read once each straight from the VMEM ref.
    (r, W, C) ref -> (r, W/2, C) f32 value."""
    r, w, c = ref.shape
    half = w // 2
    ve = ref[:, pl.ds(0, half, 2), :].astype(jnp.float32)           # v[2j]
    vo = ref[:, pl.ds(1, half, 2), :].astype(jnp.float32)           # v[2j+1]
    if half == 1:
        vol, ver = ve, vo
    else:
        vol = jnp.concatenate([ve[:, :1], vo[:, :-1]], axis=1)      # v[2j-1] edge
        ver = jnp.concatenate([ve[:, 1:], vo[:, -1:]], axis=1)      # v[2j+2] edge
    return (vol + 3.0 * ve + 3.0 * vo + ver) * 0.125


def _vblur3(h_top, h_mid, h_bot):
    """Vertical [1,3,3,1]/8 stride-2 filter; the single replication-clamped
    rows above/below the tile arrive as separate 1-row pieces."""
    th = h_mid.shape[0]
    hm = h_mid.reshape(th // 2, 2, *h_mid.shape[1:])      # leading-dim split
    h0, h1 = hm[:, 0], hm[:, 1]
    if th == 2:
        p, q = h_top, h_bot
    else:
        p = jnp.concatenate([h_top, h1[:-1]], axis=0)
        q = jnp.concatenate([h0[1:], h_bot], axis=0)
    return (p + 3.0 * h0 + 3.0 * h1 + q) * 0.125


# --------------------------------------------------------------------------- #
# stage 1: conv3x3 + LReLU -> y1 ; residual = 1x1conv(DownSample(x)) -> res
# --------------------------------------------------------------------------- #

def _stage1_kernel(xt_ref, xm_ref, xb_ref, w1_ref, b1_ref, wr_ref, br_ref,
                   y1_ref, res_ref, cols_ref):
    th, w_out, _ = y1_ref.shape
    k3 = cols_ref.shape[-1]
    cdt = w1_ref.dtype
    t = pl.program_id(1)
    last = pl.num_programs(1) - 1
    keep_top = (t > 0).astype(jnp.float32)       # zero -> conv zero padding
    keep_bot = (t < last).astype(jnp.float32)

    xt = xt_ref[...]          # x row  p0-1 (index clamped -> replication), f32
    xm = xm_ref[...]          # x rows p0 .. p0+th-1
    xb = xb_ref[...]          # x row  p0+th (index clamped -> replication)

    # -- EqualizedConv2d 3x3 (zero pad 1) + LeakyReLU ------------------------
    # im2col window rows p0-1 .. p0+th written piecewise into VMEM scratch.
    cols_ref[0:1] = _im2col_w((xt * keep_top).astype(cdt))
    cols_ref[1:th + 1] = _im2col_w(xm.astype(cdt))
    cols_ref[th + 1:th + 2] = _im2col_w((xb * keep_bot).astype(cdt))

    acc = jnp.dot(cols_ref[0:th].reshape(th * w_out, k3), w1_ref[0],
                  preferred_element_type=jnp.float32)
    acc = acc + jnp.dot(cols_ref[1:th + 1].reshape(th * w_out, k3), w1_ref[1],
                        preferred_element_type=jnp.float32)
    acc = acc + jnp.dot(cols_ref[2:th + 2].reshape(th * w_out, k3), w1_ref[2],
                        preferred_element_type=jnp.float32)
    v = acc + b1_ref[...]
    y1 = jnp.maximum(v, LRELU_SLOPE * v)
    y1_ref[...] = y1.reshape(th, w_out, -1).astype(y1_ref.dtype)

    # -- residual: DownSample(x) -> EqualizedConv2d 1x1 ----------------------
    # blur runs on f32 x; clamped halo rows are exactly the replication pad.
    blur = _vblur3(_hblur_ref(xt_ref), _hblur_ref(xm_ref), _hblur_ref(xb_ref))
    tho, wo, cin = blur.shape
    r = jnp.dot(blur.reshape(tho * wo, cin).astype(cdt), wr_ref[...],
                preferred_element_type=jnp.float32)
    res_ref[...] = (r + br_ref[...]).reshape(tho, wo, -1).astype(res_ref.dtype)


def _stage1(x, w1, b1, wr, br, th, out_dtype, vmem_limit):
    B, H, W, Cin = x.shape
    Cout = wr.shape[-1]
    pbytes = jnp.dtype(out_dtype).itemsize
    cost = pl.CostEstimate(
        flops=2 * B * H * W * 9 * Cin * Cin
              + 2 * B * (H // 2) * (W // 2) * Cin * Cout
              + 8 * B * H * W * Cin,
        transcendentals=0,
        bytes_accessed=B * H * W * Cin * (4 + pbytes)
                       + B * (H // 2) * (W // 2) * Cout * 4)
    return pl.pallas_call(
        _stage1_kernel,
        out_shape=(jax.ShapeDtypeStruct((B, H, W, Cin), out_dtype),
                   jax.ShapeDtypeStruct((B, H // 2, W // 2, Cout), jnp.float32)),
        grid=(B, H // th),
        in_specs=[
            pl.BlockSpec((None, 1, W, Cin),
                         lambda n, t: (n, jnp.maximum(t * th - 1, 0), 0, 0)),
            pl.BlockSpec((None, th, W, Cin), lambda n, t: (n, t, 0, 0)),
            pl.BlockSpec((None, 1, W, Cin),
                         lambda n, t: (n, jnp.minimum((t + 1) * th, H - 1), 0, 0)),
            pl.BlockSpec((3, 3 * Cin, Cin), lambda n, t: (0, 0, 0)),
            pl.BlockSpec((1, Cin), lambda n, t: (0, 0)),
            pl.BlockSpec((Cin, Cout), lambda n, t: (0, 0)),
            pl.BlockSpec((1, Cout), lambda n, t: (0, 0)),
        ],
        out_specs=[
            pl.BlockSpec((None, th, W, Cin), lambda n, t: (n, t, 0, 0)),
            pl.BlockSpec((None, th // 2, W // 2, Cout), lambda n, t: (n, t, 0, 0)),
        ],
        scratch_shapes=[pltpu.VMEM((th + 2, W, 3 * Cin), out_dtype)],
        compiler_params=pltpu.CompilerParams(
            dimension_semantics=("parallel", "parallel"),
            vmem_limit_bytes=vmem_limit),
        cost_estimate=cost,
    )(x, x, x, w1, b1, wr, br)


# --------------------------------------------------------------------------- #
# stage 2: conv3x3 + LReLU + DownSample + residual-add + 1/sqrt(2) (fused)
# --------------------------------------------------------------------------- #

def _stage2_kernel(yt_ref, ym_ref, yb_ref, res_ref, w2_ref, b2_ref,
                   o_ref, cols_ref, y2_ref):
    tho, wo, cout = o_ref.shape
    nrow, w_full, _ = y2_ref.shape                 # nrow = 2*tho + 2
    k3 = cols_ref.shape[-1]
    cdt = ym_ref.dtype
    t = pl.program_id(1)
    last = pl.num_programs(1) - 1
    at_top = t == 0
    at_bot = t == last
    keep_top = (t > 0).astype(cdt)
    keep_bot = (t < last).astype(cdt)

    # -- conv3x3 + LReLU for y2 rows 2*j0-1 .. 2*j0+2*tho (one extra row above
    #    and below the tile; those become replication rows at the image edge).
    cols_ref[0:2] = _im2col_w(yt_ref[...] * keep_top)
    cols_ref[2:nrow] = _im2col_w(ym_ref[...])
    cols_ref[nrow:nrow + 2] = _im2col_w(yb_ref[...] * keep_bot)

    acc = jnp.dot(cols_ref[0:nrow].reshape(nrow * w_full, k3), w2_ref[0],
                  preferred_element_type=jnp.float32)
    acc = acc + jnp.dot(cols_ref[1:nrow + 1].reshape(nrow * w_full, k3),
                        w2_ref[1], preferred_element_type=jnp.float32)
    acc = acc + jnp.dot(cols_ref[2:nrow + 2].reshape(nrow * w_full, k3),
                        w2_ref[2], preferred_element_type=jnp.float32)
    v = acc + b2_ref[...]
    y2_ref[...] = jnp.maximum(v, LRELU_SLOPE * v).reshape(nrow, w_full, cout)

    # replication rows at the image boundary (Smooth's edge pad along H)
    @pl.when(at_top)
    def _():
        y2_ref[0:1] = y2_ref[1:2]

    @pl.when(at_bot)
    def _():
        y2_ref[nrow - 1:nrow] = y2_ref[nrow - 2:nrow - 1]

    # -- DownSample(y2), add residual, scale ---------------------------------
    h = _hblur_ref(y2_ref)                               # (nrow, W/2, Cout) f32
    hr = h.reshape(tho + 1, 2, wo, cout)                 # leading-dim split
    he, ho = hr[:, 0], hr[:, 1]
    main = (he[:-1] + 3.0 * ho[:-1] + 3.0 * he[1:] + ho[1:]) * 0.125
    o_ref[...] = ((main + res_ref[...]) * INV_SQRT2).astype(o_ref.dtype)


def _stage2(y1, res, w2, b2, tho, vmem_limit):
    B, H, W, Cin = y1.shape
    Cout = w2.shape[-1]
    Ho, Wo = H // 2, W // 2
    nrow = 2 * tho + 2
    cdt = y1.dtype
    pbytes = jnp.dtype(cdt).itemsize
    cost = pl.CostEstimate(
        flops=2 * B * (Ho // tho) * nrow * W * 9 * Cin * Cout
              + 8 * B * H * W * Cout,
        transcendentals=0,
        bytes_accessed=B * H * W * Cin * pbytes + B * Ho * Wo * Cout * 8)
    return pl.pallas_call(
        _stage2_kernel,
        out_shape=jax.ShapeDtypeStruct((B, Ho, Wo, Cout), jnp.float32),
        grid=(B, Ho // tho),
        in_specs=[
            pl.BlockSpec((None, 2, W, Cin),
                         lambda n, t: (n, jnp.maximum(t * tho - 1, 0), 0, 0)),
            pl.BlockSpec((None, 2 * tho, W, Cin), lambda n, t: (n, t, 0, 0)),
            pl.BlockSpec((None, 2, W, Cin),
                         lambda n, t: (n, jnp.minimum((t + 1) * tho, Ho - 1), 0, 0)),
            pl.BlockSpec((None, tho, Wo, Cout), lambda n, t: (n, t, 0, 0)),
            pl.BlockSpec((3, 3 * Cin, Cout), lambda n, t: (0, 0, 0)),
            pl.BlockSpec((1, Cout), lambda n, t: (0, 0)),
        ],
        out_specs=pl.BlockSpec((None, tho, Wo, Cout), lambda n, t: (n, t, 0, 0)),
        scratch_shapes=[
            pltpu.VMEM((2 * tho + 4, W, 3 * Cin), cdt),
            pltpu.VMEM((nrow, W, Cout), jnp.float32),
        ],
        compiler_params=pltpu.CompilerParams(
            dimension_semantics=("parallel", "parallel"),
            vmem_limit_bytes=vmem_limit),
        cost_estimate=cost,
    )(y1, y1, y1, res, w2, b2)


# --------------------------------------------------------------------------- #
# wrapper-side glue: weight prep, VMEM budgeting, tile picking
# --------------------------------------------------------------------------- #

def _prep_conv3(w_oihw, dtype):
    """Equalized-LR scale folded in; layout (kh, kw*Cin, Cout) so each dy is a
    single K = 3*Cin matmul matching the im2col lane order (dx-major)."""
    o, i, kh, kw = w_oihw.shape
    scale = 1.0 / math.sqrt(i * kh * kw)
    w = jnp.transpose(w_oihw.astype(jnp.float32) * scale, (2, 3, 1, 0))
    return w.reshape(kh, kw * i, o).astype(dtype)


def _prep_conv1(w_oihw, dtype):
    o, i, _, _ = w_oihw.shape
    scale = 1.0 / math.sqrt(i)
    return (jnp.transpose(w_oihw[:, :, 0, 0].astype(jnp.float32), (1, 0))
            * scale).astype(dtype)


def _tpu_vmem_capacity_bytes():
    try:
        info = pltpu.get_tpu_info()
        cap = getattr(info, "vmem_capacity_bytes", None)
        if cap:
            return int(cap)
    except Exception:
        pass
    try:
        kind = jax.devices()[0].device_kind.lower()
    except Exception:
        kind = ""
    return (64 if "7" in kind else 128) * 1024 * 1024


def _vmem_limit_bytes():
    cap = _tpu_vmem_capacity_bytes()
    return int(min(cap - 16 * 1024 * 1024, 112 * 1024 * 1024))


def _stage1_vmem_estimate(th, W, Cin, Cout, pbytes):
    blocks = (th * W * Cin * 4 + 4 * W * Cin * 4
              + th * W * Cin * pbytes
              + (th // 2) * (W // 2) * Cout * 4
              + (9 * Cin * Cin + Cin * Cout) * pbytes)
    scratch = (th + 2) * W * 3 * Cin * pbytes
    temps = th * W * Cin * 4 + (th + 2) * (W // 2) * Cin * 4 * 2
    return 2 * blocks + scratch + int(1.25 * temps)


def _stage2_vmem_estimate(tho, W, Cin, Cout, pbytes):
    nrow = 2 * tho + 2
    blocks = ((2 * tho + 4) * W * Cin * pbytes
              + 2 * tho * (W // 2) * Cout * 4
              + 9 * Cin * Cout * pbytes)
    scratch = (2 * tho + 4) * W * 3 * Cin * pbytes + nrow * W * Cout * 4
    temps = nrow * W * Cout * 4 + nrow * (W // 2) * Cout * 4 * 2
    return 2 * blocks + scratch + int(1.25 * temps)


def _pick_tile(n, mult, cap, budget, est):
    """Largest divisor of n (multiple of `mult`, <= cap) that fits the VMEM
    budget and (when possible) leaves >= 2 grid steps along the axis; falls
    back to the SMALLEST candidate (never the full dim) if nothing fits."""
    cap = max(mult, min(cap, n))
    cands = [d for d in range(mult, cap + 1, mult) if n % d == 0] or [n]
    cands.sort(reverse=True)
    fitting = [d for d in cands if est(d) <= budget] or [cands[-1]]
    multi = [d for d in fitting if n // d >= 2]
    return (multi or fitting)[0]


def init_params(key, in_features, out_features):
    # Matches the PyTorch __init__: weight ~ randn(O, I, k, k), bias = ones(O).
    k1, k2, k3 = jax.random.split(key, 3)
    return dict(
        w1=jax.random.normal(k1, (in_features, in_features, 3, 3), jnp.float32),
        b1=jnp.ones((in_features,), jnp.float32),
        w2=jax.random.normal(k2, (out_features, in_features, 3, 3), jnp.float32),
        b2=jnp.ones((out_features,), jnp.float32),
        wr=jax.random.normal(k3, (out_features, in_features, 1, 1), jnp.float32),
        br=jnp.ones((out_features,), jnp.float32),
    )


def discriminator_block(params, x_nchw, *, param_dtype=jnp.bfloat16,
                        tile_h=None, tile_ho=None):
    x = jnp.transpose(x_nchw, (0, 2, 3, 1)).astype(jnp.float32)   # NCHW -> NHWC
    B, H, W, Cin = x.shape
    Cout = params["w2"].shape[0]
    assert H % 2 == 0 and W % 2 == 0, "spatial dims must be even"

    pbytes = jnp.dtype(param_dtype).itemsize
    vmem_limit = _vmem_limit_bytes()
    budget = int(0.7 * vmem_limit)

    th = tile_h if tile_h is not None else _pick_tile(
        H, 2, 128, budget, lambda d: _stage1_vmem_estimate(d, W, Cin, Cout, pbytes))
    tho = tile_ho if tile_ho is not None else _pick_tile(
        H // 2, 1, 64, budget, lambda d: _stage2_vmem_estimate(d, W, Cin, Cout, pbytes))
    assert th % 2 == 0 and H % th == 0 and (H // 2) % tho == 0

    w1 = _prep_conv3(params["w1"], param_dtype)
    b1 = params["b1"].reshape(1, -1).astype(jnp.float32)
    w2 = _prep_conv3(params["w2"], param_dtype)
    b2 = params["b2"].reshape(1, -1).astype(jnp.float32)
    wr = _prep_conv1(params["wr"], param_dtype)
    br = params["br"].reshape(1, -1).astype(jnp.float32)

    # stage 1: y1 = lrelu(conv1(x));  res = 1x1conv(DownSample(x))   (x read once)
    y1, res = _stage1(x, w1, b1, wr, br, th, param_dtype, vmem_limit)
    # stage 2: out = (DownSample(lrelu(conv2(y1))) + res) / sqrt(2)  (y2 stays on-chip)
    out = _stage2(y1, res, w2, b2, tho, vmem_limit)
    return jnp.transpose(out, (0, 3, 1, 2))                        # NHWC -> NCHW


# ------------------------- plain-JAX reference (check) ---------------------- #

def _reference(params, x):
    prec = jax.lax.Precision.HIGHEST

    def eq_conv(x, w, b, padding):
        o, i, kh, kw = w.shape
        scale = 1.0 / math.sqrt(i * kh * kw)
        y = jax.lax.conv_general_dilated(
            x, w * scale, (1, 1), [(padding, padding)] * 2,
            dimension_numbers=("NCHW", "OIHW", "NCHW"), precision=prec)
        return y + b[None, :, None, None]

    def down(x):  # Smooth + bilinear /2 (== 2x2 avg pool)
        c = x.shape[1]
        k = jnp.array([[1., 2., 1.], [2., 4., 2.], [1., 2., 1.]], jnp.float32) / 16.0
        w = jnp.tile(k[None, None], (c, 1, 1, 1))
        xp = jnp.pad(x, ((0, 0), (0, 0), (1, 1), (1, 1)), mode="edge")
        s = jax.lax.conv_general_dilated(
            xp, w, (1, 1), "VALID", dimension_numbers=("NCHW", "OIHW", "NCHW"),
            feature_group_count=c, precision=prec)
        return 0.25 * (s[:, :, 0::2, 0::2] + s[:, :, 0::2, 1::2]
                       + s[:, :, 1::2, 0::2] + s[:, :, 1::2, 1::2])

    def lrelu(v):
        return jnp.where(v >= 0, v, LRELU_SLOPE * v)

    residual = eq_conv(down(x), params["wr"], params["br"], 0)
    y = lrelu(eq_conv(x, params["w1"], params["b1"], 1))
    y = lrelu(eq_conv(y, params["w2"], params["b2"], 1))
    return (down(y) + residual) * INV_SQRT2


# ----------------------------------- main ----------------------------------- #

if __name__ == "__main__":
    key = jax.random.PRNGKey(0)
    kp, kx = jax.random.split(key)

    B, Cin, Cout, H, W = 2, 4, 8, 16, 16
    params = init_params(kp, Cin, Cout)
    x = jax.random.normal(kx, (B, Cin, H, W), jnp.float32)

    ref = _reference(params, x)

    # f32-storage debug path: tight tolerance (checks all index/tap logic).
    out_f32 = jax.block_until_ready(
        jax.jit(functools.partial(discriminator_block,
                                  param_dtype=jnp.float32))(params, x))
    assert out_f32.shape == (B, Cout, H // 2, W // 2), out_f32.shape
    err32 = float(jnp.max(jnp.abs(out_f32 - ref)))
    assert err32 < 5e-3, f"f32 path max abs error vs reference: {err32}"

    # fast bf16 path (bf16 MXU matmuls / bf16 y1): looser tolerance.
    out_bf = jax.block_until_ready(jax.jit(discriminator_block)(params, x))
    assert out_bf.shape == (B, Cout, H // 2, W // 2), out_bf.shape
    errbf = float(jnp.max(jnp.abs(out_bf - ref)))
    assert errbf < 1e-1, f"bf16 path max abs error vs reference: {errbf}"

    print("KERNEL_OK")
</pallas_src>

<mosaic_0001>
module attributes {stable_mosaic.version = 11 : i64} {
  func.func @_stage1_kernel(%arg0: i32, %arg1: i32, %arg2: memref<1x1x16x4xf32, #tpu.memory_space<vmem>>, %arg3: memref<1x8x16x4xf32, #tpu.memory_space<vmem>>, %arg4: memref<1x1x16x4xf32, #tpu.memory_space<vmem>>, %arg5: memref<3x12x4xf32, #tpu.memory_space<vmem>>, %arg6: memref<1x4xf32, #tpu.memory_space<vmem>>, %arg7: memref<4x8xf32, #tpu.memory_space<vmem>>, %arg8: memref<1x8xf32, #tpu.memory_space<vmem>>, %arg9: memref<1x8x16x4xf32, #tpu.memory_space<vmem>>, %arg10: memref<1x4x8x8xf32, #tpu.memory_space<vmem>>, %arg11: memref<10x16x12xf32, #tpu.memory_space<vmem>>) attributes {dimension_semantics = [#tpu.dimension_semantics<parallel>, #tpu.dimension_semantics<parallel>], iteration_bounds = array<i64: 2, 2>, scalar_prefetch = 0 : i64, scratch_operands = 1 : i64, tpu.core_type = #tpu.core_type<tc>, window_params = [{transform_indices = @transform_0, window_bounds = array<i64: 1, 1, 16, 4>}, {transform_indices = @transform_1, window_bounds = array<i64: 1, 8, 16, 4>}, {transform_indices = @transform_2, window_bounds = array<i64: 1, 1, 16, 4>}, {pipeline_mode = #tpu.pipeline_mode<synchronous>, transform_indices = @transform_3, window_bounds = array<i64: 3, 12, 4>}, {pipeline_mode = #tpu.pipeline_mode<synchronous>, transform_indices = @transform_4, window_bounds = array<i64: 1, 4>}, {pipeline_mode = #tpu.pipeline_mode<synchronous>, transform_indices = @transform_5, window_bounds = array<i64: 4, 8>}, {pipeline_mode = #tpu.pipeline_mode<synchronous>, transform_indices = @transform_6, window_bounds = array<i64: 1, 8>}, {transform_indices = @transform_7, window_bounds = array<i64: 1, 8, 16, 4>}, {transform_indices = @transform_8, window_bounds = array<i64: 1, 4, 8, 8>}]} {
    %c0_i32 = arith.constant 0 : i32
    %0 = arith.cmpi sgt, %arg1, %c0_i32 : i32
    %1 = arith.extui %0 : i1 to i32
    %2 = arith.sitofp %1 : i32 to f32
    %c1_i32 = arith.constant 1 : i32
    %3 = arith.cmpi slt, %arg1, %c1_i32 : i32
    %4 = arith.extui %3 : i1 to i32
    %5 = arith.sitofp %4 : i32 to f32
    %c0 = arith.constant 0 : index
    %c0_0 = arith.constant 0 : index
    %c0_1 = arith.constant 0 : index
    %c0_2 = arith.constant 0 : index
    %6 = vector.load %arg2[%c0, %c0_0, %c0_1, %c0_2] : memref<1x1x16x4xf32, #tpu.memory_space<vmem>>, vector<1x1x16x4xf32>
    %7 = vector.shape_cast %6 : vector<1x1x16x4xf32> to vector<1x16x4xf32>
    %c0_3 = arith.constant 0 : index
    %c0_4 = arith.constant 0 : index
    %c0_5 = arith.constant 0 : index
    %c0_6 = arith.constant 0 : index
    %8 = vector.load %arg3[%c0_3, %c0_4, %c0_5, %c0_6] : memref<1x8x16x4xf32, #tpu.memory_space<vmem>>, vector<1x8x16x4xf32>
    %9 = vector.shape_cast %8 : vector<1x8x16x4xf32> to vector<8x16x4xf32>
    %c0_7 = arith.constant 0 : index
    %c0_8 = arith.constant 0 : index
    %c0_9 = arith.constant 0 : index
    %c0_10 = arith.constant 0 : index
    %10 = vector.load %arg4[%c0_7, %c0_8, %c0_9, %c0_10] : memref<1x1x16x4xf32, #tpu.memory_space<vmem>>, vector<1x1x16x4xf32>
    %11 = vector.shape_cast %10 : vector<1x1x16x4xf32> to vector<1x16x4xf32>
    %12 = vector.broadcast %2 : f32 to vector<1x16x4xf32>
    %13 = arith.mulf %7, %12 : vector<1x16x4xf32>
    %cst = arith.constant 0.000000e+00 : f32
    %14 = vector.broadcast %cst : f32 to vector<1x1x4xf32>
    %15 = vector.extract_strided_slice %13 {offsets = [0, 0, 0], sizes = [1, 15, 4], strides = [1, 1, 1]} : vector<1x16x4xf32> to vector<1x15x4xf32>
    %16 = tpu.concatenate %14, %15 in 1 : vector<1x1x4xf32>, vector<1x15x4xf32> -> vector<1x16x4xf32>
    %17 = vector.extract_strided_slice %13 {offsets = [0, 1, 0], sizes = [1, 15, 4], strides = [1, 1, 1]} : vector<1x16x4xf32> to vector<1x15x4xf32>
    %18 = tpu.concatenate %17, %14 in 1 : vector<1x15x4xf32>, vector<1x1x4xf32> -> vector<1x16x4xf32>
    %19 = tpu.concatenate %16, %13, %18 in 2 : vector<1x16x4xf32>, vector<1x16x4xf32>, vector<1x16x4xf32> -> vector<1x16x12xf32>
    %c0_11 = arith.constant 0 : index
    %c0_12 = arith.constant 0 : index
    %c0_13 = arith.constant 0 : index
    %20 = vector.load %arg11[%c0_11, %c0_12, %c0_13] : memref<10x16x12xf32, #tpu.memory_space<vmem>>, vector<1x16x12xf32>
    tpu.vector_store %arg11[%c0_11, %c0_12, %c0_13], %19 {strides = array<i32>} : memref<10x16x12xf32, #tpu.memory_space<vmem>>, vector<1x16x12xf32>,
    %cst_14 = arith.constant 0.000000e+00 : f32
    %21 = vector.broadcast %cst_14 : f32 to vector<8x1x4xf32>
    %22 = vector.extract_strided_slice %9 {offsets = [0, 0, 0], sizes = [8, 15, 4], strides = [1, 1, 1]} : vector<8x16x4xf32> to vector<8x15x4xf32>
    %23 = tpu.concatenate %21, %22 in 1 : vector<8x1x4xf32>, vector<8x15x4xf32> -> vector<8x16x4xf32>
    %24 = vector.extract_strided_slice %9 {offsets = [0, 1, 0], sizes = [8, 15, 4], strides = [1, 1, 1]} : vector<8x16x4xf32> to vector<8x15x4xf32>
    %25 = tpu.concatenate %24, %21 in 1 : vector<8x15x4xf32>, vector<8x1x4xf32> -> vector<8x16x4xf32>
    %26 = tpu.concatenate %23, %9, %25 in 2 : vector<8x16x4xf32>, vector<8x16x4xf32>, vector<8x16x4xf32> -> vector<8x16x12xf32>
    %c1 = arith.constant 1 : index
    %c0_15 = arith.constant 0 : index
    %c0_16 = arith.constant 0 : index
    %27 = vector.load %arg11[%c1, %c0_15, %c0_16] : memref<10x16x12xf32, #tpu.memory_space<vmem>>, vector<8x16x12xf32>
    tpu.vector_store %arg11[%c1, %c0_15, %c0_16], %26 {strides = array<i32>} : memref<10x16x12xf32, #tpu.memory_space<vmem>>, vector<8x16x12xf32>,
    %28 = vector.broadcast %5 : f32 to vector<1x16x4xf32>
    %29 = arith.mulf %11, %28 : vector<1x16x4xf32>
    %cst_17 = arith.constant 0.000000e+00 : f32
    %30 = vector.broadcast %cst_17 : f32 to vector<1x1x4xf32>
    %31 = vector.extract_strided_slice %29 {offsets = [0, 0, 0], sizes = [1, 15, 4], strides = [1, 1, 1]} : vector<1x16x4xf32> to vector<1x15x4xf32>
    %32 = tpu.concatenate %30, %31 in 1 : vector<1x1x4xf32>, vector<1x15x4xf32> -> vector<1x16x4xf32>
    %33 = vector.extract_strided_slice %29 {offsets = [0, 1, 0], sizes = [1, 15, 4], strides = [1, 1, 1]} : vector<1x16x4xf32> to vector<1x15x4xf32>
    %34 = tpu.concatenate %33, %30 in 1 : vector<1x15x4xf32>, vector<1x1x4xf32> -> vector<1x16x4xf32>
    %35 = tpu.concatenate %32, %29, %34 in 2 : vector<1x16x4xf32>, vector<1x16x4xf32>, vector<1x16x4xf32> -> vector<1x16x12xf32>
    %c9 = arith.constant 9 : index
    %c0_18 = arith.constant 0 : index
    %c0_19 = arith.constant 0 : index
    %36 = vector.load %arg11[%c9, %c0_18, %c0_19] : memref<10x16x12xf32, #tpu.memory_space<vmem>>, vector<1x16x12xf32>
    tpu.vector_store %arg11[%c9, %c0_18, %c0_19], %35 {strides = array<i32>} : memref<10x16x12xf32, #tpu.memory_space<vmem>>, vector<1x16x12xf32>,
    %c0_20 = arith.constant 0 : index
    %c0_21 = arith.constant 0 : index
    %c0_22 = arith.constant 0 : index
    %37 = vector.load %arg11[%c0_20, %c0_21, %c0_22] : memref<10x16x12xf32, #tpu.memory_space<vmem>>, vector<8x16x12xf32>
    %38 = vector.shape_cast %37 : vector<8x16x12xf32> to vector<128x12xf32>
    %c0_23 = arith.constant 0 : index
    %c0_24 = arith.constant 0 : index
    %c0_25 = arith.constant 0 : index
    %39 = vector.load %arg5[%c0_23, %c0_24, %c0_25] : memref<3x12x4xf32, #tpu.memory_space<vmem>>, vector<1x12x4xf32>
    %40 = vector.shape_cast %39 : vector<1x12x4xf32> to vector<12x4xf32>
    %cst_26 = arith.constant dense<0.000000e+00> : vector<128x4xf32>
    %41 = tpu.matmul %38, %40, %cst_26 {dimension_numbers = #tpu.dot_dimension_numbers<[1], [0], [0], [1], [0, 0, 1, 1], [], []>} : vector<128x12xf32>, vector<12x4xf32>, vector<128x4xf32> -> vector<128x4xf32>
    %c1_27 = arith.constant 1 : index
    %c0_28 = arith.constant 0 : index
    %c0_29 = arith.constant 0 : index
    %42 = vector.load %arg11[%c1_27, %c0_28, %c0_29] : memref<10x16x12xf32, #tpu.memory_space<vmem>>, vector<8x16x12xf32>
    %43 = vector.shape_cast %42 : vector<8x16x12xf32> to vector<128x12xf32>
    %c1_30 = arith.constant 1 : index
    %c0_31 = arith.constant 0 : index
    %c0_32 = arith.constant 0 : index
    %44 = vector.load %arg5[%c1_30, %c0_31, %c0_32] : memref<3x12x4xf32, #tpu.memory_space<vmem>>, vector<1x12x4xf32>
    %45 = vector.shape_cast %44 : vector<1x12x4xf32> to vector<12x4xf32>
    %cst_33 = arith.constant dense<0.000000e+00> : vector<128x4xf32>
    %46 = tpu.matmul %43, %45, %cst_33 {dimension_numbers = #tpu.dot_dimension_numbers<[1], [0], [0], [1], [0, 0, 1, 1], [], []>} : vector<128x12xf32>, vector<12x4xf32>, vector<128x4xf32> -> vector<128x4xf32>
    %47 = arith.addf %41, %46 : vector<128x4xf32>
    %c2 = arith.constant 2 : index
    %c0_34 = arith.constant 0 : index
    %c0_35 = arith.constant 0 : index
    %48 = vector.load %arg11[%c2, %c0_34, %c0_35] : memref<10x16x12xf32, #tpu.memory_space<vmem>>, vector<8x16x12xf32>
    %49 = vector.shape_cast %48 : vector<8x16x12xf32> to vector<128x12xf32>
    %c2_36 = arith.constant 2 : index
    %c0_37 = arith.constant 0 : index
    %c0_38 = arith.constant 0 : index
    %50 = vector.load %arg5[%c2_36, %c0_37, %c0_38] : memref<3x12x4xf32, #tpu.memory_space<vmem>>, vector<1x12x4xf32>
    %51 = vector.shape_cast %50 : vector<1x12x4xf32> to vector<12x4xf32>
    %cst_39 = arith.constant dense<0.000000e+00> : vector<128x4xf32>
    %52 = tpu.matmul %49, %51, %cst_39 {dimension_numbers = #tpu.dot_dimension_numbers<[1], [0], [0], [1], [0, 0, 1, 1], [], []>} : vector<128x12xf32>, vector<12x4xf32>, vector<128x4xf32> -> vector<128x4xf32>
    %53 = arith.addf %47, %52 : vector<128x4xf32>
    %c0_40 = arith.constant 0 : index
    %c0_41 = arith.constant 0 : index
    %54 = vector.load %arg6[%c0_40, %c0_41] : memref<1x4xf32, #tpu.memory_space<vmem>>, vector<1x4xf32>
    %55 = vector.broadcast %54 : vector<1x4xf32> to vector<128x4xf32>
    %56 = arith.addf %53, %55 : vector<128x4xf32>
    %cst_42 = arith.constant 2.000000e-01 : f32
    %57 = vector.broadcast %cst_42 : f32 to vector<128x4xf32>
    %58 = arith.mulf %57, %56 : vector<128x4xf32>
    %59 = arith.maximumf %56, %58 : vector<128x4xf32>
    %60 = vector.shape_cast %59 : vector<128x4xf32> to vector<8x16x4xf32>
    %c0_43 = arith.constant 0 : index
    %c0_44 = arith.constant 0 : index
    %c0_45 = arith.constant 0 : index
    %c0_46 = arith.constant 0 : index
    %61 = vector.load %arg9[%c0_43, %c0_44, %c0_45, %c0_46] : memref<1x8x16x4xf32, #tpu.memory_space<vmem>>, vector<1x8x16x4xf32>
    %62 = vector.shape_cast %61 : vector<1x8x16x4xf32> to vector<8x16x4xf32>
    %63 = vector.shape_cast %60 : vector<8x16x4xf32> to vector<1x8x16x4xf32>
    tpu.vector_store %arg9[%c0_43, %c0_44, %c0_45, %c0_46], %63 {strides = array<i32>} : memref<1x8x16x4xf32, #tpu.memory_space<vmem>>, vector<1x8x16x4xf32>,
    %c0_47 = arith.constant 0 : index
    %c0_48 = arith.constant 0 : index
    %c0_49 = arith.constant 0 : index
    %c0_50 = arith.constant 0 : index
    %64 = tpu.strided_load %arg2[%c0_47, %c0_48, %c0_49, %c0_50] {strides = array<i32: 1, 1, 2, 1>} : memref<1x1x16x4xf32, #tpu.memory_space<vmem>>, vector<1x1x8x4xf32>
    %65 = vector.shape_cast %64 : vector<1x1x8x4xf32> to vector<1x8x4xf32>
    %c0_51 = arith.constant 0 : index
    %c0_52 = arith.constant 0 : index
    %c1_53 = arith.constant 1 : index
    %c0_54 = arith.constant 0 : index
    %66 = tpu.strided_load %arg2[%c0_51, %c0_52, %c1_53, %c0_54] {strides = array<i32: 1, 1, 2, 1>} : memref<1x1x16x4xf32, #tpu.memory_space<vmem>>, vector<1x1x8x4xf32>
    %67 = vector.shape_cast %66 : vector<1x1x8x4xf32> to vector<1x8x4xf32>
    %68 = vector.extract_strided_slice %65 {offsets = [0, 0, 0], sizes = [1, 1, 4], strides = [1, 1, 1]} : vector<1x8x4xf32> to vector<1x1x4xf32>
    %69 = vector.extract_strided_slice %67 {offsets = [0, 0, 0], sizes = [1, 7, 4], strides = [1, 1, 1]} : vector<1x8x4xf32> to vector<1x7x4xf32>
    %70 = tpu.concatenate %68, %69 in 1 : vector<1x1x4xf32>, vector<1x7x4xf32> -> vector<1x8x4xf32>
    %71 = vector.extract_strided_slice %65 {offsets = [0, 1, 0], sizes = [1, 7, 4], strides = [1, 1, 1]} : vector<1x8x4xf32> to vector<1x7x4xf32>
    %72 = vector.extract_strided_slice %67 {offsets = [0, 7, 0], sizes = [1, 1, 4], strides = [1, 1, 1]} : vector<1x8x4xf32> to vector<1x1x4xf32>
    %73 = tpu.concatenate %71, %72 in 1 : vector<1x7x4xf32>, vector<1x1x4xf32> -> vector<1x8x4xf32>
    %cst_55 = arith.constant 3.000000e+00 : f32
    %74 = vector.broadcast %cst_55 : f32 to vector<1x8x4xf32>
    %75 = arith.mulf %74, %65 : vector<1x8x4xf32>
    %76 = arith.addf %70, %75 : vector<1x8x4xf32>
    %cst_56 = arith.constant 3.000000e+00 : f32
    %77 = vector.broadcast %cst_56 : f32 to vector<1x8x4xf32>
    %78 = arith.mulf %77, %67 : vector<1x8x4xf32>
    %79 = arith.addf %76, %78 : vector<1x8x4xf32>
    %80 = arith.addf %79, %73 : vector<1x8x4xf32>
    %cst_57 = arith.constant 1.250000e-01 : f32
    %81 = vector.broadcast %cst_57 : f32 to vector<1x8x4xf32>
    %82 = arith.mulf %80, %81 : vector<1x8x4xf32>
    %c0_58 = arith.constant 0 : index
    %c0_59 = arith.constant 0 : index
    %c0_60 = arith.constant 0 : index
    %c0_61 = arith.constant 0 : index
    %83 = tpu.strided_load %arg3[%c0_58, %c0_59, %c0_60, %c0_61] {strides = array<i32: 1, 1, 2, 1>} : memref<1x8x16x4xf32, #tpu.memory_space<vmem>>, vector<1x8x8x4xf32>
    %84 = vector.shape_cast %83 : vector<1x8x8x4xf32> to vector<8x8x4xf32>
    %c0_62 = arith.constant 0 : index
    %c0_63 = arith.constant 0 : index
    %c1_64 = arith.constant 1 : index
    %c0_65 = arith.constant 0 : index
    %85 = tpu.strided_load %arg3[%c0_62, %c0_63, %c1_64, %c0_65] {strides = array<i32: 1, 1, 2, 1>} : memref<1x8x16x4xf32, #tpu.memory_space<vmem>>, vector<1x8x8x4xf32>
    %86 = vector.shape_cast %85 : vector<1x8x8x4xf32> to vector<8x8x4xf32>
    %87 = vector.extract_strided_slice %84 {offsets = [0, 0, 0], sizes = [8, 1, 4], strides = [1, 1, 1]} : vector<8x8x4xf32> to vector<8x1x4xf32>
    %88 = vector.extract_strided_slice %86 {offsets = [0, 0, 0], sizes = [8, 7, 4], strides = [1, 1, 1]} : vector<8x8x4xf32> to vector<8x7x4xf32>
    %89 = tpu.concatenate %87, %88 in 1 : vector<8x1x4xf32>, vector<8x7x4xf32> -> vector<8x8x4xf32>
    %90 = vector.extract_strided_slice %84 {offsets = [0, 1, 0], sizes = [8, 7, 4], strides = [1, 1, 1]} : vector<8x8x4xf32> to vector<8x7x4xf32>
    %91 = vector.extract_strided_slice %86 {offsets = [0, 7, 0], sizes = [8, 1, 4], strides = [1, 1, 1]} : vector<8x8x4xf32> to vector<8x1x4xf32>
    %92 = tpu.concatenate %90, %91 in 1 : vector<8x7x4xf32>, vector<8x1x4xf32> -> vector<8x8x4xf32>
    %cst_66 = arith.constant 3.000000e+00 : f32
    %93 = vector.broadcast %cst_66 : f32 to vector<8x8x4xf32>
    %94 = arith.mulf %93, %84 : vector<8x8x4xf32>
    %95 = arith.addf %89, %94 : vector<8x8x4xf32>
    %cst_67 = arith.constant 3.000000e+00 : f32
    %96 = vector.broadcast %cst_67 : f32 to vector<8x8x4xf32>
    %97 = arith.mulf %96, %86 : vector<8x8x4xf32>
    %98 = arith.addf %95, %97 : vector<8x8x4xf32>
    %99 = arith.addf %98, %92 : vector<8x8x4xf32>
    %cst_68 = arith.constant 1.250000e-01 : f32
    %100 = vector.broadcast %cst_68 : f32 to vector<8x8x4xf32>
    %101 = arith.mulf %99, %100 : vector<8x8x4xf32>
    %c0_69 = arith.constant 0 : index
    %c0_70 = arith.constant 0 : index
    %c0_71 = arith.constant 0 : index
    %c0_72 = arith.constant 0 : index
    %102 = tpu.strided_load %arg4[%c0_69, %c0_70, %c0_71, %c0_72] {strides = array<i32: 1, 1, 2, 1>} : memref<1x1x16x4xf32, #tpu.memory_space<vmem>>, vector<1x1x8x4xf32>
    %103 = vector.shape_cast %102 : vector<1x1x8x4xf32> to vector<1x8x4xf32>
    %c0_73 = arith.constant 0 : index
    %c0_74 = arith.constant 0 : index
    %c1_75 = arith.constant 1 : index
    %c0_76 = arith.constant 0 : index
    %104 = tpu.strided_load %arg4[%c0_73, %c0_74, %c1_75, %c0_76] {strides = array<i32: 1, 1, 2, 1>} : memref<1x1x16x4xf32, #tpu.memory_space<vmem>>, vector<1x1x8x4xf32>
    %105 = vector.shape_cast %104 : vector<1x1x8x4xf32> to vector<1x8x4xf32>
    %106 = vector.extract_strided_slice %103 {offsets = [0, 0, 0], sizes = [1, 1, 4], strides = [1, 1, 1]} : vector<1x8x4xf32> to vector<1x1x4xf32>
    %107 = vector.extract_strided_slice %105 {offsets = [0, 0, 0], sizes = [1, 7, 4], strides = [1, 1, 1]} : vector<1x8x4xf32> to vector<1x7x4xf32>
    %108 = tpu.concatenate %106, %107 in 1 : vector<1x1x4xf32>, vector<1x7x4xf32> -> vector<1x8x4xf32>
    %109 = vector.extract_strided_slice %103 {offsets = [0, 1, 0], sizes = [1, 7, 4], strides = [1, 1, 1]} : vector<1x8x4xf32> to vector<1x7x4xf32>
    %110 = vector.extract_strided_slice %105 {offsets = [0, 7, 0], sizes = [1, 1, 4], strides = [1, 1, 1]} : vector<1x8x4xf32> to vector<1x1x4xf32>
    %111 = tpu.concatenate %109, %110 in 1 : vector<1x7x4xf32>, vector<1x1x4xf32> -> vector<1x8x4xf32>
    %cst_77 = arith.constant 3.000000e+00 : f32
    %112 = vector.broadcast %cst_77 : f32 to vector<1x8x4xf32>
    %113 = arith.mulf %112, %103 : vector<1x8x4xf32>
    %114 = arith.addf %108, %113 : vector<1x8x4xf32>
    %cst_78 = arith.constant 3.000000e+00 : f32
    %115 = vector.broadcast %cst_78 : f32 to vector<1x8x4xf32>
    %116 = arith.mulf %115, %105 : vector<1x8x4xf32>
    %117 = arith.addf %114, %116 : vector<1x8x4xf32>
    %118 = arith.addf %117, %111 : vector<1x8x4xf32>
    %cst_79 = arith.constant 1.250000e-01 : f32
    %119 = vector.broadcast %cst_79 : f32 to vector<1x8x4xf32>
    %120 = arith.mulf %118, %119 : vector<1x8x4xf32>
    %121 = vector.shape_cast %101 : vector<8x8x4xf32> to vector<4x2x8x4xf32>
    %122 = vector.extract_strided_slice %121 {offsets = [0, 0, 0, 0], sizes = [4, 1, 8, 4], strides = [1, 1, 1, 1]} : vector<4x2x8x4xf32> to vector<4x1x8x4xf32>
    %123 = vector.shape_cast %122 : vector<4x1x8x4xf32> to vector<4x8x4xf32>
    %124 = vector.extract_strided_slice %121 {offsets = [0, 1, 0, 0], sizes = [4, 1, 8, 4], strides = [1, 1, 1, 1]} : vector<4x2x8x4xf32> to vector<4x1x8x4xf32>
    %125 = vector.shape_cast %124 : vector<4x1x8x4xf32> to vector<4x8x4xf32>
    %126 = vector.extract_strided_slice %125 {offsets = [0, 0, 0], sizes = [3, 8, 4], strides = [1, 1, 1]} : vector<4x8x4xf32> to vector<3x8x4xf32>
    %127 = tpu.concatenate %82, %126 in 0 : vector<1x8x4xf32>, vector<3x8x4xf32> -> vector<4x8x4xf32>
    %128 = vector.extract_strided_slice %123 {offsets = [1, 0, 0], sizes = [3, 8, 4], strides = [1, 1, 1]} : vector<4x8x4xf32> to vector<3x8x4xf32>
    %129 = tpu.concatenate %128, %120 in 0 : vector<3x8x4xf32>, vector<1x8x4xf32> -> vector<4x8x4xf32>
    %cst_80 = arith.constant 3.000000e+00 : f32
    %130 = vector.broadcast %cst_80 : f32 to vector<4x8x4xf32>
    %131 = arith.mulf %130, %123 : vector<4x8x4xf32>
    %132 = arith.addf %127, %131 : vector<4x8x4xf32>
    %cst_81 = arith.constant 3.000000e+00 : f32
    %133 = vector.broadcast %cst_81 : f32 to vector<4x8x4xf32>
    %134 = arith.mulf %133, %125 : vector<4x8x4xf32>
    %135 = arith.addf %132, %134 : vector<4x8x4xf32>
    %136 = arith.addf %135, %129 : vector<4x8x4xf32>
    %cst_82 = arith.constant 1.250000e-01 : f32
    %137 = vector.broadcast %cst_82 : f32 to vector<4x8x4xf32>
    %138 = arith.mulf %136, %137 : vector<4x8x4xf32>
    %139 = vector.shape_cast %138 : vector<4x8x4xf32> to vector<32x4xf32>
    %c0_83 = arith.constant 0 : index
    %c0_84 = arith.constant 0 : index
    %140 = vector.load %arg7[%c0_83, %c0_84] : memref<4x8xf32, #tpu.memory_space<vmem>>, vector<4x8xf32>
    %cst_85 = arith.constant dense<0.000000e+00> : vector<32x8xf32>
    %141 = tpu.matmul %139, %140, %cst_85 {dimension_numbers = #tpu.dot_dimension_numbers<[1], [0], [0], [1], [0, 0, 1, 1], [], []>} : vector<32x4xf32>, vector<4x8xf32>, vector<32x8xf32> -> vector<32x8xf32>
    %c0_86 = arith.constant 0 : index
    %c0_87 = arith.constant 0 : index
    %142 = vector.load %arg8[%c0_86, %c0_87] : memref<1x8xf32, #tpu.memory_space<vmem>>, vector<1x8xf32>
    %143 = vector.broadcast %142 : vector<1x8xf32> to vector<32x8xf32>
    %144 = arith.addf %141, %143 : vector<32x8xf32>
    %145 = vector.shape_cast %144 : vector<32x8xf32> to vector<4x8x8xf32>
    %c0_88 = arith.constant 0 : index
    %c0_89 = arith.constant 0 : index
    %c0_90 = arith.constant 0 : index
    %c0_91 = arith.constant 0 : index
    %146 = vector.load %arg10[%c0_88, %c0_89, %c0_90, %c0_91] : memref<1x4x8x8xf32, #tpu.memory_space<vmem>>, vector<1x4x8x8xf32>
    %147 = vector.shape_cast %146 : vector<1x4x8x8xf32> to vector<4x8x8xf32>
    %148 = vector.shape_cast %145 : vector<4x8x8xf32> to vector<1x4x8x8xf32>
    tpu.vector_store %arg10[%c0_88, %c0_89, %c0_90, %c0_91], %148 {strides = array<i32>} : memref<1x4x8x8xf32, #tpu.memory_space<vmem>>, vector<1x4x8x8xf32>,
    return
  }
  func.func @transform_0(%arg0: i32, %arg1: i32) -> (i32, i32, i32, i32) {
    %c8_i32 = arith.constant 8 : i32
    %0 = arith.muli %arg1, %c8_i32 : i32
    %c1_i32 = arith.constant 1 : i32
    %1 = arith.subi %0, %c1_i32 : i32
    %c0_i32 = arith.constant 0 : i32
    %2 = arith.maxsi %1, %c0_i32 : i32
    %c0_i32_0 = arith.constant 0 : i32
    %c0_i32_1 = arith.constant 0 : i32
    %c0_i32_2 = arith.constant 0 : i32
    return %arg0, %2, %c0_i32_0, %c0_i32_1 : i32, i32, i32, i32
  }
  func.func @transform_1(%arg0: i32, %arg1: i32) -> (i32, i32, i32, i32) {
    %c0_i32 = arith.constant 0 : i32
    %c0_i32_0 = arith.constant 0 : i32
    %c0_i32_1 = arith.constant 0 : i32
    return %arg0, %arg1, %c0_i32, %c0_i32_0 : i32, i32, i32, i32
  }
  func.func @transform_2(%arg0: i32, %arg1: i32) -> (i32, i32, i32, i32) {
    %c1_i32 = arith.constant 1 : i32
    %0 = arith.addi %arg1, %c1_i32 : i32
    %c8_i32 = arith.constant 8 : i32
    %1 = arith.muli %0, %c8_i32 : i32
    %c15_i32 = arith.constant 15 : i32
    %2 = arith.minsi %1, %c15_i32 : i32
    %c0_i32 = arith.constant 0 : i32
    %c0_i32_0 = arith.constant 0 : i32
    %c0_i32_1 = arith.constant 0 : i32
    return %arg0, %2, %c0_i32, %c0_i32_0 : i32, i32, i32, i32
  }
  func.func @transform_3(%arg0: i32, %arg1: i32) -> (i32, i32, i32) {
    %c0_i32 = arith.constant 0 : i32
    %c0_i32_0 = arith.constant 0 : i32
    %c0_i32_1 = arith.constant 0 : i32
    %c0_i32_2 = arith.constant 0 : i32
    return %c0_i32, %c0_i32_0, %c0_i32_1 : i32, i32, i32
  }
  func.func @transform_4(%arg0: i32, %arg1: i32) -> (i32, i32) {
    %c0_i32 = arith.constant 0 : i32
    %c0_i32_0 = arith.constant 0 : i32
    %c0_i32_1 = arith.constant 0 : i32
    return %c0_i32, %c0_i32_0 : i32, i32
  }
  func.func @transform_5(%arg0: i32, %arg1: i32) -> (i32, i32) {
    %c0_i32 = arith.constant 0 : i32
    %c0_i32_0 = arith.constant 0 : i32
    %c0_i32_1 = arith.constant 0 : i32
    return %c0_i32, %c0_i32_0 : i32, i32
  }
  func.func @transform_6(%arg0: i32, %arg1: i32) -> (i32, i32) {
    %c0_i32 = arith.constant 0 : i32
    %c0_i32_0 = arith.constant 0 : i32
    %c0_i32_1 = arith.constant 0 : i32
    return %c0_i32, %c0_i32_0 : i32, i32
  }
  func.func @transform_7(%arg0: i32, %arg1: i32) -> (i32, i32, i32, i32) {
    %c0_i32 = arith.constant 0 : i32
    %c0_i32_0 = arith.constant 0 : i32
    %c0_i32_1 = arith.constant 0 : i32
    return %arg0, %arg1, %c0_i32, %c0_i32_0 : i32, i32, i32, i32
  }
  func.func @transform_8(%arg0: i32, %arg1: i32) -> (i32, i32, i32, i32) {
    %c0_i32 = arith.constant 0 : i32
    %c0_i32_0 = arith.constant 0 : i32
    %c0_i32_1 = arith.constant 0 : i32
    return %arg0, %arg1, %c0_i32, %c0_i32_0 : i32, i32, i32, i32
  }
}

module attributes {stable_mosaic.version = 11 : i64} {
  func.func @_stage2_kernel(%arg0: i32, %arg1: i32, %arg2: memref<1x2x16x4xf32, #tpu.memory_space<vmem>>, %arg3: memref<1x8x16x4xf32, #tpu.memory_space<vmem>>, %arg4: memref<1x2x16x4xf32, #tpu.memory_space<vmem>>, %arg5: memref<1x4x8x8xf32, #tpu.memory_space<vmem>>, %arg6: memref<3x12x8xf32, #tpu.memory_space<vmem>>, %arg7: memref<1x8xf32, #tpu.memory_space<vmem>>, %arg8: memref<1x4x8x8xf32, #tpu.memory_space<vmem>>, %arg9: memref<12x16x12xf32, #tpu.memory_space<vmem>>, %arg10: memref<10x16x8xf32, #tpu.memory_space<vmem>>) attributes {dimension_semantics = [#tpu.dimension_semantics<parallel>, #tpu.dimension_semantics<parallel>], iteration_bounds = array<i64: 2, 2>, scalar_prefetch = 0 : i64, scratch_operands = 2 : i64, tpu.core_type = #tpu.core_type<tc>, window_params = [{transform_indices = @transform_0, window_bounds = array<i64: 1, 2, 16, 4>}, {transform_indices = @transform_1, window_bounds = array<i64: 1, 8, 16, 4>}, {transform_indices = @transform_2, window_bounds = array<i64: 1, 2, 16, 4>}, {transform_indices = @transform_3, window_bounds = array<i64: 1, 4, 8, 8>}, {pipeline_mode = #tpu.pipeline_mode<synchronous>, transform_indices = @transform_4, window_bounds = array<i64: 3, 12, 8>}, {pipeline_mode = #tpu.pipeline_mode<synchronous>, transform_indices = @transform_5, window_bounds = array<i64: 1, 8>}, {transform_indices = @transform_6, window_bounds = array<i64: 1, 4, 8, 8>}]} {
    %c0_i32 = arith.constant 0 : i32
    %0 = arith.cmpi eq, %arg1, %c0_i32 : i32
    %c1_i32 = arith.constant 1 : i32
    %1 = arith.cmpi eq, %arg1, %c1_i32 : i32
    %c0_i32_0 = arith.constant 0 : i32
    %2 = arith.cmpi sgt, %arg1, %c0_i32_0 : i32
    %3 = arith.extui %2 : i1 to i32
    %4 = arith.sitofp %3 : i32 to f32
    %c1_i32_1 = arith.constant 1 : i32
    %5 = arith.cmpi slt, %arg1, %c1_i32_1 : i32
    %6 = arith.extui %5 : i1 to i32
    %7 = arith.sitofp %6 : i32 to f32
    %c0 = arith.constant 0 : index
    %c0_2 = arith.constant 0 : index
    %c0_3 = arith.constant 0 : index
    %c0_4 = arith.constant 0 : index
    %8 = vector.load %arg2[%c0, %c0_2, %c0_3, %c0_4] : memref<1x2x16x4xf32, #tpu.memory_space<vmem>>, vector<1x2x16x4xf32>
    %9 = vector.shape_cast %8 : vector<1x2x16x4xf32> to vector<2x16x4xf32>
    %10 = vector.broadcast %4 : f32 to vector<2x16x4xf32>
    %11 = arith.mulf %9, %10 : vector<2x16x4xf32>
    %cst = arith.constant 0.000000e+00 : f32
    %12 = vector.broadcast %cst : f32 to vector<2x1x4xf32>
    %13 = vector.extract_strided_slice %11 {offsets = [0, 0, 0], sizes = [2, 15, 4], strides = [1, 1, 1]} : vector<2x16x4xf32> to vector<2x15x4xf32>
    %14 = tpu.concatenate %12, %13 in 1 : vector<2x1x4xf32>, vector<2x15x4xf32> -> vector<2x16x4xf32>
    %15 = vector.extract_strided_slice %11 {offsets = [0, 1, 0], sizes = [2, 15, 4], strides = [1, 1, 1]} : vector<2x16x4xf32> to vector<2x15x4xf32>
    %16 = tpu.concatenate %15, %12 in 1 : vector<2x15x4xf32>, vector<2x1x4xf32> -> vector<2x16x4xf32>
    %17 = tpu.concatenate %14, %11, %16 in 2 : vector<2x16x4xf32>, vector<2x16x4xf32>, vector<2x16x4xf32> -> vector<2x16x12xf32>
    %c0_5 = arith.constant 0 : index
    %c0_6 = arith.constant 0 : index
    %c0_7 = arith.constant 0 : index
    %18 = vector.load %arg9[%c0_5, %c0_6, %c0_7] : memref<12x16x12xf32, #tpu.memory_space<vmem>>, vector<2x16x12xf32>
    tpu.vector_store %arg9[%c0_5, %c0_6, %c0_7], %17 {strides = array<i32>} : memref<12x16x12xf32, #tpu.memory_space<vmem>>, vector<2x16x12xf32>,
    %c0_8 = arith.constant 0 : index
    %c0_9 = arith.constant 0 : index
    %c0_10 = arith.constant 0 : index
    %c0_11 = arith.constant 0 : index
    %19 = vector.load %arg3[%c0_8, %c0_9, %c0_10, %c0_11] : memref<1x8x16x4xf32, #tpu.memory_space<vmem>>, vector<1x8x16x4xf32>
    %20 = vector.shape_cast %19 : vector<1x8x16x4xf32> to vector<8x16x4xf32>
    %cst_12 = arith.constant 0.000000e+00 : f32
    %21 = vector.broadcast %cst_12 : f32 to vector<8x1x4xf32>
    %22 = vector.extract_strided_slice %20 {offsets = [0, 0, 0], sizes = [8, 15, 4], strides = [1, 1, 1]} : vector<8x16x4xf32> to vector<8x15x4xf32>
    %23 = tpu.concatenate %21, %22 in 1 : vector<8x1x4xf32>, vector<8x15x4xf32> -> vector<8x16x4xf32>
    %24 = vector.extract_strided_slice %20 {offsets = [0, 1, 0], sizes = [8, 15, 4], strides = [1, 1, 1]} : vector<8x16x4xf32> to vector<8x15x4xf32>
    %25 = tpu.concatenate %24, %21 in 1 : vector<8x15x4xf32>, vector<8x1x4xf32> -> vector<8x16x4xf32>
    %26 = tpu.concatenate %23, %20, %25 in 2 : vector<8x16x4xf32>, vector<8x16x4xf32>, vector<8x16x4xf32> -> vector<8x16x12xf32>
    %c2 = arith.constant 2 : index
    %c0_13 = arith.constant 0 : index
    %c0_14 = arith.constant 0 : index
    %27 = vector.load %arg9[%c2, %c0_13, %c0_14] : memref<12x16x12xf32, #tpu.memory_space<vmem>>, vector<8x16x12xf32>
    tpu.vector_store %arg9[%c2, %c0_13, %c0_14], %26 {strides = array<i32>} : memref<12x16x12xf32, #tpu.memory_space<vmem>>, vector<8x16x12xf32>,
    %c0_15 = arith.constant 0 : index
    %c0_16 = arith.constant 0 : index
    %c0_17 = arith.constant 0 : index
    %c0_18 = arith.constant 0 : index
    %28 = vector.load %arg4[%c0_15, %c0_16, %c0_17, %c0_18] : memref<1x2x16x4xf32, #tpu.memory_space<vmem>>, vector<1x2x16x4xf32>
    %29 = vector.shape_cast %28 : vector<1x2x16x4xf32> to vector<2x16x4xf32>
    %30 = vector.broadcast %7 : f32 to vector<2x16x4xf32>
    %31 = arith.mulf %29, %30 : vector<2x16x4xf32>
    %cst_19 = arith.constant 0.000000e+00 : f32
    %32 = vector.broadcast %cst_19 : f32 to vector<2x1x4xf32>
    %33 = vector.extract_strided_slice %31 {offsets = [0, 0, 0], sizes = [2, 15, 4], strides = [1, 1, 1]} : vector<2x16x4xf32> to vector<2x15x4xf32>
    %34 = tpu.concatenate %32, %33 in 1 : vector<2x1x4xf32>, vector<2x15x4xf32> -> vector<2x16x4xf32>
    %35 = vector.extract_strided_slice %31 {offsets = [0, 1, 0], sizes = [2, 15, 4], strides = [1, 1, 1]} : vector<2x16x4xf32> to vector<2x15x4xf32>
    %36 = tpu.concatenate %35, %32 in 1 : vector<2x15x4xf32>, vector<2x1x4xf32> -> vector<2x16x4xf32>
    %37 = tpu.concatenate %34, %31, %36 in 2 : vector<2x16x4xf32>, vector<2x16x4xf32>, vector<2x16x4xf32> -> vector<2x16x12xf32>
    %c10 = arith.constant 10 : index
    %c0_20 = arith.constant 0 : index
    %c0_21 = arith.constant 0 : index
    %38 = vector.load %arg9[%c10, %c0_20, %c0_21] : memref<12x16x12xf32, #tpu.memory_space<vmem>>, vector<2x16x12xf32>
    tpu.vector_store %arg9[%c10, %c0_20, %c0_21], %37 {strides = array<i32>} : memref<12x16x12xf32, #tpu.memory_space<vmem>>, vector<2x16x12xf32>,
    %c0_22 = arith.constant 0 : index
    %c0_23 = arith.constant 0 : index
    %c0_24 = arith.constant 0 : index
    %39 = vector.load %arg9[%c0_22, %c0_23, %c0_24] : memref<12x16x12xf32, #tpu.memory_space<vmem>>, vector<10x16x12xf32>
    %40 = vector.shape_cast %39 : vector<10x16x12xf32> to vector<160x12xf32>
    %c0_25 = arith.constant 0 : index
    %c0_26 = arith.constant 0 : index
    %c0_27 = arith.constant 0 : index
    %41 = vector.load %arg6[%c0_25, %c0_26, %c0_27] : memref<3x12x8xf32, #tpu.memory_space<vmem>>, vector<1x12x8xf32>
    %42 = vector.shape_cast %41 : vector<1x12x8xf32> to vector<12x8xf32>
    %cst_28 = arith.constant dense<0.000000e+00> : vector<160x8xf32>
    %43 = tpu.matmul %40, %42, %cst_28 {dimension_numbers = #tpu.dot_dimension_numbers<[1], [0], [0], [1], [0, 0, 1, 1], [], []>} : vector<160x12xf32>, vector<12x8xf32>, vector<160x8xf32> -> vector<160x8xf32>
    %c1 = arith.constant 1 : index
    %c0_29 = arith.constant 0 : index
    %c0_30 = arith.constant 0 : index
    %44 = vector.load %arg9[%c1, %c0_29, %c0_30] : memref<12x16x12xf32, #tpu.memory_space<vmem>>, vector<10x16x12xf32>
    %45 = vector.shape_cast %44 : vector<10x16x12xf32> to vector<160x12xf32>
    %c1_31 = arith.constant 1 : index
    %c0_32 = arith.constant 0 : index
    %c0_33 = arith.constant 0 : index
    %46 = vector.load %arg6[%c1_31, %c0_32, %c0_33] : memref<3x12x8xf32, #tpu.memory_space<vmem>>, vector<1x12x8xf32>
    %47 = vector.shape_cast %46 : vector<1x12x8xf32> to vector<12x8xf32>
    %cst_34 = arith.constant dense<0.000000e+00> : vector<160x8xf32>
    %48 = tpu.matmul %45, %47, %cst_34 {dimension_numbers = #tpu.dot_dimension_numbers<[1], [0], [0], [1], [0, 0, 1, 1], [], []>} : vector<160x12xf32>, vector<12x8xf32>, vector<160x8xf32> -> vector<160x8xf32>
    %49 = arith.addf %43, %48 : vector<160x8xf32>
    %c2_35 = arith.constant 2 : index
    %c0_36 = arith.constant 0 : index
    %c0_37 = arith.constant 0 : index
    %50 = vector.load %arg9[%c2_35, %c0_36, %c0_37] : memref<12x16x12xf32, #tpu.memory_space<vmem>>, vector<10x16x12xf32>
    %51 = vector.shape_cast %50 : vector<10x16x12xf32> to vector<160x12xf32>
    %c2_38 = arith.constant 2 : index
    %c0_39 = arith.constant 0 : index
    %c0_40 = arith.constant 0 : index
    %52 = vector.load %arg6[%c2_38, %c0_39, %c0_40] : memref<3x12x8xf32, #tpu.memory_space<vmem>>, vector<1x12x8xf32>
    %53 = vector.shape_cast %52 : vector<1x12x8xf32> to vector<12x8xf32>
    %cst_41 = arith.constant dense<0.000000e+00> : vector<160x8xf32>
    %54 = tpu.matmul %51, %53, %cst_41 {dimension_numbers = #tpu.dot_dimension_numbers<[1], [0], [0], [1], [0, 0, 1, 1], [], []>} : vector<160x12xf32>, vector<12x8xf32>, vector<160x8xf32> -> vector<160x8xf32>
    %55 = arith.addf %49, %54 : vector<160x8xf32>
    %c0_42 = arith.constant 0 : index
    %c0_43 = arith.constant 0 : index
    %56 = vector.load %arg7[%c0_42, %c0_43] : memref<1x8xf32, #tpu.memory_space<vmem>>, vector<1x8xf32>
    %57 = vector.broadcast %56 : vector<1x8xf32> to vector<160x8xf32>
    %58 = arith.addf %55, %57 : vector<160x8xf32>
    %cst_44 = arith.constant 2.000000e-01 : f32
    %59 = vector.broadcast %cst_44 : f32 to vector<160x8xf32>
    %60 = arith.mulf %59, %58 : vector<160x8xf32>
    %61 = arith.maximumf %58, %60 : vector<160x8xf32>
    %62 = vector.shape_cast %61 : vector<160x8xf32> to vector<10x16x8xf32>
    %c0_45 = arith.constant 0 : index
    %c0_46 = arith.constant 0 : index
    %c0_47 = arith.constant 0 : index
    %63 = vector.load %arg10[%c0_45, %c0_46, %c0_47] : memref<10x16x8xf32, #tpu.memory_space<vmem>>, vector<10x16x8xf32>
    tpu.vector_store %arg10[%c0_45, %c0_46, %c0_47], %62 {strides = array<i32>} : memref<10x16x8xf32, #tpu.memory_space<vmem>>, vector<10x16x8xf32>,
    %64 = arith.extui %0 : i1 to i32
    %c0_i32_48 = arith.constant 0 : i32
    %65 = arith.cmpi ne, %64, %c0_i32_48 : i32
    scf.if %65 {
      %c1_71 = arith.constant 1 : index
      %c0_72 = arith.constant 0 : index
      %c0_73 = arith.constant 0 : index
      %111 = vector.load %arg10[%c1_71, %c0_72, %c0_73] : memref<10x16x8xf32, #tpu.memory_space<vmem>>, vector<1x16x8xf32>
      %c0_74 = arith.constant 0 : index
      %c0_75 = arith.constant 0 : index
      %c0_76 = arith.constant 0 : index
      %112 = vector.load %arg10[%c0_74, %c0_75, %c0_76] : memref<10x16x8xf32, #tpu.memory_space<vmem>>, vector<1x16x8xf32>
      tpu.vector_store %arg10[%c0_74, %c0_75, %c0_76], %111 {strides = array<i32>} : memref<10x16x8xf32, #tpu.memory_space<vmem>>, vector<1x16x8xf32>,
    } else {
    }
    %66 = arith.extui %1 : i1 to i32
    %c0_i32_49 = arith.constant 0 : i32
    %67 = arith.cmpi ne, %66, %c0_i32_49 : i32
    scf.if %67 {
      %c8 = arith.constant 8 : index
      %c0_71 = arith.constant 0 : index
      %c0_72 = arith.constant 0 : index
      %111 = vector.load %arg10[%c8, %c0_71, %c0_72] : memref<10x16x8xf32, #tpu.memory_space<vmem>>, vector<1x16x8xf32>
      %c9 = arith.constant 9 : index
      %c0_73 = arith.constant 0 : index
      %c0_74 = arith.constant 0 : index
      %112 = vector.load %arg10[%c9, %c0_73, %c0_74] : memref<10x16x8xf32, #tpu.memory_space<vmem>>, vector<1x16x8xf32>
      tpu.vector_store %arg10[%c9, %c0_73, %c0_74], %111 {strides = array<i32>} : memref<10x16x8xf32, #tpu.memory_space<vmem>>, vector<1x16x8xf32>,
    } else {
    }
    %c0_50 = arith.constant 0 : index
    %c0_51 = arith.constant 0 : index
    %c0_52 = arith.constant 0 : index
    %68 = tpu.strided_load %arg10[%c0_50, %c0_51, %c0_52] {strides = array<i32: 1, 2, 1>} : memref<10x16x8xf32, #tpu.memory_space<vmem>>, vector<10x8x8xf32>
    %c0_53 = arith.constant 0 : index
    %c1_54 = arith.constant 1 : index
    %c0_55 = arith.constant 0 : index
    %69 = tpu.strided_load %arg10[%c0_53, %c1_54, %c0_55] {strides = array<i32: 1, 2, 1>} : memref<10x16x8xf32, #tpu.memory_space<vmem>>, vector<10x8x8xf32>
    %70 = vector.extract_strided_slice %68 {offsets = [0, 0, 0], sizes = [10, 1, 8], strides = [1, 1, 1]} : vector<10x8x8xf32> to vector<10x1x8xf32>
    %71 = vector.extract_strided_slice %69 {offsets = [0, 0, 0], sizes = [10, 7, 8], strides = [1, 1, 1]} : vector<10x8x8xf32> to vector<10x7x8xf32>
    %72 = tpu.concatenate %70, %71 in 1 : vector<10x1x8xf32>, vector<10x7x8xf32> -> vector<10x8x8xf32>
    %73 = vector.extract_strided_slice %68 {offsets = [0, 1, 0], sizes = [10, 7, 8], strides = [1, 1, 1]} : vector<10x8x8xf32> to vector<10x7x8xf32>
    %74 = vector.extract_strided_slice %69 {offsets = [0, 7, 0], sizes = [10, 1, 8], strides = [1, 1, 1]} : vector<10x8x8xf32> to vector<10x1x8xf32>
    %75 = tpu.concatenate %73, %74 in 1 : vector<10x7x8xf32>, vector<10x1x8xf32> -> vector<10x8x8xf32>
    %cst_56 = arith.constant 3.000000e+00 : f32
    %76 = vector.broadcast %cst_56 : f32 to vector<10x8x8xf32>
    %77 = arith.mulf %76, %68 : vector<10x8x8xf32>
    %78 = arith.addf %72, %77 : vector<10x8x8xf32>
    %cst_57 = arith.constant 3.000000e+00 : f32
    %79 = vector.broadcast %cst_57 : f32 to vector<10x8x8xf32>
    %80 = arith.mulf %79, %69 : vector<10x8x8xf32>
    %81 = arith.addf %78, %80 : vector<10x8x8xf32>
    %82 = arith.addf %81, %75 : vector<10x8x8xf32>
    %cst_58 = arith.constant 1.250000e-01 : f32
    %83 = vector.broadcast %cst_58 : f32 to vector<10x8x8xf32>
    %84 = arith.mulf %82, %83 : vector<10x8x8xf32>
    %85 = vector.shape_cast %84 : vector<10x8x8xf32> to vector<5x2x8x8xf32>
    %86 = vector.extract_strided_slice %85 {offsets = [0, 0, 0, 0], sizes = [5, 1, 8, 8], strides = [1, 1, 1, 1]} : vector<5x2x8x8xf32> to vector<5x1x8x8xf32>
    %87 = vector.shape_cast %86 : vector<5x1x8x8xf32> to vector<5x8x8xf32>
    %88 = vector.extract_strided_slice %85 {offsets = [0, 1, 0, 0], sizes = [5, 1, 8, 8], strides = [1, 1, 1, 1]} : vector<5x2x8x8xf32> to vector<5x1x8x8xf32>
    %89 = vector.shape_cast %88 : vector<5x1x8x8xf32> to vector<5x8x8xf32>
    %90 = vector.extract_strided_slice %87 {offsets = [0, 0, 0], sizes = [4, 8, 8], strides = [1, 1, 1]} : vector<5x8x8xf32> to vector<4x8x8xf32>
    %91 = vector.extract_strided_slice %89 {offsets = [0, 0, 0], sizes = [4, 8, 8], strides = [1, 1, 1]} : vector<5x8x8xf32> to vector<4x8x8xf32>
    %cst_59 = arith.constant 3.000000e+00 : f32
    %92 = vector.broadcast %cst_59 : f32 to vector<4x8x8xf32>
    %93 = arith.mulf %92, %91 : vector<4x8x8xf32>
    %94 = arith.addf %90, %93 : vector<4x8x8xf32>
    %95 = vector.extract_strided_slice %87 {offsets = [1, 0, 0], sizes = [4, 8, 8], strides = [1, 1, 1]} : vector<5x8x8xf32> to vector<4x8x8xf32>
    %cst_60 = arith.constant 3.000000e+00 : f32
    %96 = vector.broadcast %cst_60 : f32 to vector<4x8x8xf32>
    %97 = arith.mulf %96, %95 : vector<4x8x8xf32>
    %98 = arith.addf %94, %97 : vector<4x8x8xf32>
    %99 = vector.extract_strided_slice %89 {offsets = [1, 0, 0], sizes = [4, 8, 8], strides = [1, 1, 1]} : vector<5x8x8xf32> to vector<4x8x8xf32>
    %100 = arith.addf %98, %99 : vector<4x8x8xf32>
    %cst_61 = arith.constant 1.250000e-01 : f32
    %101 = vector.broadcast %cst_61 : f32 to vector<4x8x8xf32>
    %102 = arith.mulf %100, %101 : vector<4x8x8xf32>
    %c0_62 = arith.constant 0 : index
    %c0_63 = arith.constant 0 : index
    %c0_64 = arith.constant 0 : index
    %c0_65 = arith.constant 0 : index
    %103 = vector.load %arg5[%c0_62, %c0_63, %c0_64, %c0_65] : memref<1x4x8x8xf32, #tpu.memory_space<vmem>>, vector<1x4x8x8xf32>
    %104 = vector.shape_cast %103 : vector<1x4x8x8xf32> to vector<4x8x8xf32>
    %105 = arith.addf %102, %104 : vector<4x8x8xf32>
    %cst_66 = arith.constant 0.707106769 : f32
    %106 = vector.broadcast %cst_66 : f32 to vector<4x8x8xf32>
    %107 = arith.mulf %105, %106 : vector<4x8x8xf32>
    %c0_67 = arith.constant 0 : index
    %c0_68 = arith.constant 0 : index
    %c0_69 = arith.constant 0 : index
    %c0_70 = arith.constant 0 : index
    %108 = vector.load %arg8[%c0_67, %c0_68, %c0_69, %c0_70] : memref<1x4x8x8xf32, #tpu.memory_space<vmem>>, vector<1x4x8x8xf32>
    %109 = vector.shape_cast %108 : vector<1x4x8x8xf32> to vector<4x8x8xf32>
    %110 = vector.shape_cast %107 : vector<4x8x8xf32> to vector<1x4x8x8xf32>
    tpu.vector_store %arg8[%c0_67, %c0_68, %c0_69, %c0_70], %110 {strides = array<i32>} : memref<1x4x8x8xf32, #tpu.memory_space<vmem>>, vector<1x4x8x8xf32>,
    return
  }
  func.func @transform_0(%arg0: i32, %arg1: i32) -> (i32, i32, i32, i32) {
    %c4_i32 = arith.constant 4 : i32
    %0 = arith.muli %arg1, %c4_i32 : i32
    %c1_i32 = arith.constant 1 : i32
    %1 = arith.subi %0, %c1_i32 : i32
    %c0_i32 = arith.constant 0 : i32
    %2 = arith.maxsi %1, %c0_i32 : i32
    %c0_i32_0 = arith.constant 0 : i32
    %c0_i32_1 = arith.constant 0 : i32
    %c0_i32_2 = arith.constant 0 : i32
    return %arg0, %2, %c0_i32_0, %c0_i32_1 : i32, i32, i32, i32
  }
  func.func @transform_1(%arg0: i32, %arg1: i32) -> (i32, i32, i32, i32) {
    %c0_i32 = arith.constant 0 : i32
    %c0_i32_0 = arith.constant 0 : i32
    %c0_i32_1 = arith.constant 0 : i32
    return %arg0, %arg1, %c0_i32, %c0_i32_0 : i32, i32, i32, i32
  }
  func.func @transform_2(%arg0: i32, %arg1: i32) -> (i32, i32, i32, i32) {
    %c1_i32 = arith.constant 1 : i32
    %0 = arith.addi %arg1, %c1_i32 : i32
    %c4_i32 = arith.constant 4 : i32
    %1 = arith.muli %0, %c4_i32 : i32
    %c7_i32 = arith.constant 7 : i32
    %2 = arith.minsi %1, %c7_i32 : i32
    %c0_i32 = arith.constant 0 : i32
    %c0_i32_0 = arith.constant 0 : i32
    %c0_i32_1 = arith.constant 0 : i32
    return %arg0, %2, %c0_i32, %c0_i32_0 : i32, i32, i32, i32
  }
  func.func @transform_3(%arg0: i32, %arg1: i32) -> (i32, i32, i32, i32) {
    %c0_i32 = arith.constant 0 : i32
    %c0_i32_0 = arith.constant 0 : i32
    %c0_i32_1 = arith.constant 0 : i32
    return %arg0, %arg1, %c0_i32, %c0_i32_0 : i32, i32, i32, i32
  }
  func.func @transform_4(%arg0: i32, %arg1: i32) -> (i32, i32, i32) {
    %c0_i32 = arith.constant 0 : i32
    %c0_i32_0 = arith.constant 0 : i32
    %c0_i32_1 = arith.constant 0 : i32
    %c0_i32_2 = arith.constant 0 : i32
    return %c0_i32, %c0_i32_0, %c0_i32_1 : i32, i32, i32
  }
  func.func @transform_5(%arg0: i32, %arg1: i32) -> (i32, i32) {
    %c0_i32 = arith.constant 0 : i32
    %c0_i32_0 = arith.constant 0 : i32
    %c0_i32_1 = arith.constant 0 : i32
    return %c0_i32, %c0_i32_0 : i32, i32
  }
  func.func @transform_6(%arg0: i32, %arg1: i32) -> (i32, i32, i32, i32) {
    %c0_i32 = arith.constant 0 : i32
    %c0_i32_0 = arith.constant 0 : i32
    %c0_i32_1 = arith.constant 0 : i32
    return %arg0, %arg1, %c0_i32, %c0_i32_0 : i32, i32, i32, i32
  }
}

</mosaic_0001>

<llo_original>
// kernel: discriminator_block.2
$region0: #{discriminator_block.2}
  #allocation0 [shape = 'u32[]', space=smem, size = 0x4, offset = 0x4, fixed_abs, tag = 'smem constant byte address 0x4 - core index']
  #allocation1 [shape = 'u32[144,128]{1,0:T(1,128)}', space=vmem, size = 0x12000, scoped, tag = 'internal scratch']
  #allocation2 [shape = 'f32[10,16,12]{2,1,0:T(8,128)}', space=vmem, size = 0x14000, scoped, tag = 'scratch operand']
  %s0 = inlined_call_operand.hbm [shape: f32[2,16,16,4], index: 0, kind: input, shape index: {}, may-alias: {0,1,2}]
  %s1 = inlined_call_operand.hbm [shape: f32[2,16,16,4], index: 1, kind: input, shape index: {}, may-alias: {0,1,2}]
  %s2 = inlined_call_operand.hbm [shape: f32[2,16,16,4], index: 2, kind: input, shape index: {}, may-alias: {0,1,2}]
  %s3 = inlined_call_operand.hbm [shape: f32[3,12,4], index: 3, kind: input, shape index: {}]
  %s4 = inlined_call_operand.hbm [shape: f32[1,4], index: 4, kind: input, shape index: {}]
  %s5 = inlined_call_operand.hbm [shape: f32[4,8], index: 5, kind: input, shape index: {}]
  %s6 = inlined_call_operand.hbm [shape: f32[1,8], index: 6, kind: input, shape index: {}]
  %s7 = inlined_call_operand.hbm [shape: f32[2,16,16,4], index: 7, kind: output, shape index: {0}]
  %s8 = inlined_call_operand.hbm [shape: f32[2,8,8,8], index: 8, kind: output, shape index: {1}]
  %9 = xla_tuple %s7, %s8
  %s10 = sld [smem:[#allocation0]]
  $region97: #{discriminator_block.2} parent=0
    _
  %s12 = ssub.s32 1, %s10
  %s13 = scalar_select 0, %s12, %s10
  $region1: #{discriminator_block.2} parent=0
    #allocation3 [shape = 'u8[16384]{0}', space=vmem, size = 0x4000, scoped, tag = 'input window, operand 0']
    #allocation4 [shape = 's32[2]{0}', space=sflag, size = 0x8, scoped, tag = 'scoped memory for discriminator_block.2']
    #allocation5 [shape = 's32[2]{0}', space=sflag, size = 0x8, scoped, tag = 'scoped memory for discriminator_block.2']
    #allocation6 [shape = 'u8[131072]{0}', space=vmem, size = 0x20000, scoped, tag = 'input window, operand 1']
    #allocation7 [shape = 's32[2]{0}', space=sflag, size = 0x8, scoped, tag = 'scoped memory for discriminator_block.2']
    #allocation8 [shape = 'u8[16384]{0}', space=vmem, size = 0x4000, scoped, tag = 'input window, operand 2']
    #allocation9 [shape = 'u8[24576]{0}', space=vmem, size = 0x6000, scoped, tag = 'input window, operand 3, single buffered']
    #allocation10 [shape = 's32[1]{0}', space=sflag, size = 0x4, scoped, tag = 'scoped memory for discriminator_block.2']
    #allocation11 [shape = 'u8[512]{0}', space=vmem, size = 0x400, scoped, tag = 'input window, operand 4, single buffered']
    #allocation12 [shape = 'u8[2048]{0}', space=vmem, size = 0x800, scoped, tag = 'input window, operand 5, single buffered']
    #allocation13 [shape = 's32[1]{0}', space=sflag, size = 0x4, scoped, tag = 'scoped memory for discriminator_block.2']
    #allocation14 [shape = 'u8[512]{0}', space=vmem, size = 0x400, scoped, tag = 'input window, operand 6, single buffered']
    #allocation15 [shape = 'u8[131072]{0}', space=vmem, size = 0x20000, scoped, tag = 'output window, operand 0']
    #allocation16 [shape = 'u8[32768]{0}', space=vmem, size = 0x8000, scoped, tag = 'output window, operand 1']
    #allocation17 [shape = 's32[2]{0}', space=sflag, size = 0x8, scoped, tag = 'scoped memory for discriminator_block.2']
    %14 = vsyncpa [#allocation4], 0
    %s15 = scalar_lea.sflag [#allocation4], 1
    %16 = vsyncpa %s15, 0
    %17 = vsyncpa [#allocation7], 0
    %s18 = scalar_lea.sflag [#allocation7], 1
    %19 = vsyncpa %s18, 0
    %20 = vsyncpa [#allocation10], 0
    %21 = vsyncpa [#allocation13], 0
    %22 = vsyncpa [#allocation5], 0
    %s23 = scalar_lea.sflag [#allocation5], 1
    %24 = vsyncpa %s23, 0
    %25 = vsyncpa [#allocation17], 0
    %s26 = scalar_lea.sflag [#allocation17], 1
    %27 = vsyncpa %s26, 0
    loop: start=0, step=1, limit=6
    $region2: #{discriminator_block.2} parent=1 // loop_pre_header
      _
    $region3: #{discriminator_block.2} parent=1 // loop_header
      %s29 = sphi 0, %s33
      %p30 = scmp.ge.s32.totalorder %s29, 6
      %s36 = sphi 0, %s48
      %s37 = sphi 0, %s44
      %s38 = sphi 0, %s36
      %s39 = sphi 0, %s37
      %s40 = sphi 0, %s38
      %s41 = sphi 0, %s39
      %s61 = sphi 0, %s63
      %s64 = sphi 0, %s61
      %s65 = sphi 0, %s64
      %s81 = sphi 0, %s65
      %s89 = sphi 0, %s91
      %s92 = sphi 0, %s89
      %s93 = sphi 0, %s92
      %s109 = sphi 0, %s93
      %s125 = sphi 0, %s127
      %s128 = sphi 0, %s125
      %s129 = sphi 0, %s128
      %s145 = sphi 0, %s129
      %s149 = sphi 0, %s149
      %s151 = sphi 0, %s149
      %s152 = sphi 0, %s151
      %s166 = sphi 0, %s152
      %s170 = sphi 0, %s170
      %s172 = sphi 0, %s170
      %s173 = sphi 0, %s172
      %s187 = sphi 0, %s173
      %s191 = sphi 0, %s191
      %s193 = sphi 0, %s191
      %s194 = sphi 0, %s193
      %s208 = sphi 0, %s194
      %s212 = sphi 0, %s212
      %s214 = sphi 0, %s212
      %s215 = sphi 0, %s214
      %s229 = sphi 0, %s215
      %s237 = sphi 0, %s239
      %s240 = sphi 0, %s237
      %s241 = sphi 0, %s240
      %s257 = sphi 0, %s241
      %s265 = sphi 0, %s267
      %s268 = sphi 0, %s265
      %s269 = sphi 0, %s268
      %s285 = sphi 0, %s269
    $region4: #{discriminator_block.2} parent=1 // loop_header_branch
      %32 = sbr.rel (%p30) target = $region8
    $region5: #{discriminator_block.2} parent=1 // loop_body
      %s34 = ssub.s32 %s29, 1
      %s35 = ssub.s32 %s29, 2
      %s42 = sadd.s32 1, %s37
      %p43 = scmp.ge.s32.totalorder %s42, 2
      %s44 = scalar_select %p43, 0, %s42
      %s45 = sadd.s32 1, %s36
      %s46 = scalar_select %p43, %s45, %s36
      %p47 = scmp.ge.s32.totalorder %s46, 2
      %s48 = scalar_select %p47, 0, %s46
      %s49 = smul.u32 %s37, 8
      %s50 = ssub.s32 %s49, 1
      %p51 = scmp.gt.s32.totalorder %s50, 0
      %s52 = scalar_select %p51, %s50, 0
      %s53 = smul.u32 %s44, 8
      %s54 = ssub.s32 %s53, 1
      %p55 = scmp.gt.s32.totalorder %s54, 0
      %s56 = scalar_select %p55, %s54, 0
      %s57 = ssub.s32 %s36, %s48
      %s58 = ssub.s32 %s52, %s56
      %s59 = sor.u32 %s57, %s58
      %p60 = scmp.eq.s32.totalorder %s59, 0
      %s62 = sadd.s32 %s61, 1
      %s63 = scalar_select %p60, %s61, %s62
      %p66 = pneg %p60
      %p67 = scmp.eq.s32.totalorder %s29, 3
      %p68 = por %p66, %p67
      %p69 = scmp.ne.s32.totalorder %s61, %s64
      %p70 = scmp.eq.s32.totalorder %s29, 0
      %p71 = por %p69, %p70
      %p72 = scmp.ne.s32.totalorder %s61, %s64
      %p73 = scmp.eq.s32.totalorder %s34, 3
      %p74 = por %p72, %p73
      %p75 = scmp.ne.s32.totalorder %s64, %s65
      %p76 = scmp.eq.s32.totalorder %s34, 0
      %p77 = por %p75, %p76
      %p78 = scmp.ne.s32.totalorder %s64, %s65
      %p79 = scmp.eq.s32.totalorder %s35, 3
      %p80 = por %p78, %p79
      %p82 = scmp.ne.s32.totalorder %s65, %s81
      %p83 = scmp.eq.s32.totalorder %s35, 0
      %p84 = por %p82, %p83
      %s85 = ssub.s32 %s36, %s48
      %s86 = ssub.s32 %s37, %s44
      %s87 = sor.u32 %s85, %s86
      %p88 = scmp.eq.s32.totalorder %s87, 0
      %s90 = sadd.s32 %s89, 1
      %s91 = scalar_select %p88, %s89, %s90
      %p94 = pneg %p88
      %p95 = scmp.eq.s32.totalorder %s29, 3
      %p96 = por %p94, %p95
      %p97 = scmp.ne.s32.totalorder %s89, %s92
      %p98 = scmp.eq.s32.totalorder %s29, 0
      %p99 = por %p97, %p98
      %p100 = scmp.ne.s32.totalorder %s89, %s92
      %p101 = scmp.eq.s32.totalorder %s34, 3
      %p102 = por %p100, %p101
      %p103 = scmp.ne.s32.totalorder %s92, %s93
      %p104 = scmp.eq.s32.totalorder %s34, 0
      %p105 = por %p103, %p104
      %p106 = scmp.ne.s32.totalorder %s92, %s93
      %p107 = scmp.eq.s32.totalorder %s35, 3
      %p108 = por %p106, %p107
      %p110 = scmp.ne.s32.totalorder %s93, %s109
      %p111 = scmp.eq.s32.totalorder %s35, 0
      %p112 = por %p110, %p111
      %s113 = sadd.s32 %s37, 1
      %s114 = smul.u32 %s113, 8
      %p115 = scmp.lt.s32.totalorder %s114, 15
      %s116 = scalar_select %p115, %s114, 15
      %s117 = sadd.s32 %s44, 1
      %s118 = smul.u32 %s117, 8
      %p119 = scmp.lt.s32.totalorder %s118, 15
      %s120 = scalar_select %p119, %s118, 15
      %s121 = ssub.s32 %s36, %s48
      %s122 = ssub.s32 %s116, %s120
      %s123 = sor.u32 %s121, %s122
      %p124 = scmp.eq.s32.totalorder %s123, 0
      %s126 = sadd.s32 %s125, 1
      %s127 = scalar_select %p124, %s125, %s126
      %p130 = pneg %p124
      %p131 = scmp.eq.s32.totalorder %s29, 3
      %p132 = por %p130, %p131
      %p133 = scmp.ne.s32.totalorder %s125, %s128
      %p134 = scmp.eq.s32.totalorder %s29, 0
      %p135 = por %p133, %p134
      %p136 = scmp.ne.s32.totalorder %s125, %s128
      %p137 = scmp.eq.s32.totalorder %s34, 3
      %p138 = por %p136, %p137
      %p139 = scmp.ne.s32.totalorder %s128, %s129
      %p140 = scmp.eq.s32.totalorder %s34, 0
      %p141 = por %p139, %p140
      %p142 = scmp.ne.s32.totalorder %s128, %s129
      %p143 = scmp.eq.s32.totalorder %s35, 3
      %p144 = por %p142, %p143
      %p146 = scmp.ne.s32.totalorder %s129, %s145
      %p147 = scmp.eq.s32.totalorder %s35, 0
      %p148 = por %p146, %p147
      %s150 = sadd.s32 %s149, 1
      %p153 = scmp.eq.s32.totalorder %s29, 3
      %p154 = scmp.ne.s32.totalorder %s149, %s151
      %p155 = scmp.eq.s32.totalorder %s29, 0
      %p156 = por %p154, %p155
      %p157 = scmp.ne.s32.totalorder %s149, %s151
      %p158 = scmp.eq.s32.totalorder %s34, 3
      %p159 = por %p157, %p158
      %p160 = scmp.ne.s32.totalorder %s151, %s152
      %p161 = scmp.eq.s32.totalorder %s34, 0
      %p162 = por %p160, %p161
      %p163 = scmp.ne.s32.totalorder %s151, %s152
      %p164 = scmp.eq.s32.totalorder %s35, 3
      %p165 = por %p163, %p164
      %p167 = scmp.ne.s32.totalorder %s152, %s166
      %p168 = scmp.eq.s32.totalorder %s35, 0
      %p169 = por %p167, %p168
      %s171 = sadd.s32 %s170, 1
      %p174 = scmp.eq.s32.totalorder %s29, 3
      %p175 = scmp.ne.s32.totalorder %s170, %s172
      %p176 = scmp.eq.s32.totalorder %s29, 0
      %p177 = por %p175, %p176
      %p178 = scmp.ne.s32.totalorder %s170, %s172
      %p179 = scmp.eq.s32.totalorder %s34, 3
      %p180 = por %p178, %p179
      %p181 = scmp.ne.s32.totalorder %s172, %s173
      %p182 = scmp.eq.s32.totalorder %s34, 0
      %p183 = por %p181, %p182
      %p184 = scmp.ne.s32.totalorder %s172, %s173
      %p185 = scmp.eq.s32.totalorder %s35, 3
      %p186 = por %p184, %p185
      %p188 = scmp.ne.s32.totalorder %s173, %s187
      %p189 = scmp.eq.s32.totalorder %s35, 0
      %p190 = por %p188, %p189
      %s192 = sadd.s32 %s191, 1
      %p195 = scmp.eq.s32.totalorder %s29, 3
      %p196 = scmp.ne.s32.totalorder %s191, %s193
      %p197 = scmp.eq.s32.totalorder %s29, 0
      %p198 = por %p196, %p197
      %p199 = scmp.ne.s32.totalorder %s191, %s193
      %p200 = scmp.eq.s32.totalorder %s34, 3
      %p201 = por %p199, %p200
      %p202 = scmp.ne.s32.totalorder %s193, %s194
      %p203 = scmp.eq.s32.totalorder %s34, 0
      %p204 = por %p202, %p203
      %p205 = scmp.ne.s32.totalorder %s193, %s194
      %p206 = scmp.eq.s32.totalorder %s35, 3
      %p207 = por %p205, %p206
      %p209 = scmp.ne.s32.totalorder %s194, %s208
      %p210 = scmp.eq.s32.totalorder %s35, 0
      %p211 = por %p209, %p210
      %s213 = sadd.s32 %s212, 1
      %p216 = scmp.eq.s32.totalorder %s29, 3
      %p217 = scmp.ne.s32.totalorder %s212, %s214
      %p218 = scmp.eq.s32.totalorder %s29, 0
      %p219 = por %p217, %p218
      %p220 = scmp.ne.s32.totalorder %s212, %s214
      %p221 = scmp.eq.s32.totalorder %s34, 3
      %p222 = por %p220, %p221
      %p223 = scmp.ne.s32.totalorder %s214, %s215
      %p224 = scmp.eq.s32.totalorder %s34, 0
      %p225 = por %p223, %p224
      %p226 = scmp.ne.s32.totalorder %s214, %s215
      %p227 = scmp.eq.s32.totalorder %s35, 3
      %p228 = por %p226, %p227
      %p230 = scmp.ne.s32.totalorder %s215, %s229
      %p231 = scmp.eq.s32.totalorder %s35, 0
      %p232 = por %p230, %p231
      %s233 = ssub.s32 %s36, %s48
      %s234 = ssub.s32 %s37, %s44
      %s235 = sor.u32 %s233, %s234
      %p236 = scmp.eq.s32.totalorder %s235, 0
      %s238 = sadd.s32 %s237, 1
      %s239 = scalar_select %p236, %s237, %s238
      %p242 = pneg %p236
      %p243 = scmp.eq.s32.totalorder %s29, 3
      %p244 = por %p242, %p243
      %p245 = scmp.ne.s32.totalorder %s237, %s240
      %p246 = scmp.eq.s32.totalorder %s29, 0
      %p247 = por %p245, %p246
      %p248 = scmp.ne.s32.totalorder %s237, %s240
      %p249 = scmp.eq.s32.totalorder %s34, 3
      %p250 = por %p248, %p249
      %p251 = scmp.ne.s32.totalorder %s240, %s241
      %p252 = scmp.eq.s32.totalorder %s34, 0
      %p253 = por %p251, %p252
      %p254 = scmp.ne.s32.totalorder %s240, %s241
      %p255 = scmp.eq.s32.totalorder %s35, 3
      %p256 = por %p254, %p255
      %p258 = scmp.ne.s32.totalorder %s241, %s257
      %p259 = scmp.eq.s32.totalorder %s35, 0
      %p260 = por %p258, %p259
      %s261 = ssub.s32 %s36, %s48
      %s262 = ssub.s32 %s37, %s44
      %s263 = sor.u32 %s261, %s262
      %p264 = scmp.eq.s32.totalorder %s263, 0
      %s266 = sadd.s32 %s265, 1
      %s267 = scalar_select %p264, %s265, %s266
      %p270 = pneg %p264
      %p271 = scmp.eq.s32.totalorder %s29, 3
      %p272 = por %p270, %p271
      %p273 = scmp.ne.s32.totalorder %s265, %s268
      %p274 = scmp.eq.s32.totalorder %s29, 0
      %p275 = por %p273, %p274
      %p276 = scmp.ne.s32.totalorder %s265, %s268
      %p277 = scmp.eq.s32.totalorder %s34, 3
      %p278 = por %p276, %p277
      %p279 = scmp.ne.s32.totalorder %s268, %s269
      %p280 = scmp.eq.s32.totalorder %s34, 0
      %p281 = por %p279, %p280
      %p282 = scmp.ne.s32.totalorder %s268, %s269
      %p283 = scmp.eq.s32.totalorder %s35, 3
      %p284 = por %p282, %p283
      %p286 = scmp.ne.s32.totalorder %s269, %s285
      %p287 = scmp.eq.s32.totalorder %s35, 0
      %p288 = por %p286, %p287
      %p289 = scmp.le.s32.totalorder 1, %s29
      %p290 = scmp.lt.s32.totalorder %s29, 5
      %p291 = pnand %p289, %p290
      %p292 = pneg %p291
      // Predicated region
      $region9: #{discriminator_block.2} parent=5 // pred_check
        _
      $region10: #{discriminator_block.2} parent=5 // pred_check_branch
        %294 = sbr.rel (%p291) target = $region12
      $region11: #{discriminator_block.2} parent=5 // pred_region
        %s295 = ssub.s32 %s29, 1
        // Predicated region
        $region13: #{discriminator_block.2} parent=11 // pred_check
          %p296 = pneg %p162
        $region14: #{discriminator_block.2} parent=11 // pred_check_branch
          %298 = sbr.rel (%p296) target = $region16
        $region15: #{discriminator_block.2} parent=11 // pred_region
          %s300 = ssub.s32 768, 768
          %301 = vsyncadd [#allocation10], %s300
          %s302 = sshll.u32 [#allocation9], 4
          %s303 = int_to_ptr.vmem [resolvable:$true] %s302
          %308 = dma.hbm_to_vmem [thread:$0]  %s3, 768, %s303, [#allocation10], 128, 128, 8
        $region16: #{discriminator_block.2} parent=11 // pred_fallthru
          _
        // Predicated region
        $region17: #{discriminator_block.2} parent=11 // pred_check
          %p309 = pneg %p183
        $region18: #{discriminator_block.2} parent=11 // pred_check_branch
          %311 = sbr.rel (%p309) target = $region20
        $region19: #{discriminator_block.2} parent=11 // pred_region
          %s313 = ssub.s32 16, 16
          %314 = vsyncadd [#allocation10], %s313
          %s316 = sshll.u32 [#allocation11], 4
          %s317 = int_to_ptr.vmem [resolvable:$true] %s316
          %319 = dma.hbm_to_vmem [thread:$0]  %s4, 16, %s317, [#allocation10]
        $region20: #{discriminator_block.2} parent=11 // pred_fallthru
          _
        // Predicated region
        $region21: #{discriminator_block.2} parent=11 // pred_check
          %p320 = pneg %p204
        $region22: #{discriminator_block.2} parent=11 // pred_check_branch
          %322 = sbr.rel (%p320) target = $region24
        $region23: #{discriminator_block.2} parent=11 // pred_region
          %s324 = ssub.s32 64, 64
          %325 = vsyncadd [#allocation13], %s324
          %s327 = sshll.u32 [#allocation12], 4
          %s328 = int_to_ptr.vmem [resolvable:$true] %s327
          %330 = dma.hbm_to_vmem [thread:$0]  %s5, 64, %s328, [#allocation13]
        $region24: #{discriminator_block.2} parent=11 // pred_fallthru
          _
        // Predicated region
        $region25: #{discriminator_block.2} parent=11 // pred_check
          %p331 = pneg %p225
        $region26: #{discriminator_block.2} parent=11 // pred_check_branch
          %333 = sbr.rel (%p331) target = $region28
        $region27: #{discriminator_block.2} parent=11 // pred_region
          %s335 = ssub.s32 16, 16
          %336 = vsyncadd [#allocation13], %s335
          %s338 = sshll.u32 [#allocation14], 4
          %s339 = int_to_ptr.vmem [resolvable:$true] %s338
          %341 = dma.hbm_to_vmem [thread:$0]  %s6, 16, %s339, [#allocation13]
        $region28: #{discriminator_block.2} parent=11 // pred_fallthru
          _
      $region12: #{discriminator_block.2} parent=5 // pred_fallthru
        _
      %p342 = scmp.lt.s32.totalorder %s29, 4
      // Predicated region
      $region29: #{discriminator_block.2} parent=5 // pred_check
        %p343 = pneg %p342
      $region30: #{discriminator_block.2} parent=5 // pred_check_branch
        %345 = sbr.rel (%p343) target = $region32
      $region31: #{discriminator_block.2} parent=5 // pred_region
        // Predicated region
        $region33: #{discriminator_block.2} parent=31 // pred_check
          %p346 = pneg %p71
        $region34: #{discriminator_block.2} parent=31 // pred_check_branch
          %348 = sbr.rel (%p346) target = $region36
        $region35: #{discriminator_block.2} parent=31 // pred_region
          %s349 = sand.u32 %s61, 1
          %s350 = scalar_lea.sflag [#allocation4], %s349
          %s351 = sand.u32 %s61, 1
          %s352 = smul.addr %s351, 16
          %s353 = scalar_lea.vmem [#allocation3], %s352
          %s354 = smul.u32 %s37, 8
          %s355 = ssub.s32 %s354, 1
          %p356 = scmp.gt.s32.totalorder %s355, 0
          %s357 = scalar_select %p356, %s355, 0
          %s359 = ssub.s32 256, 256
          %360 = vsyncadd %s350, %s359
          %s361 = smul.addr %s357, 2
          %s362 = smul.addr %s36, 32
          %s363 = sadd.s32 %s361, %s362
          %s364 = smul.addr %s363, 128
          %s365 = scalar_lea.hbm %s0, %s364
          %s366 = sshll.u32 %s353, 4
          %s367 = int_to_ptr.vmem [resolvable:$true] %s366
          %372 = dma.hbm_to_vmem [thread:$0]  %s365, 256, %s367, %s350, 128, 128, 8
        $region36: #{discriminator_block.2} parent=31 // pred_fallthru
          _
        // Predicated region
        $region37: #{discriminator_block.2} parent=31 // pred_check
          %p373 = pneg %p99
        $region38: #{discriminator_block.2} parent=31 // pred_check_branch
          %375 = sbr.rel (%p373) target = $region40
        $region39: #{discriminator_block.2} parent=31 // pred_region
          %s376 = sand.u32 %s29, 1
          %s377 = scalar_lea.sflag [#allocation7], %s376
          %s378 = sand.u32 %s89, 1
          %s379 = smul.addr %s378, 128
          %s380 = scalar_lea.vmem [#allocation6], %s379
          %s381 = smul.u32 8, %s37
          %s383 = ssub.s32 2048, 2048
          %384 = vsyncadd %s377, %s383
          %s385 = smul.addr %s381, 2
          %s386 = smul.addr %s36, 32
          %s387 = sadd.s32 %s385, %s386
          %s388 = smul.addr %s387, 128
          %s389 = scalar_lea.hbm %s1, %s388
          %s390 = sshll.u32 %s380, 4
          %s391 = int_to_ptr.vmem [resolvable:$true] %s390
          %396 = dma.hbm_to_vmem [thread:$0]  %s389, 2048, %s391, %s377, 128, 128, 8
        $region40: #{discriminator_block.2} parent=31 // pred_fallthru
          _
        // Predicated region
        $region41: #{discriminator_block.2} parent=31 // pred_check
          %p397 = pneg %p135
        $region42: #{discriminator_block.2} parent=31 // pred_check_branch
          %399 = sbr.rel (%p397) target = $region44
        $region43: #{discriminator_block.2} parent=31 // pred_region
          %s400 = sand.u32 %s29, 1
          %s401 = scalar_lea.sflag [#allocation7], %s400
          %s402 = sand.u32 %s125, 1
          %s403 = smul.addr %s402, 16
          %s404 = scalar_lea.vmem [#allocation8], %s403
          %s405 = sadd.s32 %s37, 1
          %s406 = smul.u32 %s405, 8
          %p407 = scmp.lt.s32.totalorder %s406, 15
          %s408 = scalar_select %p407, %s406, 15
          %s410 = ssub.s32 256, 256
          %411 = vsyncadd %s401, %s410
          %s412 = smul.addr %s408, 2
          %s413 = smul.addr %s36, 32
          %s414 = sadd.s32 %s412, %s413
          %s415 = smul.addr %s414, 128
          %s416 = scalar_lea.hbm %s2, %s415
          %s417 = sshll.u32 %s404, 4
          %s418 = int_to_ptr.vmem [resolvable:$true] %s417
          %423 = dma.hbm_to_vmem [thread:$0]  %s416, 256, %s418, %s401, 128, 128, 8
        $region44: #{discriminator_block.2} parent=31 // pred_fallthru
          _
      $region32: #{discriminator_block.2} parent=5 // pred_fallthru
        _
      %p424 = scmp.le.s32.totalorder 1, %s29
      %p425 = scmp.lt.s32.totalorder %s29, 5
      %p426 = pnand %p424, %p425
      %p427 = pneg %p426
      // Predicated region
      $region45: #{discriminator_block.2} parent=5 // pred_check
        _
      $region46: #{discriminator_block.2} parent=5 // pred_check_branch
        %429 = sbr.rel (%p426) target = $region48
      $region47: #{discriminator_block.2} parent=5 // pred_region
        %s430 = ssub.s32 %s29, 1
        %s431 = sand.u32 %s64, 1
        %s432 = scalar_lea.sflag [#allocation4], %s431
        %s433 = sand.u32 %s64, 1
        %s434 = smul.addr %s433, 16
        %s435 = scalar_lea.vmem [#allocation3], %s434
        // Predicated region
        $region49: #{discriminator_block.2} parent=47 // pred_check
          %p436 = pneg %p77
        $region50: #{discriminator_block.2} parent=47 // pred_check_branch
          %438 = sbr.rel (%p436) target = $region52
        $region51: #{discriminator_block.2} parent=47 // pred_region
          %439 = dma.done %s432, 256
        $region52: #{discriminator_block.2} parent=47 // pred_fallthru
          _
        %s440 = sand.u32 %s34, 1
        %s441 = scalar_lea.sflag [#allocation7], %s440
        %s442 = sand.u32 %s92, 1
        %s443 = smul.addr %s442, 128
        %s444 = scalar_lea.vmem [#allocation6], %s443
        // Predicated region
        $region53: #{discriminator_block.2} parent=47 // pred_check
          %p445 = pneg %p105
        $region54: #{discriminator_block.2} parent=47 // pred_check_branch
          %447 = sbr.rel (%p445) target = $region56
        $region55: #{discriminator_block.2} parent=47 // pred_region
          %448 = dma.done %s441, 2048
        $region56: #{discriminator_block.2} parent=47 // pred_fallthru
          _
        %s449 = sand.u32 %s34, 1
        %s450 = scalar_lea.sflag [#allocation7], %s449
        %s451 = sand.u32 %s128, 1
        %s452 = smul.addr %s451, 16
        %s453 = scalar_lea.vmem [#allocation8], %s452
        // Predicated region
        $region57: #{discriminator_block.2} parent=47 // pred_check
          %p454 = pneg %p141
        $region58: #{discriminator_block.2} parent=47 // pred_check_branch
          %456 = sbr.rel (%p454) target = $region60
        $region59: #{discriminator_block.2} parent=47 // pred_region
          %457 = dma.done %s450, 256
        $region60: #{discriminator_block.2} parent=47 // pred_fallthru
          _
        // Predicated region
        $region61: #{discriminator_block.2} parent=47 // pred_check
          %p458 = pneg %p162
        $region62: #{discriminator_block.2} parent=47 // pred_check_branch
          %460 = sbr.rel (%p458) target = $region64
        $region63: #{discriminator_block.2} parent=47 // pred_region
          %461 = dma.done [#allocation10], 768
        $region64: #{discriminator_block.2} parent=47 // pred_fallthru
          _
        // Predicated region
        $region65: #{discriminator_block.2} parent=47 // pred_check
          %p462 = pneg %p183
        $region66: #{discriminator_block.2} parent=47 // pred_check_branch
          %464 = sbr.rel (%p462) target = $region68
        $region67: #{discriminator_block.2} parent=47 // pred_region
          %465 = dma.done [#allocation10], 16
        $region68: #{discriminator_block.2} parent=47 // pred_fallthru
          _
        // Predicated region
        $region69: #{discriminator_block.2} parent=47 // pred_check
          %p466 = pneg %p204
        $region70: #{discriminator_block.2} parent=47 // pred_check_branch
          %468 = sbr.rel (%p466) target = $region72
        $region71: #{discriminator_block.2} parent=47 // pred_region
          %469 = dma.done [#allocation13], 64
        $region72: #{discriminator_block.2} parent=47 // pred_fallthru
          _
        // Predicated region
        $region73: #{discriminator_block.2} parent=47 // pred_check
          %p470 = pneg %p225
        $region74: #{discriminator_block.2} parent=47 // pred_check_branch
          %472 = sbr.rel (%p470) target = $region76
        $region75: #{discriminator_block.2} parent=47 // pred_region
          %473 = dma.done [#allocation13], 16
        $region76: #{discriminator_block.2} parent=47 // pred_fallthru
          _
        %s474 = sand.u32 %s64, 1
        %s475 = scalar_lea.sflag [#allocation4], %s474
        %s476 = sand.u32 %s64, 1
        %s477 = smul.addr %s476, 16
        %s478 = scalar_lea.vmem [#allocation3], %s477
        %p479 = pneg %p77
        %p480 = pneg %p74
        %s481 = sand.u32 %s34, 1
        %s482 = scalar_lea.sflag [#allocation7], %s481
        %s483 = sand.u32 %s92, 1
        %s484 = smul.addr %s483, 128
        %s485 = scalar_lea.vmem [#allocation6], %s484
        %p486 = pneg %p105
        %p487 = pneg %p102
        %s488 = sand.u32 %s34, 1
        %s489 = scalar_lea.sflag [#allocation7], %s488
        %s490 = sand.u32 %s128, 1
        %s491 = smul.addr %s490, 16
        %s492 = scalar_lea.vmem [#allocation8], %s491
        %p493 = pneg %p141
        %p494 = pneg %p138
        %p495 = pneg %p162
        %p496 = pneg %p159
        %p497 = pneg %p183
        %p498 = pneg %p180
        %p499 = pneg %p204
        %p500 = pneg %p201
        %p501 = pneg %p225
        %p502 = pneg %p222
        %p503 = pneg %p253
        %p504 = pneg %p250
        %s505 = sand.u32 %s240, 1
        %s506 = scalar_lea.sflag [#allocation5], %s505
        %s507 = sand.u32 %s240, 1
        %s508 = smul.addr %s507, 128
        %s509 = scalar_lea.vmem [#allocation15], %s508
        %p510 = pneg %p281
        %p511 = pneg %p278
        %s512 = sand.u32 %s268, 1
        %s513 = scalar_lea.sflag [#allocation17], %s512
        %s514 = sand.u32 %s268, 1
        %s515 = smul.addr %s514, 32
        %s516 = scalar_lea.vmem [#allocation16], %s515
        %s517 = smul.u32 %s39, 8
        %s518 = ssub.s32 %s517, 1
        %p519 = scmp.gt.s32.totalorder %s518, 0
        %s520 = scalar_select %p519, %s518, 0
        %s521 = smul.u32 8, %s39
        %s522 = sadd.s32 %s39, 1
        %s523 = smul.u32 %s522, 8
        %p524 = scmp.lt.s32.totalorder %s523, 15
        %s525 = scalar_select %p524, %s523, 15
        %s526 = smul.u32 8, %s39
        %s527 = smul.u32 4, %s39
        %p528 = scmp.gt.s32.totalorder %s39, 0
        %s529 = scalar_select %p528, 1, 0
        %s530 = scvt.s32.f32 %s529
        %p531 = scmp.lt.s32.totalorder %s39, 1
        %s532 = scalar_select %p531, 1, 0
        %s533 = scvt.s32.f32 %s532
        %v534 = vld [vmem:[%s435] sm:$0xff]
        %v535 = vld [vmem:[%s435 + $0x8] sm:$0xff]
        %v536 = vld [vmem:[%s444] sm:$0xff]
        %v537 = vld [vmem:[%s444 + $0x8] sm:$0xff]
        %v538 = vld [vmem:[%s444 + $0x10] sm:$0xff]
        %v539 = vld [vmem:[%s444 + $0x18] sm:$0xff]
        %v540 = vld [vmem:[%s444 + $0x20] sm:$0xff]
        %v541 = vld [vmem:[%s444 + $0x28] sm:$0xff]
        %v542 = vld [vmem:[%s444 + $0x30] sm:$0xff]
        %v543 = vld [vmem:[%s444 + $0x38] sm:$0xff]
        %v544 = vld [vmem:[%s444 + $0x40] sm:$0xff]
        %v545 = vld [vmem:[%s444 + $0x48] sm:$0xff]
        %v546 = vld [vmem:[%s444 + $0x50] sm:$0xff]
        %v547 = vld [vmem:[%s444 + $0x58] sm:$0xff]
        %v548 = vld [vmem:[%s444 + $0x60] sm:$0xff]
        %v549 = vld [vmem:[%s444 + $0x68] sm:$0xff]
        %v550 = vld [vmem:[%s444 + $0x70] sm:$0xff]
        %v551 = vld [vmem:[%s444 + $0x78] sm:$0xff]
        %v552 = vld [vmem:[%s453] sm:$0xff]
        %v553 = vld [vmem:[%s453 + $0x8] sm:$0xff]
        %v554 = vstv %s530
        %v555 = vmul.f32 %v534, %v554
        %v556 = vmul.f32 %v535, %v554
        %vm559 = vcmask 1040384
        %v560 = vrot.slane %v555, 7
        %v561 = vrot.slane %v556, 7
        %v562 = vsel %vm559, %v560, %v561
        %v565 = vsel %vm559, 0.0, %v560
        %vm566 = vcmask 1046528
        %v567 = vrot.slane %v555, 1
        %v568 = vrot.slane %v556, 1
        %v569 = vsel %vm566, %v567, %v568
        %v571 = vsel %vm566, %v568, 0.0
        %572 = vrot.lane.b32.xlu0 %v555, 4
        %v573 = vpop.permute.xlu0 %572
        %574 = vrot.lane.b32.xlu0 %v556, 4
        %v575 = vpop.permute.xlu0 %574
        %579 = vrot.lane.b32.xlu0 %v569, 8
        %v580 = vpop.permute.xlu0 %579
        %581 = vrot.lane.b32.xlu0 %v571, 8
        %v582 = vpop.permute.xlu0 %581
        %vm585 = vcmask 31744
        %v586 = vsel %vm585, %v565, %v573
        %v587 = vsel %vm585, %v562, %v575
        %vm588 = vcmask 64512
        %v589 = vsel %vm588, %v586, %v580
        %v590 = vsel %vm588, %v587, %v582
        %vm591 = vcmask 97280
        %592 = vst.msk [vmem:[#allocation2] sm:$0xff] %vm591, %v589
        %593 = vst.msk [vmem:[#allocation2 + $0x8] sm:$0xff] %vm591, %v590
        %v610 = vrot.slane %v536, 7
        %v611 = vrot.slane %v537, 7
        %v612 = vsel %vm559, %v610, %v611
        %v613 = vrot.slane %v538, 7
        %v614 = vrot.slane %v539, 7
        %v615 = vsel %vm559, %v613, %v614
        %v616 = vrot.slane %v540, 7
        %v617 = vrot.slane %v541, 7
        %v618 = vsel %vm559, %v616, %v617
        %v619 = vrot.slane %v542, 7
        %v620 = vrot.slane %v543, 7
        %v621 = vsel %vm559, %v619, %v620
        %v622 = vrot.slane %v544, 7
        %v623 = vrot.slane %v545, 7
        %v624 = vsel %vm559, %v622, %v623
        %v625 = vrot.slane %v546, 7
        %v626 = vrot.slane %v547, 7
        %v627 = vsel %vm559, %v625, %v626
        %v628 = vrot.slane %v548, 7
        %v629 = vrot.slane %v549, 7
        %v630 = vsel %vm559, %v628, %v629
        %v631 = vrot.slane %v550, 7
        %v632 = vrot.slane %v551, 7
        %v633 = vsel %vm559, %v631, %v632
        %v650 = vsel %vm559, 0.0, %v610
        %v651 = vsel %vm559, 0.0, %v613
        %v652 = vsel %vm559, 0.0, %v616
        %v653 = vsel %vm559, 0.0, %v619
        %v654 = vsel %vm559, 0.0, %v622
        %v655 = vsel %vm559, 0.0, %v625
        %v656 = vsel %vm559, 0.0, %v628
        %v657 = vsel %vm559, 0.0, %v631
        %v658 = vrot.slane %v536, 1
        %v659 = vrot.slane %v537, 1
        %v660 = vsel %vm566, %v658, %v659
        %v661 = vrot.slane %v538, 1
        %v662 = vrot.slane %v539, 1
        %v663 = vsel %vm566, %v661, %v662
        %v664 = vrot.slane %v540, 1
        %v665 = vrot.slane %v541, 1
        %v666 = vsel %vm566, %v664, %v665
        %v667 = vrot.slane %v542, 1
        %v668 = vrot.slane %v543, 1
        %v669 = vsel %vm566, %v667, %v668
        %v670 = vrot.slane %v544, 1
        %v671 = vrot.slane %v545, 1
        %v672 = vsel %vm566, %v670, %v671
        %v673 = vrot.slane %v546, 1
        %v674 = vrot.slane %v547, 1
        %v675 = vsel %vm566, %v673, %v674
        %v676 = vrot.slane %v548, 1
        %v677 = vrot.slane %v549, 1
        %v678 = vsel %vm566, %v676, %v677
        %v679 = vrot.slane %v550, 1
        %v680 = vrot.slane %v551, 1
        %v681 = vsel %vm566, %v679, %v680
        %v690 = vsel %vm566, %v659, 0.0
        %v691 = vsel %vm566, %v662, 0.0
        %v692 = vsel %vm566, %v665, 0.0
        %v693 = vsel %vm566, %v668, 0.0
        %v694 = vsel %vm566, %v671, 0.0
        %v695 = vsel %vm566, %v674, 0.0
        %v696 = vsel %vm566, %v677, 0.0
        %v697 = vsel %vm566, %v680, 0.0
        %698 = vrot.lane.b32.xlu0 %v536, 4
        %v699 = vpop.permute.xlu0 %698
        %700 = vrot.lane.b32.xlu0 %v537, 4
        %v701 = vpop.permute.xlu0 %700
        %702 = vrot.lane.b32.xlu0 %v538, 4
        %v703 = vpop.permute.xlu0 %702
        %704 = vrot.lane.b32.xlu0 %v539, 4
        %v705 = vpop.permute.xlu0 %704
        %706 = vrot.lane.b32.xlu0 %v540, 4
        %v707 = vpop.permute.xlu0 %706
        %708 = vrot.lane.b32.xlu0 %v541, 4
        %v709 = vpop.permute.xlu0 %708
        %710 = vrot.lane.b32.xlu0 %v542, 4
        %v711 = vpop.permute.xlu0 %710
        %712 = vrot.lane.b32.xlu0 %v543, 4
        %v713 = vpop.permute.xlu0 %712
        %714 = vrot.lane.b32.xlu0 %v544, 4
        %v715 = vpop.permute.xlu0 %714
        %716 = vrot.lane.b32.xlu0 %v545, 4
        %v717 = vpop.permute.xlu0 %716
        %718 = vrot.lane.b32.xlu0 %v546, 4
        %v719 = vpop.permute.xlu0 %718
        %720 = vrot.lane.b32.xlu0 %v547, 4
        %v721 = vpop.permute.xlu0 %720
        %722 = vrot.lane.b32.xlu0 %v548, 4
        %v723 = vpop.permute.xlu0 %722
        %724 = vrot.lane.b32.xlu0 %v549, 4
        %v725 = vpop.permute.xlu0 %724
        %726 = vrot.lane.b32.xlu0 %v550, 4
        %v727 = vpop.permute.xlu0 %726
        %728 = vrot.lane.b32.xlu0 %v551, 4
        %v729 = vpop.permute.xlu0 %728
        %754 = vrot.lane.b32.xlu0 %v660, 8
        %v755 = vpop.permute.xlu0 %754
        %756 = vrot.lane.b32.xlu0 %v690, 8
        %v757 = vpop.permute.xlu0 %756
        %758 = vrot.lane.b32.xlu0 %v663, 8
        %v759 = vpop.permute.xlu0 %758
        %760 = vrot.lane.b32.xlu0 %v691, 8
        %v761 = vpop.permute.xlu0 %760
        %762 = vrot.lane.b32.xlu0 %v666, 8
        %v763 = vpop.permute.xlu0 %762
        %764 = vrot.lane.b32.xlu0 %v692, 8
        %v765 = vpop.permute.xlu0 %764
        %766 = vrot.lane.b32.xlu0 %v669, 8
        %v767 = vpop.permute.xlu0 %766
        %768 = vrot.lane.b32.xlu0 %v693, 8
        %v769 = vpop.permute.xlu0 %768
        %770 = vrot.lane.b32.xlu0 %v672, 8
        %v771 = vpop.permute.xlu0 %770
        %772 = vrot.lane.b32.xlu0 %v694, 8
        %v773 = vpop.permute.xlu0 %772
        %774 = vrot.lane.b32.xlu0 %v675, 8
        %v775 = vpop.permute.xlu0 %774
        %776 = vrot.lane.b32.xlu0 %v695, 8
        %v777 = vpop.permute.xlu0 %776
        %778 = vrot.lane.b32.xlu0 %v678, 8
        %v779 = vpop.permute.xlu0 %778
        %780 = vrot.lane.b32.xlu0 %v696, 8
        %v781 = vpop.permute.xlu0 %780
        %782 = vrot.lane.b32.xlu0 %v681, 8
        %v783 = vpop.permute.xlu0 %782
        %784 = vrot.lane.b32.xlu0 %v697, 8
        %v785 = vpop.permute.xlu0 %784
        %v802 = vsel %vm585, %v650, %v699
        %v803 = vsel %vm585, %v612, %v701
        %v804 = vsel %vm585, %v651, %v703
        %v805 = vsel %vm585, %v615, %v705
        %v806 = vsel %vm585, %v652, %v707
        %v807 = vsel %vm585, %v618, %v709
        %v808 = vsel %vm585, %v653, %v711
        %v809 = vsel %vm585, %v621, %v713
        %v810 = vsel %vm585, %v654, %v715
        %v811 = vsel %vm585, %v624, %v717
        %v812 = vsel %vm585, %v655, %v719
        %v813 = vsel %vm585, %v627, %v721
        %v814 = vsel %vm585, %v656, %v723
        %v815 = vsel %vm585, %v630, %v725
        %v816 = vsel %vm585, %v657, %v727
        %v817 = vsel %vm585, %v633, %v729
        %v818 = vsel %vm588, %v802, %v755
        %v819 = vsel %vm588, %v803, %v757
        %v820 = vsel %vm588, %v804, %v759
        %v821 = vsel %vm588, %v805, %v761
        %v822 = vsel %vm588, %v806, %v763
        %v823 = vsel %vm588, %v807, %v765
        %v824 = vsel %vm588, %v808, %v767
        %v825 = vsel %vm588, %v809, %v769
        %v826 = vsel %vm588, %v810, %v771
        %v827 = vsel %vm588, %v811, %v773
        %v828 = vsel %vm588, %v812, %v775
        %v829 = vsel %vm588, %v813, %v777
        %v830 = vsel %vm588, %v814, %v779
        %v831 = vsel %vm588, %v815, %v781
        %v832 = vsel %vm588, %v816, %v783
        %v833 = vsel %vm588, %v817, %v785
        %s834 = scalar_lea.vmem [#allocation2], 16
        %835 = vst.msk [vmem:[%s834] sm:$0xff] %vm591, %v818
        %836 = vst.msk [vmem:[%s834 + $0x8] sm:$0xff] %vm591, %v819
        %837 = vst.msk [vmem:[%s834 + $0x10] sm:$0xff] %vm591, %v820
        %838 = vst.msk [vmem:[%s834 + $0x18] sm:$0xff] %vm591, %v821
        %839 = vst.msk [vmem:[%s834 + $0x20] sm:$0xff] %vm591, %v822
        %840 = vst.msk [vmem:[%s834 + $0x28] sm:$0xff] %vm591, %v823
        %841 = vst.msk [vmem:[%s834 + $0x30] sm:$0xff] %vm591, %v824
        %842 = vst.msk [vmem:[%s834 + $0x38] sm:$0xff] %vm591, %v825
        %843 = vst.msk [vmem:[%s834 + $0x40] sm:$0xff] %vm591, %v826
        %844 = vst.msk [vmem:[%s834 + $0x48] sm:$0xff] %vm591, %v827
        %845 = vst.msk [vmem:[%s834 + $0x50] sm:$0xff] %vm591, %v828
        %846 = vst.msk [vmem:[%s834 + $0x58] sm:$0xff] %vm591, %v829
        %847 = vst.msk [vmem:[%s834 + $0x60] sm:$0xff] %vm591, %v830
        %848 = vst.msk [vmem:[%s834 + $0x68] sm:$0xff] %vm591, %v831
        %849 = vst.msk [vmem:[%s834 + $0x70] sm:$0xff] %vm591, %v832
        %850 = vst.msk [vmem:[%s834 + $0x78] sm:$0xff] %vm591, %v833
        %v851 = vstv %s533
        %v852 = vmul.f32 %v552, %v851
        %v853 = vmul.f32 %v553, %v851
        %v856 = vrot.slane %v852, 7
        %v857 = vrot.slane %v853, 7
        %v858 = vsel %vm559, %v856, %v857
        %v861 = vsel %vm559, 0.0, %v856
        %v862 = vrot.slane %v852, 1
        %v863 = vrot.slane %v853, 1
        %v864 = vsel %vm566, %v862, %v863
        %v866 = vsel %vm566, %v863, 0.0
        %867 = vrot.lane.b32.xlu0 %v852, 4
        %v868 = vpop.permute.xlu0 %867
        %869 = vrot.lane.b32.xlu0 %v853, 4
        %v870 = vpop.permute.xlu0 %869
        %874 = vrot.lane.b32.xlu0 %v864, 8
        %v875 = vpop.permute.xlu0 %874
        %876 = vrot.lane.b32.xlu0 %v866, 8
        %v877 = vpop.permute.xlu0 %876
        %v880 = vsel %vm585, %v861, %v868
        %v881 = vsel %vm585, %v858, %v870
        %v882 = vsel %vm588, %v880, %v875
        %v883 = vsel %vm588, %v881, %v877
        %s884 = scalar_lea.vmem [#allocation2], 144
        %885 = vst.msk [vmem:[%s884] sm:$0xff] %vm591, %v882
        %886 = vst.msk [vmem:[%s884 + $0x8] sm:$0xff] %vm591, %v883
        %v887 = vld [vmem:[#allocation2] sm:$0xff]
        %v888 = vld [vmem:[#allocation2 + $0x8] sm:$0xff]
        %v889 = vld [vmem:[#allocation2 + $0x10] sm:$0xff]
        %v890 = vld [vmem:[#allocation2 + $0x18] sm:$0xff]
        %v891 = vld [vmem:[#allocation2 + $0x20] sm:$0xff]
        %v892 = vld [vmem:[#allocation2 + $0x28] sm:$0xff]
        %v893 = vld [vmem:[#allocation2 + $0x30] sm:$0xff]
        %v894 = vld [vmem:[#allocation2 + $0x38] sm:$0xff]
        %v895 = vld [vmem:[#allocation2 + $0x40] sm:$0xff]
        %v896 = vld [vmem:[#allocation2 + $0x48] sm:$0xff]
        %v897 = vld [vmem:[#allocation2 + $0x50] sm:$0xff]
        %v898 = vld [vmem:[#allocation2 + $0x58] sm:$0xff]
        %v899 = vld [vmem:[#allocation2 + $0x60] sm:$0xff]
        %v900 = vld [vmem:[#allocation2 + $0x68] sm:$0xff]
        %v901 = vld [vmem:[#allocation2 + $0x70] sm:$0xff]
        %v902 = vld [vmem:[#allocation2 + $0x78] sm:$0xff]
        %v903 = vld [vmem:[#allocation9] sm:$0xff]
        %v904 = vld [vmem:[#allocation9 + $0x8] sm:$0xf]
        %v905 = vld [vmem:[%s834] sm:$0xff]
        %v906 = vld [vmem:[%s834 + $0x8] sm:$0xff]
        %v907 = vld [vmem:[%s834 + $0x10] sm:$0xff]
        %v908 = vld [vmem:[%s834 + $0x18] sm:$0xff]
        %v909 = vld [vmem:[%s834 + $0x20] sm:$0xff]
        %v910 = vld [vmem:[%s834 + $0x28] sm:$0xff]
        %v911 = vld [vmem:[%s834 + $0x30] sm:$0xff]
        %v912 = vld [vmem:[%s834 + $0x38] sm:$0xff]
        %v913 = vld [vmem:[%s834 + $0x40] sm:$0xff]
        %v914 = vld [vmem:[%s834 + $0x48] sm:$0xff]
        %v915 = vld [vmem:[%s834 + $0x50] sm:$0xff]
        %v916 = vld [vmem:[%s834 + $0x58] sm:$0xff]
        %v917 = vld [vmem:[%s834 + $0x60] sm:$0xff]
        %v918 = vld [vmem:[%s834 + $0x68] sm:$0xff]
        %v919 = vld [vmem:[%s834 + $0x70] sm:$0xff]
        %v920 = vld [vmem:[%s834 + $0x78] sm:$0xff]
        %s921 = scalar_lea.vmem [#allocation9], 16
        %v922 = vld [vmem:[%s921] sm:$0xff]
        %v923 = vld [vmem:[%s921 + $0x8] sm:$0xf]
        %v925 = vsel %vm591, %v905, 0
        %v928 = vsel %vm591, %v906, 0
        %v931 = vsel %vm591, %v907, 0
        %v934 = vsel %vm591, %v908, 0
        %v937 = vsel %vm591, %v909, 0
        %v940 = vsel %vm591, %v910, 0
        %v943 = vsel %vm591, %v911, 0
        %v946 = vsel %vm591, %v912, 0
        %v949 = vsel %vm591, %v913, 0
        %v952 = vsel %vm591, %v914, 0
        %v955 = vsel %vm591, %v915, 0
        %v958 = vsel %vm591, %v916, 0
        %v961 = vsel %vm591, %v917, 0
        %v964 = vsel %vm591, %v918, 0
        %v967 = vsel %vm591, %v919, 0
        %v970 = vsel %vm591, %v920, 0
        %vm972 = vcmask 1043456
        %v974 = vsel %vm972, %v923, 0
        %976 = vmatprep.subr.mxu0 0.0
        %977 = vmatpush1.msra.mxu0 %v922
        %978 = vmatprep.subr.mxu0 0.0
        %979 = vmatpush1.msra.mxu0 %v974
        %980 = vmatprep.subr.mxu0 0.0
        %981 = vmatpush1.msra.mxu0 0.0
        %982 = vmatprep.subr.mxu0 0.0
        %983 = vmatpush1.msra.mxu0 0.0
        %984 = vmatprep.subr.mxu0 0.0
        %985 = vmatpush1.msra.mxu0 0.0
        %986 = vmatprep.subr.mxu0 0.0
        %987 = vmatpush1.msra.mxu0 0.0
        %988 = vmatprep.subr.mxu0 0.0
        %989 = vmatpush1.msra.mxu0 0.0
        %990 = vmatprep.subr.mxu0 0.0
        %991 = vmatpush1.msra.mxu0 0.0
        %992 = vmatprep.subr.mxu0 0.0
        %993 = vmatpush1.msra.mxu0 0.0
        %994 = vmatprep.subr.mxu0 0.0
        %995 = vmatpush1.msra.mxu0 0.0
        %996 = vmatprep.subr.mxu0 0.0
        %997 = vmatpush1.msra.mxu0 0.0
        %998 = vmatprep.subr.mxu0 0.0
        %999 = vmatpush1.msra.mxu0 0.0
        %1000 = vmatprep.subr.mxu0 0.0
        %1001 = vmatpush1.msra.mxu0 0.0
        %1002 = vmatprep.subr.mxu0 0.0
        %1003 = vmatpush1.msra.mxu0 0.0
        %1004 = vmatprep.subr.mxu0 0.0
        %1005 = vmatpush1.msra.mxu0 0.0
        %1006 = vmatprep.subr.mxu0 0.0
        %1007 = vmatpush1.msra.mxu0 0.0
        %1008 = vmatprep.subr.mxu0 0.0
        %1009 = vmatpush1.msra.mxu0 0.0
        %1010 = vmatprep.subr.mxu0 0.0
        %1011 = vmatpush1.msra.mxu0 0.0
        %1012 = vmatprep.subr.mxu0 0.0
        %1013 = vmatpush1.msra.mxu0 0.0
        %1014 = vmatprep.subr.mxu0 0.0
        %1015 = vmatpush1.msra.mxu0 0.0
        %1016 = vmatprep.subr.mxu0 0.0
        %1017 = vmatpush1.msra.mxu0 0.0
        %1018 = vmatprep.subr.mxu0 0.0
        %1019 = vmatpush1.msra.mxu0 0.0
        %1020 = vmatprep.subr.mxu0 0.0
        %1021 = vmatpush1.msra.mxu0 0.0
        %1022 = vmatprep.subr.mxu0 0.0
        %1023 = vmatpush1.msra.mxu0 0.0
        %1024 = vmatprep.subr.mxu0 0.0
        %1025 = vmatpush1.msra.mxu0 0.0
        %1026 = vmatprep.subr.mxu0 0.0
        %1027 = vmatpush1.msra.mxu0 0.0
        %1028 = vmatprep.subr.mxu0 0.0
        %1029 = vmatpush1.msra.mxu0 0.0
        %1030 = vmatprep.subr.mxu0 0.0
        %1031 = vmatpush1.msra.mxu0 0.0
        %1032 = vmatprep.subr.mxu0 0.0
        %1033 = vmatpush1.msra.mxu0 0.0
        %1034 = vmatprep.subr.mxu0 0.0
        %1035 = vmatpush1.msra.mxu0 0.0
        %1036 = vmatprep.subr.mxu0 0.0
        %1037 = vmatpush1.msra.mxu0 0.0
        %1038 = vmatprep.subr.mxu0 0.0
        %1039 = vmatpush1.msra.mxu0 0.0
        %1040 = vmatprep.mubr.f32.mxu0 0.0
        %1041 = vmatmul.mubr.f32.gmra.mrb[0].mxu0 %v925
        %v1042 = vpop.f32.mrb[0].mxu0
        %v1043 = vadd.f32 0.0, %v1042
        %v1044 = vpop.f32.mrb[0].mxu0
        %1045 = vmatprep.mubr.f32.mxu0 0.0
        %1046 = vmatmul.mubr.f32.gmra.mrb[0].mxu0 %v928
        %v1047 = vpop.f32.mrb[0].mxu0
        %v1048 = vadd.f32 0.0, %v1047
        %v1049 = vpop.f32.mrb[0].mxu0
        %1050 = vmatprep.mubr.f32.mxu0 0.0
        %1051 = vmatmul.mubr.f32.gmra.mrb[0].mxu0 %v931
        %v1052 = vpop.f32.mrb[0].mxu0
        %v1053 = vadd.f32 0.0, %v1052
        %v1054 = vpop.f32.mrb[0].mxu0
        %1055 = vmatprep.mubr.f32.mxu0 0.0
        %1056 = vmatmul.mubr.f32.gmra.mrb[0].mxu0 %v934
        %v1057 = vpop.f32.mrb[0].mxu0
        %v1058 = vadd.f32 0.0, %v1057
        %v1059 = vpop.f32.mrb[0].mxu0
        %1060 = vmatprep.mubr.f32.mxu0 0.0
        %1061 = vmatmul.mubr.f32.gmra.mrb[0].mxu0 %v937
        %v1062 = vpop.f32.mrb[0].mxu0
        %v1063 = vadd.f32 0.0, %v1062
        %v1064 = vpop.f32.mrb[0].mxu0
        %1065 = vmatprep.mubr.f32.mxu0 0.0
        %1066 = vmatmul.mubr.f32.gmra.mrb[0].mxu0 %v940
        %v1067 = vpop.f32.mrb[0].mxu0
        %v1068 = vadd.f32 0.0, %v1067
        %v1069 = vpop.f32.mrb[0].mxu0
        %1070 = vmatprep.mubr.f32.mxu0 0.0
        %1071 = vmatmul.mubr.f32.gmra.mrb[0].mxu0 %v943
        %v1072 = vpop.f32.mrb[0].mxu0
        %v1073 = vadd.f32 0.0, %v1072
        %v1074 = vpop.f32.mrb[0].mxu0
        %1075 = vmatprep.mubr.f32.mxu0 0.0
        %1076 = vmatmul.mubr.f32.gmra.mrb[0].mxu0 %v946
        %v1077 = vpop.f32.mrb[0].mxu0
        %v1078 = vadd.f32 0.0, %v1077
        %v1079 = vpop.f32.mrb[0].mxu0
        %1080 = vmatprep.mubr.f32.mxu0 0.0
        %1081 = vmatmul.mubr.f32.gmra.mrb[0].mxu0 %v949
        %v1082 = vpop.f32.mrb[0].mxu0
        %v1083 = vadd.f32 0.0, %v1082
        %v1084 = vpop.f32.mrb[0].mxu0
        %1085 = vmatprep.mubr.f32.mxu0 0.0
        %1086 = vmatmul.mubr.f32.gmra.mrb[0].mxu0 %v952
        %v1087 = vpop.f32.mrb[0].mxu0
        %v1088 = vadd.f32 0.0, %v1087
        %v1089 = vpop.f32.mrb[0].mxu0
        %1090 = vmatprep.mubr.f32.mxu0 0.0
        %1091 = vmatmul.mubr.f32.gmra.mrb[0].mxu0 %v955
        %v1092 = vpop.f32.mrb[0].mxu0
        %v1093 = vadd.f32 0.0, %v1092
        %v1094 = vpop.f32.mrb[0].mxu0
        %1095 = vmatprep.mubr.f32.mxu0 0.0
        %1096 = vmatmul.mubr.f32.gmra.mrb[0].mxu0 %v958
        %v1097 = vpop.f32.mrb[0].mxu0
        %v1098 = vadd.f32 0.0, %v1097
        %v1099 = vpop.f32.mrb[0].mxu0
        %1100 = vmatprep.mubr.f32.mxu0 0.0
        %1101 = vmatmul.mubr.f32.gmra.mrb[0].mxu0 %v961
        %v1102 = vpop.f32.mrb[0].mxu0
        %v1103 = vadd.f32 0.0, %v1102
        %v1104 = vpop.f32.mrb[0].mxu0
        %1105 = vmatprep.mubr.f32.mxu0 0.0
        %1106 = vmatmul.mubr.f32.gmra.mrb[0].mxu0 %v964
        %v1107 = vpop.f32.mrb[0].mxu0
        %v1108 = vadd.f32 0.0, %v1107
        %v1109 = vpop.f32.mrb[0].mxu0
        %1110 = vmatprep.mubr.f32.mxu0 0.0
        %1111 = vmatmul.mubr.f32.gmra.mrb[0].mxu0 %v967
        %v1112 = vpop.f32.mrb[0].mxu0
        %v1113 = vadd.f32 0.0, %v1112
        %v1114 = vpop.f32.mrb[0].mxu0
        %1115 = vmatprep.mubr.f32.mxu0 0.0
        %1116 = vmatmul.mubr.f32.gmra.mrb[0].mxu0 %v970
        %v1117 = vpop.f32.mrb[0].mxu0
        %v1118 = vadd.f32 0.0, %v1117
        %v1119 = vpop.f32.mrb[0].mxu0
        %1120 = vdwg.mxu0
        %v1122 = vsel %vm591, %v887, 0
        %v1125 = vsel %vm591, %v888, 0
        %v1128 = vsel %vm591, %v889, 0
        %v1131 = vsel %vm591, %v890, 0
        %v1134 = vsel %vm591, %v891, 0
        %v1137 = vsel %vm591, %v892, 0
        %v1140 = vsel %vm591, %v893, 0
        %v1143 = vsel %vm591, %v894, 0
        %v1146 = vsel %vm591, %v895, 0
        %v1149 = vsel %vm591, %v896, 0
        %v1152 = vsel %vm591, %v897, 0
        %v1155 = vsel %vm591, %v898, 0
        %v1158 = vsel %vm591, %v899, 0
        %v1161 = vsel %vm591, %v900, 0
        %v1164 = vsel %vm591, %v901, 0
        %v1167 = vsel %vm591, %v902, 0
        %v1170 = vsel %vm972, %v904, 0
        %1172 = vmatprep.subr.mxu0 0.0
        %1173 = vmatpush1.msra.mxu0 %v903
        %1174 = vmatprep.subr.mxu0 0.0
        %1175 = vmatpush1.msra.mxu0 %v1170
        %1176 = vmatprep.subr.mxu0 0.0
        %1177 = vmatpush1.msra.mxu0 0.0
        %1178 = vmatprep.subr.mxu0 0.0
        %1179 = vmatpush1.msra.mxu0 0.0
        %1180 = vmatprep.subr.mxu0 0.0
        %1181 = vmatpush1.msra.mxu0 0.0
        %1182 = vmatprep.subr.mxu0 0.0
        %1183 = vmatpush1.msra.mxu0 0.0
        %1184 = vmatprep.subr.mxu0 0.0
        %1185 = vmatpush1.msra.mxu0 0.0
        %1186 = vmatprep.subr.mxu0 0.0
        %1187 = vmatpush1.msra.mxu0 0.0
        %1188 = vmatprep.subr.mxu0 0.0
        %1189 = vmatpush1.msra.mxu0 0.0
        %1190 = vmatprep.subr.mxu0 0.0
        %1191 = vmatpush1.msra.mxu0 0.0
        %1192 = vmatprep.subr.mxu0 0.0
        %1193 = vmatpush1.msra.mxu0 0.0
        %1194 = vmatprep.subr.mxu0 0.0
        %1195 = vmatpush1.msra.mxu0 0.0
        %1196 = vmatprep.subr.mxu0 0.0
        %1197 = vmatpush1.msra.mxu0 0.0
        %1198 = vmatprep.subr.mxu0 0.0
        %1199 = vmatpush1.msra.mxu0 0.0
        %1200 = vmatprep.subr.mxu0 0.0
        %1201 = vmatpush1.msra.mxu0 0.0
        %1202 = vmatprep.subr.mxu0 0.0
        %1203 = vmatpush1.msra.mxu0 0.0
        %1204 = vmatprep.subr.mxu0 0.0
        %1205 = vmatpush1.msra.mxu0 0.0
        %1206 = vmatprep.subr.mxu0 0.0
        %1207 = vmatpush1.msra.mxu0 0.0
        %1208 = vmatprep.subr.mxu0 0.0
        %1209 = vmatpush1.msra.mxu0 0.0
        %1210 = vmatprep.subr.mxu0 0.0
        %1211 = vmatpush1.msra.mxu0 0.0
        %1212 = vmatprep.subr.mxu0 0.0
        %1213 = vmatpush1.msra.mxu0 0.0
        %1214 = vmatprep.subr.mxu0 0.0
        %1215 = vmatpush1.msra.mxu0 0.0
        %1216 = vmatprep.subr.mxu0 0.0
        %1217 = vmatpush1.msra.mxu0 0.0
        %1218 = vmatprep.subr.mxu0 0.0
        %1219 = vmatpush1.msra.mxu0 0.0
        %1220 = vmatprep.subr.mxu0 0.0
        %1221 = vmatpush1.msra.mxu0 0.0
        %1222 = vmatprep.subr.mxu0 0.0
        %1223 = vmatpush1.msra.mxu0 0.0
        %1224 = vmatprep.subr.mxu0 0.0
        %1225 = vmatpush1.msra.mxu0 0.0
        %1226 = vmatprep.subr.mxu0 0.0
        %1227 = vmatpush1.msra.mxu0 0.0
        %1228 = vmatprep.subr.mxu0 0.0
        %1229 = vmatpush1.msra.mxu0 0.0
        %1230 = vmatprep.subr.mxu0 0.0
        %1231 = vmatpush1.msra.mxu0 0.0
        %1232 = vmatprep.subr.mxu0 0.0
        %1233 = vmatpush1.msra.mxu0 0.0
        %1234 = vmatprep.subr.mxu0 0.0
        %1235 = vmatpush1.msra.mxu0 0.0
        %1236 = vmatprep.mubr.f32.mxu0 0.0
        %1237 = vmatmul.mubr.f32.gmra.mrb[0].mxu0 %v1122
        %v1238 = vpop.f32.mrb[0].mxu0
        %v1239 = vadd.f32 %v1043, %v1238
        %v1240 = vpop.f32.mrb[0].mxu0
        %1241 = vmatprep.mubr.f32.mxu0 0.0
        %1242 = vmatmul.mubr.f32.gmra.mrb[0].mxu0 %v1125
        %v1243 = vpop.f32.mrb[0].mxu0
        %v1244 = vadd.f32 %v1048, %v1243
        %v1245 = vpop.f32.mrb[0].mxu0
        %1246 = vmatprep.mubr.f32.mxu0 0.0
        %1247 = vmatmul.mubr.f32.gmra.mrb[0].mxu0 %v1128
        %v1248 = vpop.f32.mrb[0].mxu0
        %v1249 = vadd.f32 %v1053, %v1248
        %v1250 = vpop.f32.mrb[0].mxu0
        %1251 = vmatprep.mubr.f32.mxu0 0.0
        %1252 = vmatmul.mubr.f32.gmra.mrb[0].mxu0 %v1131
        %v1253 = vpop.f32.mrb[0].mxu0
        %v1254 = vadd.f32 %v1058, %v1253
        %v1255 = vpop.f32.mrb[0].mxu0
        %1256 = vmatprep.mubr.f32.mxu0 0.0
        %1257 = vmatmul.mubr.f32.gmra.mrb[0].mxu0 %v1134
        %v1258 = vpop.f32.mrb[0].mxu0
        %v1259 = vadd.f32 %v1063, %v1258
        %v1260 = vpop.f32.mrb[0].mxu0
        %1261 = vmatprep.mubr.f32.mxu0 0.0
        %1262 = vmatmul.mubr.f32.gmra.mrb[0].mxu0 %v1137
        %v1263 = vpop.f32.mrb[0].mxu0
        %v1264 = vadd.f32 %v1068, %v1263
        %v1265 = vpop.f32.mrb[0].mxu0
        %1266 = vmatprep.mubr.f32.mxu0 0.0
        %1267 = vmatmul.mubr.f32.gmra.mrb[0].mxu0 %v1140
        %v1268 = vpop.f32.mrb[0].mxu0
        %v1269 = vadd.f32 %v1073, %v1268
        %v1270 = vpop.f32.mrb[0].mxu0
        %1271 = vmatprep.mubr.f32.mxu0 0.0
        %1272 = vmatmul.mubr.f32.gmra.mrb[0].mxu0 %v1143
        %v1273 = vpop.f32.mrb[0].mxu0
        %v1274 = vadd.f32 %v1078, %v1273
        %v1275 = vpop.f32.mrb[0].mxu0
        %1276 = vmatprep.mubr.f32.mxu0 0.0
        %1277 = vmatmul.mubr.f32.gmra.mrb[0].mxu0 %v1146
        %v1278 = vpop.f32.mrb[0].mxu0
        %v1279 = vadd.f32 %v1083, %v1278
        %v1280 = vpop.f32.mrb[0].mxu0
        %1281 = vmatprep.mubr.f32.mxu0 0.0
        %1282 = vmatmul.mubr.f32.gmra.mrb[0].mxu0 %v1149
        %v1283 = vpop.f32.mrb[0].mxu0
        %v1284 = vadd.f32 %v1088, %v1283
        %v1285 = vpop.f32.mrb[0].mxu0
        %1286 = vmatprep.mubr.f32.mxu0 0.0
        %1287 = vmatmul.mubr.f32.gmra.mrb[0].mxu0 %v1152
        %v1288 = vpop.f32.mrb[0].mxu0
        %v1289 = vadd.f32 %v1093, %v1288
        %v1290 = vpop.f32.mrb[0].mxu0
        %1291 = vmatprep.mubr.f32.mxu0 0.0
        %1292 = vmatmul.mubr.f32.gmra.mrb[0].mxu0 %v1155
        %v1293 = vpop.f32.mrb[0].mxu0
        %v1294 = vadd.f32 %v1098, %v1293
        %v1295 = vpop.f32.mrb[0].mxu0
        %1296 = vmatprep.mubr.f32.mxu0 0.0
        %1297 = vmatmul.mubr.f32.gmra.mrb[0].mxu0 %v1158
        %v1298 = vpop.f32.mrb[0].mxu0
        %v1299 = vadd.f32 %v1103, %v1298
        %v1300 = vpop.f32.mrb[0].mxu0
        %1301 = vmatprep.mubr.f32.mxu0 0.0
        %1302 = vmatmul.mubr.f32.gmra.mrb[0].mxu0 %v1161
        %v1303 = vpop.f32.mrb[0].mxu0
        %v1304 = vadd.f32 %v1108, %v1303
        %v1305 = vpop.f32.mrb[0].mxu0
        %1306 = vmatprep.mubr.f32.mxu0 0.0
        %1307 = vmatmul.mubr.f32.gmra.mrb[0].mxu0 %v1164
        %v1308 = vpop.f32.mrb[0].mxu0
        %v1309 = vadd.f32 %v1113, %v1308
        %v1310 = vpop.f32.mrb[0].mxu0
        %1311 = vmatprep.mubr.f32.mxu0 0.0
        %1312 = vmatmul.mubr.f32.gmra.mrb[0].mxu0 %v1167
        %v1313 = vpop.f32.mrb[0].mxu0
        %v1314 = vadd.f32 %v1118, %v1313
        %v1315 = vpop.f32.mrb[0].mxu0
        %1316 = vdwg.mxu0
        %s1317 = scalar_lea.vmem [#allocation2], 32
        %v1318 = vld [vmem:[%s1317] sm:$0xff]
        %v1319 = vld [vmem:[%s1317 + $0x8] sm:$0xff]
        %v1320 = vld [vmem:[%s1317 + $0x10] sm:$0xff]
        %v1321 = vld [vmem:[%s1317 + $0x18] sm:$0xff]
        %v1322 = vld [vmem:[%s1317 + $0x20] sm:$0xff]
        %v1323 = vld [vmem:[%s1317 + $0x28] sm:$0xff]
        %v1324 = vld [vmem:[%s1317 + $0x30] sm:$0xff]
        %v1325 = vld [vmem:[%s1317 + $0x38] sm:$0xff]
        %v1326 = vld [vmem:[%s1317 + $0x40] sm:$0xff]
        %v1327 = vld [vmem:[%s1317 + $0x48] sm:$0xff]
        %v1328 = vld [vmem:[%s1317 + $0x50] sm:$0xff]
        %v1329 = vld [vmem:[%s1317 + $0x58] sm:$0xff]
        %v1330 = vld [vmem:[%s1317 + $0x60] sm:$0xff]
        %v1331 = vld [vmem:[%s1317 + $0x68] sm:$0xff]
        %v1332 = vld [vmem:[%s1317 + $0x70] sm:$0xff]
        %v1333 = vld [vmem:[%s1317 + $0x78] sm:$0xff]
        %s1334 = scalar_lea.vmem [#allocation9], 32
        %v1335 = vld [vmem:[%s1334] sm:$0xff]
        %v1336 = vld [vmem:[%s1334 + $0x8] sm:$0xf]
        %v1338 = vsel %vm591, %v1318, 0
        %v1341 = vsel %vm591, %v1319, 0
        %v1344 = vsel %vm591, %v1320, 0
        %v1347 = vsel %vm591, %v1321, 0
        %v1350 = vsel %vm591, %v1322, 0
        %v1353 = vsel %vm591, %v1323, 0
        %v1356 = vsel %vm591, %v1324, 0
        %v1359 = vsel %vm591, %v1325, 0
        %v1362 = vsel %vm591, %v1326, 0
        %v1365 = vsel %vm591, %v1327, 0
        %v1368 = vsel %vm591, %v1328, 0
        %v1371 = vsel %vm591, %v1329, 0
        %v1374 = vsel %vm591, %v1330, 0
        %v1377 = vsel %vm591, %v1331, 0
        %v1380 = vsel %vm591, %v1332, 0
        %v1383 = vsel %vm591, %v1333, 0
        %v1386 = vsel %vm972, %v1336, 0
        %1388 = vmatprep.subr.mxu0 0.0
        %1389 = vmatpush1.msra.mxu0 %v1335
        %1390 = vmatprep.subr.mxu0 0.0
        %1391 = vmatpush1.msra.mxu0 %v1386
        %1392 = vmatprep.subr.mxu0 0.0
        %1393 = vmatpush1.msra.mxu0 0.0
        %1394 = vmatprep.subr.mxu0 0.0
        %1395 = vmatpush1.msra.mxu0 0.0
        %1396 = vmatprep.subr.mxu0 0.0
        %1397 = vmatpush1.msra.mxu0 0.0
        %1398 = vmatprep.subr.mxu0 0.0
        %1399 = vmatpush1.msra.mxu0 0.0
        %1400 = vmatprep.subr.mxu0 0.0
        %1401 = vmatpush1.msra.mxu0 0.0
        %1402 = vmatprep.subr.mxu0 0.0
        %1403 = vmatpush1.msra.mxu0 0.0
        %1404 = vmatprep.subr.mxu0 0.0
        %1405 = vmatpush1.msra.mxu0 0.0
        %1406 = vmatprep.subr.mxu0 0.0
        %1407 = vmatpush1.msra.mxu0 0.0
        %1408 = vmatprep.subr.mxu0 0.0
        %1409 = vmatpush1.msra.mxu0 0.0
        %1410 = vmatprep.subr.mxu0 0.0
        %1411 = vmatpush1.msra.mxu0 0.0
        %1412 = vmatprep.subr.mxu0 0.0
        %1413 = vmatpush1.msra.mxu0 0.0
        %1414 = vmatprep.subr.mxu0 0.0
        %1415 = vmatpush1.msra.mxu0 0.0
        %1416 = vmatprep.subr.mxu0 0.0
        %1417 = vmatpush1.msra.mxu0 0.0
        %1418 = vmatprep.subr.mxu0 0.0
        %1419 = vmatpush1.msra.mxu0 0.0
        %1420 = vmatprep.subr.mxu0 0.0
        %1421 = vmatpush1.msra.mxu0 0.0
        %1422 = vmatprep.subr.mxu0 0.0
        %1423 = vmatpush1.msra.mxu0 0.0
        %1424 = vmatprep.subr.mxu0 0.0
        %1425 = vmatpush1.msra.mxu0 0.0
        %1426 = vmatprep.subr.mxu0 0.0
        %1427 = vmatpush1.msra.mxu0 0.0
        %1428 = vmatprep.subr.mxu0 0.0
        %1429 = vmatpush1.msra.mxu0 0.0
        %1430 = vmatprep.subr.mxu0 0.0
        %1431 = vmatpush1.msra.mxu0 0.0
        %1432 = vmatprep.subr.mxu0 0.0
        %1433 = vmatpush1.msra.mxu0 0.0
        %1434 = vmatprep.subr.mxu0 0.0
        %1435 = vmatpush1.msra.mxu0 0.0
        %1436 = vmatprep.subr.mxu0 0.0
        %1437 = vmatpush1.msra.mxu0 0.0
        %1438 = vmatprep.subr.mxu0 0.0
        %1439 = vmatpush1.msra.mxu0 0.0
        %1440 = vmatprep.subr.mxu0 0.0
        %1441 = vmatpush1.msra.mxu0 0.0
        %1442 = vmatprep.subr.mxu0 0.0
        %1443 = vmatpush1.msra.mxu0 0.0
        %1444 = vmatprep.subr.mxu0 0.0
        %1445 = vmatpush1.msra.mxu0 0.0
        %1446 = vmatprep.subr.mxu0 0.0
        %1447 = vmatpush1.msra.mxu0 0.0
        %1448 = vmatprep.subr.mxu0 0.0
        %1449 = vmatpush1.msra.mxu0 0.0
        %1450 = vmatprep.subr.mxu0 0.0
        %1451 = vmatpush1.msra.mxu0 0.0
        %1452 = vmatprep.mubr.f32.mxu0 0.0
        %1453 = vmatmul.mubr.f32.gmra.mrb[0].mxu0 %v1338
        %v1454 = vpop.f32.mrb[0].mxu0
        %v1455 = vadd.f32 0.0, %v1454
        %v1456 = vpop.f32.mrb[0].mxu0
        %1457 = vmatprep.mubr.f32.mxu0 0.0
        %1458 = vmatmul.mubr.f32.gmra.mrb[0].mxu0 %v1341
        %v1459 = vpop.f32.mrb[0].mxu0
        %v1460 = vadd.f32 0.0, %v1459
        %v1461 = vpop.f32.mrb[0].mxu0
        %1462 = vmatprep.mubr.f32.mxu0 0.0
        %1463 = vmatmul.mubr.f32.gmra.mrb[0].mxu0 %v1344
        %v1464 = vpop.f32.mrb[0].mxu0
        %v1465 = vadd.f32 0.0, %v1464
        %v1466 = vpop.f32.mrb[0].mxu0
        %1467 = vmatprep.mubr.f32.mxu0 0.0
        %1468 = vmatmul.mubr.f32.gmra.mrb[0].mxu0 %v1347
        %v1469 = vpop.f32.mrb[0].mxu0
        %v1470 = vadd.f32 0.0, %v1469
        %v1471 = vpop.f32.mrb[0].mxu0
        %1472 = vmatprep.mubr.f32.mxu0 0.0
        %1473 = vmatmul.mubr.f32.gmra.mrb[0].mxu0 %v1350
        %v1474 = vpop.f32.mrb[0].mxu0
        %v1475 = vadd.f32 0.0, %v1474
        %v1476 = vpop.f32.mrb[0].mxu0
        %1477 = vmatprep.mubr.f32.mxu0 0.0
        %1478 = vmatmul.mubr.f32.gmra.mrb[0].mxu0 %v1353
        %v1479 = vpop.f32.mrb[0].mxu0
        %v1480 = vadd.f32 0.0, %v1479
        %v1481 = vpop.f32.mrb[0].mxu0
        %1482 = vmatprep.mubr.f32.mxu0 0.0
        %1483 = vmatmul.mubr.f32.gmra.mrb[0].mxu0 %v1356
        %v1484 = vpop.f32.mrb[0].mxu0
        %v1485 = vadd.f32 0.0, %v1484
        %v1486 = vpop.f32.mrb[0].mxu0
        %1487 = vmatprep.mubr.f32.mxu0 0.0
        %1488 = vmatmul.mubr.f32.gmra.mrb[0].mxu0 %v1359
        %v1489 = vpop.f32.mrb[0].mxu0
        %v1490 = vadd.f32 0.0, %v1489
        %v1491 = vpop.f32.mrb[0].mxu0
        %1492 = vmatprep.mubr.f32.mxu0 0.0
        %1493 = vmatmul.mubr.f32.gmra.mrb[0].mxu0 %v1362
        %v1494 = vpop.f32.mrb[0].mxu0
        %v1495 = vadd.f32 0.0, %v1494
        %v1496 = vpop.f32.mrb[0].mxu0
        %1497 = vmatprep.mubr.f32.mxu0 0.0
        %1498 = vmatmul.mubr.f32.gmra.mrb[0].mxu0 %v1365
        %v1499 = vpop.f32.mrb[0].mxu0
        %v1500 = vadd.f32 0.0, %v1499
        %v1501 = vpop.f32.mrb[0].mxu0
        %1502 = vmatprep.mubr.f32.mxu0 0.0
        %1503 = vmatmul.mubr.f32.gmra.mrb[0].mxu0 %v1368
        %v1504 = vpop.f32.mrb[0].mxu0
        %v1505 = vadd.f32 0.0, %v1504
        %v1506 = vpop.f32.mrb[0].mxu0
        %1507 = vmatprep.mubr.f32.mxu0 0.0
        %1508 = vmatmul.mubr.f32.gmra.mrb[0].mxu0 %v1371
        %v1509 = vpop.f32.mrb[0].mxu0
        %v1510 = vadd.f32 0.0, %v1509
        %v1511 = vpop.f32.mrb[0].mxu0
        %1512 = vmatprep.mubr.f32.mxu0 0.0
        %1513 = vmatmul.mubr.f32.gmra.mrb[0].mxu0 %v1374
        %v1514 = vpop.f32.mrb[0].mxu0
        %v1515 = vadd.f32 0.0, %v1514
        %v1516 = vpop.f32.mrb[0].mxu0
        %1517 = vmatprep.mubr.f32.mxu0 0.0
        %1518 = vmatmul.mubr.f32.gmra.mrb[0].mxu0 %v1377
        %v1519 = vpop.f32.mrb[0].mxu0
        %v1520 = vadd.f32 0.0, %v1519
        %v1521 = vpop.f32.mrb[0].mxu0
        %1522 = vmatprep.mubr.f32.mxu0 0.0
        %1523 = vmatmul.mubr.f32.gmra.mrb[0].mxu0 %v1380
        %v1524 = vpop.f32.mrb[0].mxu0
        %v1525 = vadd.f32 0.0, %v1524
        %v1526 = vpop.f32.mrb[0].mxu0
        %1527 = vmatprep.mubr.f32.mxu0 0.0
        %1528 = vmatmul.mubr.f32.gmra.mrb[0].mxu0 %v1383
        %v1529 = vpop.f32.mrb[0].mxu0
        %v1530 = vadd.f32 0.0, %v1529
        %v1531 = vpop.f32.mrb[0].mxu0
        %1532 = vdwg.mxu0
        %v1533 = vadd.f32 %v1239, %v1455
        %v1534 = vadd.f32 %v1244, %v1460
        %v1535 = vadd.f32 %v1249, %v1465
        %v1536 = vadd.f32 %v1254, %v1470
        %v1537 = vadd.f32 %v1259, %v1475
        %v1538 = vadd.f32 %v1264, %v1480
        %v1539 = vadd.f32 %v1269, %v1485
        %v1540 = vadd.f32 %v1274, %v1490
        %v1541 = vadd.f32 %v1279, %v1495
        %v1542 = vadd.f32 %v1284, %v1500
        %v1543 = vadd.f32 %v1289, %v1505
        %v1544 = vadd.f32 %v1294, %v1510
        %v1545 = vadd.f32 %v1299, %v1515
        %v1546 = vadd.f32 %v1304, %v1520
        %v1547 = vadd.f32 %v1309, %v1525
        %v1548 = vadd.f32 %v1314, %v1530
        %v1549 = vld [vmem:[#allocation11] sm:$0x1]
        %v1551 = vlaneseq
        %v1552 = vshrl.u32 %v1551, 7
        %v1553 = vsub.s32 0, %v1552
        %v1554 = vrot.slane %v1549, %v1553
        %v1556 = vadd.f32 %v1533, %v1554
        %v1557 = vadd.f32 %v1534, %v1554
        %v1558 = vadd.f32 %v1535, %v1554
        %v1559 = vadd.f32 %v1536, %v1554
        %v1560 = vadd.f32 %v1537, %v1554
        %v1561 = vadd.f32 %v1538, %v1554
        %v1562 = vadd.f32 %v1539, %v1554
        %v1563 = vadd.f32 %v1540, %v1554
        %v1564 = vadd.f32 %v1541, %v1554
        %v1565 = vadd.f32 %v1542, %v1554
        %v1566 = vadd.f32 %v1543, %v1554
        %v1567 = vadd.f32 %v1544, %v1554
        %v1568 = vadd.f32 %v1545, %v1554
        %v1569 = vadd.f32 %v1546, %v1554
        %v1570 = vadd.f32 %v1547, %v1554
        %v1571 = vadd.f32 %v1548, %v1554
        %v1572 = vmul.f32 %v1556, 0.2
        %v1573 = vmul.f32 %v1557, 0.2
        %v1574 = vmul.f32 %v1558, 0.2
        %v1575 = vmul.f32 %v1559, 0.2
        %v1576 = vmul.f32 %v1560, 0.2
        %v1577 = vmul.f32 %v1561, 0.2
        %v1578 = vmul.f32 %v1562, 0.2
        %v1579 = vmul.f32 %v1563, 0.2
        %v1580 = vmul.f32 %v1564, 0.2
        %v1581 = vmul.f32 %v1565, 0.2
        %v1582 = vmul.f32 %v1566, 0.2
        %v1583 = vmul.f32 %v1567, 0.2
        %v1584 = vmul.f32 %v1568, 0.2
        %v1585 = vmul.f32 %v1569, 0.2
        %v1586 = vmul.f32 %v1570, 0.2
        %v1587 = vmul.f32 %v1571, 0.2
        %v1588 = vmax.f32 %v1556, %v1572
        %v1589 = vmax.f32 %v1557, %v1573
        %v1590 = vmax.f32 %v1558, %v1574
        %v1591 = vmax.f32 %v1559, %v1575
        %v1592 = vmax.f32 %v1560, %v1576
        %v1593 = vmax.f32 %v1561, %v1577
        %v1594 = vmax.f32 %v1562, %v1578
        %v1595 = vmax.f32 %v1563, %v1579
        %v1596 = vmax.f32 %v1564, %v1580
        %v1597 = vmax.f32 %v1565, %v1581
        %v1598 = vmax.f32 %v1566, %v1582
        %v1599 = vmax.f32 %v1567, %v1583
        %v1600 = vmax.f32 %v1568, %v1584
        %v1601 = vmax.f32 %v1569, %v1585
        %v1602 = vmax.f32 %v1570, %v1586
        %v1603 = vmax.f32 %v1571, %v1587
        %1604 = vst.msk [vmem:[%s509] sm:$0xff] %vm585, %v1588
        %1605 = vst.msk [vmem:[%s509 + $0x8] sm:$0xff] %vm585, %v1589
        %1606 = vst.msk [vmem:[%s509 + $0x10] sm:$0xff] %vm585, %v1590
        %1607 = vst.msk [vmem:[%s509 + $0x18] sm:$0xff] %vm585, %v1591
        %1608 = vst.msk [vmem:[%s509 + $0x20] sm:$0xff] %vm585, %v1592
        %1609 = vst.msk [vmem:[%s509 + $0x28] sm:$0xff] %vm585, %v1593
        %1610 = vst.msk [vmem:[%s509 + $0x30] sm:$0xff] %vm585, %v1594
        %1611 = vst.msk [vmem:[%s509 + $0x38] sm:$0xff] %vm585, %v1595
        %1612 = vst.msk [vmem:[%s509 + $0x40] sm:$0xff] %vm585, %v1596
        %1613 = vst.msk [vmem:[%s509 + $0x48] sm:$0xff] %vm585, %v1597
        %1614 = vst.msk [vmem:[%s509 + $0x50] sm:$0xff] %vm585, %v1598
        %1615 = vst.msk [vmem:[%s509 + $0x58] sm:$0xff] %vm585, %v1599
        %1616 = vst.msk [vmem:[%s509 + $0x60] sm:$0xff] %vm585, %v1600
        %1617 = vst.msk [vmem:[%s509 + $0x68] sm:$0xff] %vm585, %v1601
        %1618 = vst.msk [vmem:[%s509 + $0x70] sm:$0xff] %vm585, %v1602
        %1619 = vst.msk [vmem:[%s509 + $0x78] sm:$0xff] %vm585, %v1603
        %v1620 = vld [vmem:[%s435] ss:$2 sm:$0xff]
        %s1621 = scalar_lea.vmem %s435, 1 [#allocation3]
        %v1622 = vld [vmem:[%s1621] ss:$2 sm:$0xff]
        %v1624 = vrot.slane %v1622, 7
        %v1626 = vsel %vm559, %v1620, %v1624
        %v1628 = vrot.slane %v1620, 1
        %v1630 = vsel %vm566, %v1628, %v1622
        %v1631 = vmul.f32 %v1620, 3.0
        %v1632 = vadd.f32 %v1626, %v1631
        %v1633 = vmul.f32 %v1622, 3.0
        %v1634 = vadd.f32 %v1632, %v1633
        %v1635 = vadd.f32 %v1634, %v1630
        %v1636 = vmul.f32 %v1635, 0.125
        %v1637 = vld [vmem:[%s444] ss:$2 sm:$0xff]
        %s1638 = scalar_lea.vmem %s444, 16 [#allocation6]
        %v1639 = vld [vmem:[%s1638] ss:$2 sm:$0xff]
        %s1640 = scalar_lea.vmem %s444, 32 [#allocation6]
        %v1641 = vld [vmem:[%s1640] ss:$2 sm:$0xff]
        %s1642 = scalar_lea.vmem %s444, 48 [#allocation6]
        %v1643 = vld [vmem:[%s1642] ss:$2 sm:$0xff]
        %s1644 = scalar_lea.vmem %s444, 64 [#allocation6]
        %v1645 = vld [vmem:[%s1644] ss:$2 sm:$0xff]
        %s1646 = scalar_lea.vmem %s444, 80 [#allocation6]
        %v1647 = vld [vmem:[%s1646] ss:$2 sm:$0xff]
        %s1648 = scalar_lea.vmem %s444, 96 [#allocation6]
        %v1649 = vld [vmem:[%s1648] ss:$2 sm:$0xff]
        %s1650 = scalar_lea.vmem %s444, 112 [#allocation6]
        %v1651 = vld [vmem:[%s1650] ss:$2 sm:$0xff]
        %s1652 = scalar_lea.vmem %s444, 1 [#allocation6]
        %v1653 = vld [vmem:[%s1652] ss:$2 sm:$0xff]
        %s1654 = scalar_lea.vmem %s444, 17 [#allocation6]
        %v1655 = vld [vmem:[%s1654] ss:$2 sm:$0xff]
        %s1656 = scalar_lea.vmem %s444, 33 [#allocation6]
        %v1657 = vld [vmem:[%s1656] ss:$2 sm:$0xff]
        %s1658 = scalar_lea.vmem %s444, 49 [#allocation6]
        %v1659 = vld [vmem:[%s1658] ss:$2 sm:$0xff]
        %s1660 = scalar_lea.vmem %s444, 65 [#allocation6]
        %v1661 = vld [vmem:[%s1660] ss:$2 sm:$0xff]
        %s1662 = scalar_lea.vmem %s444, 81 [#allocation6]
        %v1663 = vld [vmem:[%s1662] ss:$2 sm:$0xff]
        %s1664 = scalar_lea.vmem %s444, 97 [#allocation6]
        %v1665 = vld [vmem:[%s1664] ss:$2 sm:$0xff]
        %s1666 = scalar_lea.vmem %s444, 113 [#allocation6]
        %v1667 = vld [vmem:[%s1666] ss:$2 sm:$0xff]
        %v1676 = vrot.slane %v1653, 7
        %v1677 = vrot.slane %v1655, 7
        %v1678 = vrot.slane %v1657, 7
        %v1679 = vrot.slane %v1659, 7
        %v1680 = vrot.slane %v1661, 7
        %v1681 = vrot.slane %v1663, 7
        %v1682 = vrot.slane %v1665, 7
        %v1683 = vrot.slane %v1667, 7
        %v1692 = vsel %vm559, %v1637, %v1676
        %v1693 = vsel %vm559, %v1639, %v1677
        %v1694 = vsel %vm559, %v1641, %v1678
        %v1695 = vsel %vm559, %v1643, %v1679
        %v1696 = vsel %vm559, %v1645, %v1680
        %v1697 = vsel %vm559, %v1647, %v1681
        %v1698 = vsel %vm559, %v1649, %v1682
        %v1699 = vsel %vm559, %v1651, %v1683
        %v1708 = vrot.slane %v1637, 1
        %v1709 = vrot.slane %v1639, 1
        %v1710 = vrot.slane %v1641, 1
        %v1711 = vrot.slane %v1643, 1
        %v1712 = vrot.slane %v1645, 1
        %v1713 = vrot.slane %v1647, 1
        %v1714 = vrot.slane %v1649, 1
        %v1715 = vrot.slane %v1651, 1
        %v1724 = vsel %vm566, %v1708, %v1653
        %v1725 = vsel %vm566, %v1709, %v1655
        %v1726 = vsel %vm566, %v1710, %v1657
        %v1727 = vsel %vm566, %v1711, %v1659
        %v1728 = vsel %vm566, %v1712, %v1661
        %v1729 = vsel %vm566, %v1713, %v1663
        %v1730 = vsel %vm566, %v1714, %v1665
        %v1731 = vsel %vm566, %v1715, %v1667
        %v1732 = vmul.f32 %v1637, 3.0
        %v1733 = vmul.f32 %v1639, 3.0
        %v1734 = vmul.f32 %v1641, 3.0
        %v1735 = vmul.f32 %v1643, 3.0
        %v1736 = vmul.f32 %v1645, 3.0
        %v1737 = vmul.f32 %v1647, 3.0
        %v1738 = vmul.f32 %v1649, 3.0
        %v1739 = vmul.f32 %v1651, 3.0
        %v1740 = vadd.f32 %v1692, %v1732
        %v1741 = vadd.f32 %v1693, %v1733
        %v1742 = vadd.f32 %v1694, %v1734
        %v1743 = vadd.f32 %v1695, %v1735
        %v1744 = vadd.f32 %v1696, %v1736
        %v1745 = vadd.f32 %v1697, %v1737
        %v1746 = vadd.f32 %v1698, %v1738
        %v1747 = vadd.f32 %v1699, %v1739
        %v1748 = vmul.f32 %v1653, 3.0
        %v1749 = vmul.f32 %v1655, 3.0
        %v1750 = vmul.f32 %v1657, 3.0
        %v1751 = vmul.f32 %v1659, 3.0
        %v1752 = vmul.f32 %v1661, 3.0
        %v1753 = vmul.f32 %v1663, 3.0
        %v1754 = vmul.f32 %v1665, 3.0
        %v1755 = vmul.f32 %v1667, 3.0
        %v1756 = vadd.f32 %v1740, %v1748
        %v1757 = vadd.f32 %v1741, %v1749
        %v1758 = vadd.f32 %v1742, %v1750
        %v1759 = vadd.f32 %v1743, %v1751
        %v1760 = vadd.f32 %v1744, %v1752
        %v1761 = vadd.f32 %v1745, %v1753
        %v1762 = vadd.f32 %v1746, %v1754
        %v1763 = vadd.f32 %v1747, %v1755
        %v1764 = vadd.f32 %v1756, %v1724
        %v1765 = vadd.f32 %v1757, %v1725
        %v1766 = vadd.f32 %v1758, %v1726
        %v1767 = vadd.f32 %v1759, %v1727
        %v1768 = vadd.f32 %v1760, %v1728
        %v1769 = vadd.f32 %v1761, %v1729
        %v1770 = vadd.f32 %v1762, %v1730
        %v1771 = vadd.f32 %v1763, %v1731
        %v1772 = vmul.f32 %v1764, 0.125
        %v1773 = vmul.f32 %v1765, 0.125
        %v1774 = vmul.f32 %v1766, 0.125
        %v1775 = vmul.f32 %v1767, 0.125
        %v1776 = vmul.f32 %v1768, 0.125
        %v1777 = vmul.f32 %v1769, 0.125
        %v1778 = vmul.f32 %v1770, 0.125
        %v1779 = vmul.f32 %v1771, 0.125
        %v1780 = vld [vmem:[%s453] ss:$2 sm:$0xff]
        %s1781 = scalar_lea.vmem %s453, 1 [#allocation8]
        %v1782 = vld [vmem:[%s1781] ss:$2 sm:$0xff]
        %v1784 = vrot.slane %v1782, 7
        %v1786 = vsel %vm559, %v1780, %v1784
        %v1788 = vrot.slane %v1780, 1
        %v1790 = vsel %vm566, %v1788, %v1782
        %v1791 = vmul.f32 %v1780, 3.0
        %v1792 = vadd.f32 %v1786, %v1791
        %v1793 = vmul.f32 %v1782, 3.0
        %v1794 = vadd.f32 %v1792, %v1793
        %v1795 = vadd.f32 %v1794, %v1790
        %v1796 = vmul.f32 %v1795, 0.125
        %v1797 = vmul.f32 %v1772, 3.0
        %v1798 = vmul.f32 %v1774, 3.0
        %v1799 = vmul.f32 %v1776, 3.0
        %v1800 = vmul.f32 %v1778, 3.0
        %v1801 = vadd.f32 %v1636, %v1797
        %v1802 = vadd.f32 %v1773, %v1798
        %v1803 = vadd.f32 %v1775, %v1799
        %v1804 = vadd.f32 %v1777, %v1800
        %v1805 = vmul.f32 %v1773, 3.0
        %v1806 = vmul.f32 %v1775, 3.0
        %v1807 = vmul.f32 %v1777, 3.0
        %v1808 = vmul.f32 %v1779, 3.0
        %v1809 = vadd.f32 %v1801, %v1805
        %v1810 = vadd.f32 %v1802, %v1806
        %v1811 = vadd.f32 %v1803, %v1807
        %v1812 = vadd.f32 %v1804, %v1808
        %v1813 = vadd.f32 %v1809, %v1774
        %v1814 = vadd.f32 %v1810, %v1776
        %v1815 = vadd.f32 %v1811, %v1778
        %v1816 = vadd.f32 %v1812, %v1796
        %v1817 = vmul.f32 %v1813, 0.125
        %v1818 = vmul.f32 %v1814, 0.125
        %v1819 = vmul.f32 %v1815, 0.125
        %v1820 = vmul.f32 %v1816, 0.125
        %v1821 = vld [vmem:[#allocation12] sm:$0xf]
        %v1822 = vld [vmem:[#allocation14] sm:$0x1]
        %v1824 = vlaneseq
        %v1825 = vshrl.u32 %v1824, 7
        %v1826 = vsub.s32 0, %v1825
        %v1827 = vrot.slane %v1822, %v1826
        %v1830 = vsel %vm585, %v1817, 0
        %v1833 = vsel %vm585, %v1818, 0
        %v1836 = vsel %vm585, %v1819, 0
        %v1839 = vsel %vm585, %v1820, 0
        %v1842 = vsel %vm972, %v1821, 0
        %1844 = vmatprep.subr.mxu0 0.0
        %1845 = vmatpush1.msra.mxu0 %v1842
        %1846 = vmatprep.subr.mxu0 0.0
        %1847 = vmatpush1.msra.mxu0 0.0
        %1848 = vmatprep.subr.mxu0 0.0
        %1849 = vmatpush1.msra.mxu0 0.0
        %1850 = vmatprep.subr.mxu0 0.0
        %1851 = vmatpush1.msra.mxu0 0.0
        %1852 = vmatprep.subr.mxu0 0.0
        %1853 = vmatpush1.msra.mxu0 0.0
        %1854 = vmatprep.subr.mxu0 0.0
        %1855 = vmatpush1.msra.mxu0 0.0
        %1856 = vmatprep.subr.mxu0 0.0
        %1857 = vmatpush1.msra.mxu0 0.0
        %1858 = vmatprep.subr.mxu0 0.0
        %1859 = vmatpush1.msra.mxu0 0.0
        %1860 = vmatprep.subr.mxu0 0.0
        %1861 = vmatpush1.msra.mxu0 0.0
        %1862 = vmatprep.subr.mxu0 0.0
        %1863 = vmatpush1.msra.mxu0 0.0
        %1864 = vmatprep.subr.mxu0 0.0
        %1865 = vmatpush1.msra.mxu0 0.0
        %1866 = vmatprep.subr.mxu0 0.0
        %1867 = vmatpush1.msra.mxu0 0.0
        %1868 = vmatprep.subr.mxu0 0.0
        %1869 = vmatpush1.msra.mxu0 0.0
        %1870 = vmatprep.subr.mxu0 0.0
        %1871 = vmatpush1.msra.mxu0 0.0
        %1872 = vmatprep.subr.mxu0 0.0
        %1873 = vmatpush1.msra.mxu0 0.0
        %1874 = vmatprep.subr.mxu0 0.0
        %1875 = vmatpush1.msra.mxu0 0.0
        %1876 = vmatprep.subr.mxu0 0.0
        %1877 = vmatpush1.msra.mxu0 0.0
        %1878 = vmatprep.subr.mxu0 0.0
        %1879 = vmatpush1.msra.mxu0 0.0
        %1880 = vmatprep.subr.mxu0 0.0
        %1881 = vmatpush1.msra.mxu0 0.0
        %1882 = vmatprep.subr.mxu0 0.0
        %1883 = vmatpush1.msra.mxu0 0.0
        %1884 = vmatprep.subr.mxu0 0.0
        %1885 = vmatpush1.msra.mxu0 0.0
        %1886 = vmatprep.subr.mxu0 0.0
        %1887 = vmatpush1.msra.mxu0 0.0
        %1888 = vmatprep.subr.mxu0 0.0
        %1889 = vmatpush1.msra.mxu0 0.0
        %1890 = vmatprep.subr.mxu0 0.0
        %1891 = vmatpush1.msra.mxu0 0.0
        %1892 = vmatprep.subr.mxu0 0.0
        %1893 = vmatpush1.msra.mxu0 0.0
        %1894 = vmatprep.subr.mxu0 0.0
        %1895 = vmatpush1.msra.mxu0 0.0
        %1896 = vmatprep.subr.mxu0 0.0
        %1897 = vmatpush1.msra.mxu0 0.0
        %1898 = vmatprep.subr.mxu0 0.0
        %1899 = vmatpush1.msra.mxu0 0.0
        %1900 = vmatprep.subr.mxu0 0.0
        %1901 = vmatpush1.msra.mxu0 0.0
        %1902 = vmatprep.subr.mxu0 0.0
        %1903 = vmatpush1.msra.mxu0 0.0
        %1904 = vmatprep.subr.mxu0 0.0
        %1905 = vmatpush1.msra.mxu0 0.0
        %1906 = vmatprep.subr.mxu0 0.0
        %1907 = vmatpush1.msra.mxu0 0.0
        %1908 = vmatprep.mubr.f32.mxu0 0.0
        %1909 = vmatmul.mubr.f32.gmra.mrb[0].mxu0 %v1830
        %v1910 = vpop.f32.mrb[0].mxu0
        %v1911 = vadd.f32 %v1827, %v1910
        %v1912 = vpop.f32.mrb[0].mxu0
        %1913 = vmatprep.mubr.f32.mxu0 0.0
        %1914 = vmatmul.mubr.f32.gmra.mrb[0].mxu0 %v1833
        %v1915 = vpop.f32.mrb[0].mxu0
        %v1916 = vadd.f32 %v1827, %v1915
        %v1917 = vpop.f32.mrb[0].mxu0
        %1918 = vmatprep.mubr.f32.mxu0 0.0
        %1919 = vmatmul.mubr.f32.gmra.mrb[0].mxu0 %v1836
        %v1920 = vpop.f32.mrb[0].mxu0
        %v1921 = vadd.f32 %v1827, %v1920
        %v1922 = vpop.f32.mrb[0].mxu0
        %1923 = vmatprep.mubr.f32.mxu0 0.0
        %1924 = vmatmul.mubr.f32.gmra.mrb[0].mxu0 %v1839
        %v1925 = vpop.f32.mrb[0].mxu0
        %v1926 = vadd.f32 %v1827, %v1925
        %v1927 = vpop.f32.mrb[0].mxu0
        %1928 = vdwg.mxu0
        %1929 = vst.msk [vmem:[%s516] sm:$0xff] %vm588, %v1911
        %1930 = vst.msk [vmem:[%s516 + $0x8] sm:$0xff] %vm588, %v1916
        %1931 = vst.msk [vmem:[%s516 + $0x10] sm:$0xff] %vm588, %v1921
        %1932 = vst.msk [vmem:[%s516 + $0x18] sm:$0xff] %vm588, %v1926
        %s1933 = sand.u32 %s240, 1
        %s1934 = scalar_lea.sflag [#allocation5], %s1933
        %s1935 = sand.u32 %s240, 1
        %s1936 = smul.addr %s1935, 128
        %s1937 = scalar_lea.vmem [#allocation15], %s1936
        %s1938 = sand.u32 %s268, 1
        %s1939 = scalar_lea.sflag [#allocation17], %s1938
        %s1940 = sand.u32 %s268, 1
        %s1941 = smul.addr %s1940, 32
        %s1942 = scalar_lea.vmem [#allocation16], %s1941
        // Predicated region
        $region77: #{discriminator_block.2} parent=47 // pred_check
          %p1943 = pneg %p250
        $region78: #{discriminator_block.2} parent=47 // pred_check_branch
          %1945 = sbr.rel (%p1943) target = $region80
        $region79: #{discriminator_block.2} parent=47 // pred_region
          %s1946 = smul.u32 8, %s39
          %s1948 = ssub.s32 2048, 2048
          %1949 = vsyncadd %s1934, %s1948
          %s1950 = smul.addr %s1946, 2
          %s1951 = smul.addr %s38, 32
          %s1952 = sadd.s32 %s1950, %s1951
          %s1953 = smul.addr %s1952, 128
          %s1954 = scalar_lea.hbm %s7, %s1953
          %s1955 = sshll.u32 %s1937, 4
          %s1956 = int_to_ptr.vmem [resolvable:$true] %s1955
          %1961 = dma.vmem_to_hbm [thread:$0]  %s1956, 2048, %s1954, %s1934, 128, 128, 8
        $region80: #{discriminator_block.2} parent=47 // pred_fallthru
          _
        // Predicated region
        $region81: #{discriminator_block.2} parent=47 // pred_check
          %p1962 = pneg %p278
        $region82: #{discriminator_block.2} parent=47 // pred_check_branch
          %1964 = sbr.rel (%p1962) target = $region84
        $region83: #{discriminator_block.2} parent=47 // pred_region
          %s1965 = smul.u32 4, %s39
          %s1967 = ssub.s32 512, 512
          %1968 = vsyncadd %s1939, %s1967
          %s1969 = smul.addr %s38, 8
          %s1970 = sadd.s32 %s1965, %s1969
          %s1971 = smul.addr %s1970, 128
          %s1972 = scalar_lea.hbm %s8, %s1971
          %s1973 = sshll.u32 %s1942, 4
          %s1974 = int_to_ptr.vmem [resolvable:$true] %s1973
          %1979 = dma.vmem_to_hbm [thread:$0]  %s1974, 512, %s1972, %s1939, 128, 128, 8
        $region84: #{discriminator_block.2} parent=47 // pred_fallthru
          _
      $region48: #{discriminator_block.2} parent=5 // pred_fallthru
        _
      %p1980 = scmp.le.s32.totalorder 2, %s29
      // Predicated region
      $region85: #{discriminator_block.2} parent=5 // pred_check
        %p1981 = pneg %p1980
      $region86: #{discriminator_block.2} parent=5 // pred_check_branch
        %1983 = sbr.rel (%p1981) target = $region88
      $region87: #{discriminator_block.2} parent=5 // pred_region
        %s1984 = ssub.s32 %s29, 2
        // Predicated region
        $region89: #{discriminator_block.2} parent=87 // pred_check
          %p1985 = pneg %p256
        $region90: #{discriminator_block.2} parent=87 // pred_check_branch
          %1987 = sbr.rel (%p1985) target = $region92
        $region91: #{discriminator_block.2} parent=87 // pred_region
          %s1988 = sand.u32 %s241, 1
          %s1989 = scalar_lea.sflag [#allocation5], %s1988
          %s1990 = sand.u32 %s241, 1
          %s1991 = smul.addr %s1990, 128
          %s1992 = scalar_lea.vmem [#allocation15], %s1991
          %1993 = dma.done %s1989, 2048
        $region92: #{discriminator_block.2} parent=87 // pred_fallthru
          _
        // Predicated region
        $region93: #{discriminator_block.2} parent=87 // pred_check
          %p1994 = pneg %p284
        $region94: #{discriminator_block.2} parent=87 // pred_check_branch
          %1996 = sbr.rel (%p1994) target = $region96
        $region95: #{discriminator_block.2} parent=87 // pred_region
          %s1997 = sand.u32 %s269, 1
          %s1998 = scalar_lea.sflag [#allocation17], %s1997
          %s1999 = sand.u32 %s269, 1
          %s2000 = smul.addr %s1999, 32
          %s2001 = scalar_lea.vmem [#allocation16], %s2000
          %2002 = dma.done %s1998, 512
        $region96: #{discriminator_block.2} parent=87 // pred_fallthru
          _
      $region88: #{discriminator_block.2} parent=5 // pred_fallthru
        _
    $region6: #{discriminator_block.2} parent=1 // loop_footer
      %s33 = sadd.s32 1, %s29
    $region7: #{discriminator_block.2} parent=1 // loop_footer_branch
      %28 = sbr.rel target = $region3
    $region8: #{discriminator_block.2} parent=1 // loop_exit
      _
    %2003 = vsyncpa [#allocation4], 1
    %s2004 = scalar_lea.sflag [#allocation4], 1
    %2005 = vsyncpa %s2004, 1
    %2006 = vsyncpa [#allocation7], 1
    %s2007 = scalar_lea.sflag [#allocation7], 1
    %2008 = vsyncpa %s2007, 1
    %2009 = vsyncpa [#allocation10], 1
    %2010 = vsyncpa [#allocation13], 1
    %2011 = vsyncpa [#allocation5], 1
    %s2012 = scalar_lea.sflag [#allocation5], 1
    %2013 = vsyncpa %s2012, 1
    %2014 = vsyncpa [#allocation17], 1
    %s2015 = scalar_lea.sflag [#allocation17], 1
    %2016 = vsyncpa %s2015, 1

// kernel: discriminator_block.3
$region0: #{discriminator_block.3}
  #allocation0 [shape = 'u32[]', space=smem, size = 0x4, offset = 0x4, fixed_abs, tag = 'smem constant byte address 0x4 - core index']
  #allocation1 [shape = 'u32[144,128]{1,0:T(1,128)}', space=vmem, size = 0x12000, scoped, tag = 'internal scratch']
  #allocation2 [shape = 'f32[12,16,12]{2,1,0:T(8,128)}', space=vmem, size = 0x18000, scoped, tag = 'scratch operand']
  #allocation3 [shape = 'f32[10,16,8]{2,1,0:T(8,128)}', space=vmem, size = 0x14000, scoped, tag = 'scratch operand']
  %s0 = inlined_call_operand.hbm [shape: f32[2,16,16,4], index: 0, kind: input, shape index: {}, may-alias: {0,1,2}]
  %s1 = inlined_call_operand.hbm [shape: f32[2,16,16,4], index: 1, kind: input, shape index: {}, may-alias: {0,1,2}]
  %s2 = inlined_call_operand.hbm [shape: f32[2,16,16,4], index: 2, kind: input, shape index: {}, may-alias: {0,1,2}]
  %s3 = inlined_call_operand.hbm [shape: f32[2,8,8,8], index: 3, kind: input, shape index: {}]
  %s4 = inlined_call_operand.hbm [shape: f32[3,12,8], index: 4, kind: input, shape index: {}]
  %s5 = inlined_call_operand.hbm [shape: f32[1,8], index: 5, kind: input, shape index: {}]
  %s6 = inlined_call_operand.hbm [shape: f32[2,8,8,8], index: 6, kind: output, shape index: {}]
  %s7 = sld [smem:[#allocation0]]
  $region89: #{discriminator_block.3} parent=0
    _
  %s9 = ssub.s32 1, %s7
  %s10 = scalar_select 0, %s9, %s7
  $region1: #{discriminator_block.3} parent=0
    #allocation4 [shape = 'u8[32768]{0}', space=vmem, size = 0x8000, scoped, tag = 'input window, operand 0']
    #allocation5 [shape = 's32[2]{0}', space=sflag, size = 0x8, scoped, tag = 'scoped memory for discriminator_block.3']
    #allocation6 [shape = 's32[2]{0}', space=sflag, size = 0x8, scoped, tag = 'scoped memory for discriminator_block.3']
    #allocation7 [shape = 'u8[131072]{0}', space=vmem, size = 0x20000, scoped, tag = 'input window, operand 1']
    #allocation8 [shape = 's32[2]{0}', space=sflag, size = 0x8, scoped, tag = 'scoped memory for discriminator_block.3']
    #allocation9 [shape = 'u8[32768]{0}', space=vmem, size = 0x8000, scoped, tag = 'input window, operand 2']
    #allocation10 [shape = 'u8[32768]{0}', space=vmem, size = 0x8000, scoped, tag = 'input window, operand 3']
    #allocation11 [shape = 's32[2]{0}', space=sflag, size = 0x8, scoped, tag = 'scoped memory for discriminator_block.3']
    #allocation12 [shape = 'u8[24576]{0}', space=vmem, size = 0x6000, scoped, tag = 'input window, operand 4, single buffered']
    #allocation13 [shape = 'u8[512]{0}', space=vmem, size = 0x400, scoped, tag = 'input window, operand 5, single buffered']
    #allocation14 [shape = 's32[1]{0}', space=sflag, size = 0x4, scoped, tag = 'scoped memory for discriminator_block.3']
    #allocation15 [shape = 'u8[32768]{0}', space=vmem, size = 0x8000, scoped, tag = 'output window, operand 0']
    %11 = vsyncpa [#allocation5], 0
    %s12 = scalar_lea.sflag [#allocation5], 1
    %13 = vsyncpa %s12, 0
    %14 = vsyncpa [#allocation8], 0
    %s15 = scalar_lea.sflag [#allocation8], 1
    %16 = vsyncpa %s15, 0
    %17 = vsyncpa [#allocation11], 0
    %s18 = scalar_lea.sflag [#allocation11], 1
    %19 = vsyncpa %s18, 0
    %20 = vsyncpa [#allocation14], 0
    %21 = vsyncpa [#allocation6], 0
    %s22 = scalar_lea.sflag [#allocation6], 1
    %23 = vsyncpa %s22, 0
    loop: start=0, step=1, limit=6
    $region2: #{discriminator_block.3} parent=1 // loop_pre_header
      _
    $region3: #{discriminator_block.3} parent=1 // loop_header
      %s25 = sphi 0, %s29
      %p26 = scmp.ge.s32.totalorder %s25, 6
      %s32 = sphi 0, %s44
      %s33 = sphi 0, %s40
      %s34 = sphi 0, %s32
      %s35 = sphi 0, %s33
      %s36 = sphi 0, %s34
      %s37 = sphi 0, %s35
      %s57 = sphi 0, %s59
      %s60 = sphi 0, %s57
      %s61 = sphi 0, %s60
      %s77 = sphi 0, %s61
      %s85 = sphi 0, %s87
      %s88 = sphi 0, %s85
      %s89 = sphi 0, %s88
      %s105 = sphi 0, %s89
      %s121 = sphi 0, %s123
      %s124 = sphi 0, %s121
      %s125 = sphi 0, %s124
      %s141 = sphi 0, %s125
      %s149 = sphi 0, %s151
      %s152 = sphi 0, %s149
      %s153 = sphi 0, %s152
      %s169 = sphi 0, %s153
      %s173 = sphi 0, %s173
      %s175 = sphi 0, %s173
      %s176 = sphi 0, %s175
      %s190 = sphi 0, %s176
      %s194 = sphi 0, %s194
      %s196 = sphi 0, %s194
      %s197 = sphi 0, %s196
      %s211 = sphi 0, %s197
      %s219 = sphi 0, %s221
      %s222 = sphi 0, %s219
      %s223 = sphi 0, %s222
      %s239 = sphi 0, %s223
    $region4: #{discriminator_block.3} parent=1 // loop_header_branch
      %28 = sbr.rel (%p26) target = $region8
    $region5: #{discriminator_block.3} parent=1 // loop_body
      %s30 = ssub.s32 %s25, 1
      %s31 = ssub.s32 %s25, 2
      %s38 = sadd.s32 1, %s33
      %p39 = scmp.ge.s32.totalorder %s38, 2
      %s40 = scalar_select %p39, 0, %s38
      %s41 = sadd.s32 1, %s32
      %s42 = scalar_select %p39, %s41, %s32
      %p43 = scmp.ge.s32.totalorder %s42, 2
      %s44 = scalar_select %p43, 0, %s42
      %s45 = smul.u32 %s33, 4
      %s46 = ssub.s32 %s45, 1
      %p47 = scmp.gt.s32.totalorder %s46, 0
      %s48 = scalar_select %p47, %s46, 0
      %s49 = smul.u32 %s40, 4
      %s50 = ssub.s32 %s49, 1
      %p51 = scmp.gt.s32.totalorder %s50, 0
      %s52 = scalar_select %p51, %s50, 0
      %s53 = ssub.s32 %s32, %s44
      %s54 = ssub.s32 %s48, %s52
      %s55 = sor.u32 %s53, %s54
      %p56 = scmp.eq.s32.totalorder %s55, 0
      %s58 = sadd.s32 %s57, 1
      %s59 = scalar_select %p56, %s57, %s58
      %p62 = pneg %p56
      %p63 = scmp.eq.s32.totalorder %s25, 3
      %p64 = por %p62, %p63
      %p65 = scmp.ne.s32.totalorder %s57, %s60
      %p66 = scmp.eq.s32.totalorder %s25, 0
      %p67 = por %p65, %p66
      %p68 = scmp.ne.s32.totalorder %s57, %s60
      %p69 = scmp.eq.s32.totalorder %s30, 3
      %p70 = por %p68, %p69
      %p71 = scmp.ne.s32.totalorder %s60, %s61
      %p72 = scmp.eq.s32.totalorder %s30, 0
      %p73 = por %p71, %p72
      %p74 = scmp.ne.s32.totalorder %s60, %s61
      %p75 = scmp.eq.s32.totalorder %s31, 3
      %p76 = por %p74, %p75
      %p78 = scmp.ne.s32.totalorder %s61, %s77
      %p79 = scmp.eq.s32.totalorder %s31, 0
      %p80 = por %p78, %p79
      %s81 = ssub.s32 %s32, %s44
      %s82 = ssub.s32 %s33, %s40
      %s83 = sor.u32 %s81, %s82
      %p84 = scmp.eq.s32.totalorder %s83, 0
      %s86 = sadd.s32 %s85, 1
      %s87 = scalar_select %p84, %s85, %s86
      %p90 = pneg %p84
      %p91 = scmp.eq.s32.totalorder %s25, 3
      %p92 = por %p90, %p91
      %p93 = scmp.ne.s32.totalorder %s85, %s88
      %p94 = scmp.eq.s32.totalorder %s25, 0
      %p95 = por %p93, %p94
      %p96 = scmp.ne.s32.totalorder %s85, %s88
      %p97 = scmp.eq.s32.totalorder %s30, 3
      %p98 = por %p96, %p97
      %p99 = scmp.ne.s32.totalorder %s88, %s89
      %p100 = scmp.eq.s32.totalorder %s30, 0
      %p101 = por %p99, %p100
      %p102 = scmp.ne.s32.totalorder %s88, %s89
      %p103 = scmp.eq.s32.totalorder %s31, 3
      %p104 = por %p102, %p103
      %p106 = scmp.ne.s32.totalorder %s89, %s105
      %p107 = scmp.eq.s32.totalorder %s31, 0
      %p108 = por %p106, %p107
      %s109 = sadd.s32 %s33, 1
      %s110 = smul.u32 %s109, 4
      %p111 = scmp.lt.s32.totalorder %s110, 7
      %s112 = scalar_select %p111, %s110, 7
      %s113 = sadd.s32 %s40, 1
      %s114 = smul.u32 %s113, 4
      %p115 = scmp.lt.s32.totalorder %s114, 7
      %s116 = scalar_select %p115, %s114, 7
      %s117 = ssub.s32 %s32, %s44
      %s118 = ssub.s32 %s112, %s116
      %s119 = sor.u32 %s117, %s118
      %p120 = scmp.eq.s32.totalorder %s119, 0
      %s122 = sadd.s32 %s121, 1
      %s123 = scalar_select %p120, %s121, %s122
      %p126 = pneg %p120
      %p127 = scmp.eq.s32.totalorder %s25, 3
      %p128 = por %p126, %p127
      %p129 = scmp.ne.s32.totalorder %s121, %s124
      %p130 = scmp.eq.s32.totalorder %s25, 0
      %p131 = por %p129, %p130
      %p132 = scmp.ne.s32.totalorder %s121, %s124
      %p133 = scmp.eq.s32.totalorder %s30, 3
      %p134 = por %p132, %p133
      %p135 = scmp.ne.s32.totalorder %s124, %s125
      %p136 = scmp.eq.s32.totalorder %s30, 0
      %p137 = por %p135, %p136
      %p138 = scmp.ne.s32.totalorder %s124, %s125
      %p139 = scmp.eq.s32.totalorder %s31, 3
      %p140 = por %p138, %p139
      %p142 = scmp.ne.s32.totalorder %s125, %s141
      %p143 = scmp.eq.s32.totalorder %s31, 0
      %p144 = por %p142, %p143
      %s145 = ssub.s32 %s32, %s44
      %s146 = ssub.s32 %s33, %s40
      %s147 = sor.u32 %s145, %s146
      %p148 = scmp.eq.s32.totalorder %s147, 0
      %s150 = sadd.s32 %s149, 1
      %s151 = scalar_select %p148, %s149, %s150
      %p154 = pneg %p148
      %p155 = scmp.eq.s32.totalorder %s25, 3
      %p156 = por %p154, %p155
      %p157 = scmp.ne.s32.totalorder %s149, %s152
      %p158 = scmp.eq.s32.totalorder %s25, 0
      %p159 = por %p157, %p158
      %p160 = scmp.ne.s32.totalorder %s149, %s152
      %p161 = scmp.eq.s32.totalorder %s30, 3
      %p162 = por %p160, %p161
      %p163 = scmp.ne.s32.totalorder %s152, %s153
      %p164 = scmp.eq.s32.totalorder %s30, 0
      %p165 = por %p163, %p164
      %p166 = scmp.ne.s32.totalorder %s152, %s153
      %p167 = scmp.eq.s32.totalorder %s31, 3
      %p168 = por %p166, %p167
      %p170 = scmp.ne.s32.totalorder %s153, %s169
      %p171 = scmp.eq.s32.totalorder %s31, 0
      %p172 = por %p170, %p171
      %s174 = sadd.s32 %s173, 1
      %p177 = scmp.eq.s32.totalorder %s25, 3
      %p178 = scmp.ne.s32.totalorder %s173, %s175
      %p179 = scmp.eq.s32.totalorder %s25, 0
      %p180 = por %p178, %p179
      %p181 = scmp.ne.s32.totalorder %s173, %s175
      %p182 = scmp.eq.s32.totalorder %s30, 3
      %p183 = por %p181, %p182
      %p184 = scmp.ne.s32.totalorder %s175, %s176
      %p185 = scmp.eq.s32.totalorder %s30, 0
      %p186 = por %p184, %p185
      %p187 = scmp.ne.s32.totalorder %s175, %s176
      %p188 = scmp.eq.s32.totalorder %s31, 3
      %p189 = por %p187, %p188
      %p191 = scmp.ne.s32.totalorder %s176, %s190
      %p192 = scmp.eq.s32.totalorder %s31, 0
      %p193 = por %p191, %p192
      %s195 = sadd.s32 %s194, 1
      %p198 = scmp.eq.s32.totalorder %s25, 3
      %p199 = scmp.ne.s32.totalorder %s194, %s196
      %p200 = scmp.eq.s32.totalorder %s25, 0
      %p201 = por %p199, %p200
      %p202 = scmp.ne.s32.totalorder %s194, %s196
      %p203 = scmp.eq.s32.totalorder %s30, 3
      %p204 = por %p202, %p203
      %p205 = scmp.ne.s32.totalorder %s196, %s197
      %p206 = scmp.eq.s32.totalorder %s30, 0
      %p207 = por %p205, %p206
      %p208 = scmp.ne.s32.totalorder %s196, %s197
      %p209 = scmp.eq.s32.totalorder %s31, 3
      %p210 = por %p208, %p209
      %p212 = scmp.ne.s32.totalorder %s197, %s211
      %p213 = scmp.eq.s32.totalorder %s31, 0
      %p214 = por %p212, %p213
      %s215 = ssub.s32 %s32, %s44
      %s216 = ssub.s32 %s33, %s40
      %s217 = sor.u32 %s215, %s216
      %p218 = scmp.eq.s32.totalorder %s217, 0
      %s220 = sadd.s32 %s219, 1
      %s221 = scalar_select %p218, %s219, %s220
      %p224 = pneg %p218
      %p225 = scmp.eq.s32.totalorder %s25, 3
      %p226 = por %p224, %p225
      %p227 = scmp.ne.s32.totalorder %s219, %s222
      %p228 = scmp.eq.s32.totalorder %s25, 0
      %p229 = por %p227, %p228
      %p230 = scmp.ne.s32.totalorder %s219, %s222
      %p231 = scmp.eq.s32.totalorder %s30, 3
      %p232 = por %p230, %p231
      %p233 = scmp.ne.s32.totalorder %s222, %s223
      %p234 = scmp.eq.s32.totalorder %s30, 0
      %p235 = por %p233, %p234
      %p236 = scmp.ne.s32.totalorder %s222, %s223
      %p237 = scmp.eq.s32.totalorder %s31, 3
      %p238 = por %p236, %p237
      %p240 = scmp.ne.s32.totalorder %s223, %s239
      %p241 = scmp.eq.s32.totalorder %s31, 0
      %p242 = por %p240, %p241
      %p243 = scmp.le.s32.totalorder 1, %s25
      %p244 = scmp.lt.s32.totalorder %s25, 5
      %p245 = pnand %p243, %p244
      %p246 = pneg %p245
      // Predicated region
      $region9: #{discriminator_block.3} parent=5 // pred_check
        _
      $region10: #{discriminator_block.3} parent=5 // pred_check_branch
        %248 = sbr.rel (%p245) target = $region12
      $region11: #{discriminator_block.3} parent=5 // pred_region
        %s249 = ssub.s32 %s25, 1
        // Predicated region
        $region13: #{discriminator_block.3} parent=11 // pred_check
          %p250 = pneg %p186
        $region14: #{discriminator_block.3} parent=11 // pred_check_branch
          %252 = sbr.rel (%p250) target = $region16
        $region15: #{discriminator_block.3} parent=11 // pred_region
          %s254 = ssub.s32 768, 768
          %255 = vsyncadd [#allocation11], %s254
          %s256 = sshll.u32 [#allocation12], 4
          %s257 = int_to_ptr.vmem [resolvable:$true] %s256
          %262 = dma.hbm_to_vmem [thread:$0]  %s4, 768, %s257, [#allocation11], 128, 128, 8
        $region16: #{discriminator_block.3} parent=11 // pred_fallthru
          _
        // Predicated region
        $region17: #{discriminator_block.3} parent=11 // pred_check
          %p263 = pneg %p207
        $region18: #{discriminator_block.3} parent=11 // pred_check_branch
          %265 = sbr.rel (%p263) target = $region20
        $region19: #{discriminator_block.3} parent=11 // pred_region
          %s267 = ssub.s32 16, 16
          %268 = vsyncadd [#allocation14], %s267
          %s270 = sshll.u32 [#allocation13], 4
          %s271 = int_to_ptr.vmem [resolvable:$true] %s270
          %273 = dma.hbm_to_vmem [thread:$0]  %s5, 16, %s271, [#allocation14]
        $region20: #{discriminator_block.3} parent=11 // pred_fallthru
          _
      $region12: #{discriminator_block.3} parent=5 // pred_fallthru
        _
      %p274 = scmp.lt.s32.totalorder %s25, 4
      // Predicated region
      $region21: #{discriminator_block.3} parent=5 // pred_check
        %p275 = pneg %p274
      $region22: #{discriminator_block.3} parent=5 // pred_check_branch
        %277 = sbr.rel (%p275) target = $region24
      $region23: #{discriminator_block.3} parent=5 // pred_region
        // Predicated region
        $region25: #{discriminator_block.3} parent=23 // pred_check
          %p278 = pneg %p67
        $region26: #{discriminator_block.3} parent=23 // pred_check_branch
          %280 = sbr.rel (%p278) target = $region28
        $region27: #{discriminator_block.3} parent=23 // pred_region
          %s281 = sand.u32 %s57, 1
          %s282 = scalar_lea.sflag [#allocation5], %s281
          %s283 = sand.u32 %s57, 1
          %s284 = smul.addr %s283, 32
          %s285 = scalar_lea.vmem [#allocation4], %s284
          %s286 = smul.u32 %s33, 4
          %s287 = ssub.s32 %s286, 1
          %p288 = scmp.gt.s32.totalorder %s287, 0
          %s289 = scalar_select %p288, %s287, 0
          %s290 = smul.u32 2, %s289
          %s292 = ssub.s32 512, 512
          %293 = vsyncadd %s282, %s292
          %s294 = smul.addr %s290, 2
          %s295 = smul.addr %s32, 32
          %s296 = sadd.s32 %s294, %s295
          %s297 = smul.addr %s296, 128
          %s298 = scalar_lea.hbm %s0, %s297
          %s299 = sshll.u32 %s285, 4
          %s300 = int_to_ptr.vmem [resolvable:$true] %s299
          %305 = dma.hbm_to_vmem [thread:$0]  %s298, 512, %s300, %s282, 128, 128, 8
        $region28: #{discriminator_block.3} parent=23 // pred_fallthru
          _
        // Predicated region
        $region29: #{discriminator_block.3} parent=23 // pred_check
          %p306 = pneg %p95
        $region30: #{discriminator_block.3} parent=23 // pred_check_branch
          %308 = sbr.rel (%p306) target = $region32
        $region31: #{discriminator_block.3} parent=23 // pred_region
          %s309 = sand.u32 %s25, 1
          %s310 = scalar_lea.sflag [#allocation8], %s309
          %s311 = sand.u32 %s85, 1
          %s312 = smul.addr %s311, 128
          %s313 = scalar_lea.vmem [#allocation7], %s312
          %s314 = smul.u32 8, %s33
          %s316 = ssub.s32 2048, 2048
          %317 = vsyncadd %s310, %s316
          %s318 = smul.addr %s314, 2
          %s319 = smul.addr %s32, 32
          %s320 = sadd.s32 %s318, %s319
          %s321 = smul.addr %s320, 128
          %s322 = scalar_lea.hbm %s1, %s321
          %s323 = sshll.u32 %s313, 4
          %s324 = int_to_ptr.vmem [resolvable:$true] %s323
          %329 = dma.hbm_to_vmem [thread:$0]  %s322, 2048, %s324, %s310, 128, 128, 8
        $region32: #{discriminator_block.3} parent=23 // pred_fallthru
          _
        // Predicated region
        $region33: #{discriminator_block.3} parent=23 // pred_check
          %p330 = pneg %p131
        $region34: #{discriminator_block.3} parent=23 // pred_check_branch
          %332 = sbr.rel (%p330) target = $region36
        $region35: #{discriminator_block.3} parent=23 // pred_region
          %s333 = sand.u32 %s25, 1
          %s334 = scalar_lea.sflag [#allocation8], %s333
          %s335 = sand.u32 %s121, 1
          %s336 = smul.addr %s335, 32
          %s337 = scalar_lea.vmem [#allocation9], %s336
          %s338 = sadd.s32 %s33, 1
          %s339 = smul.u32 %s338, 4
          %p340 = scmp.lt.s32.totalorder %s339, 7
          %s341 = scalar_select %p340, %s339, 7
          %s342 = smul.u32 2, %s341
          %s344 = ssub.s32 512, 512
          %345 = vsyncadd %s334, %s344
          %s346 = smul.addr %s342, 2
          %s347 = smul.addr %s32, 32
          %s348 = sadd.s32 %s346, %s347
          %s349 = smul.addr %s348, 128
          %s350 = scalar_lea.hbm %s2, %s349
          %s351 = sshll.u32 %s337, 4
          %s352 = int_to_ptr.vmem [resolvable:$true] %s351
          %357 = dma.hbm_to_vmem [thread:$0]  %s350, 512, %s352, %s334, 128, 128, 8
        $region36: #{discriminator_block.3} parent=23 // pred_fallthru
          _
        // Predicated region
        $region37: #{discriminator_block.3} parent=23 // pred_check
          %p358 = pneg %p159
        $region38: #{discriminator_block.3} parent=23 // pred_check_branch
          %360 = sbr.rel (%p358) target = $region40
        $region39: #{discriminator_block.3} parent=23 // pred_region
          %s361 = sand.u32 %s25, 1
          %s362 = scalar_lea.sflag [#allocation11], %s361
          %s363 = sand.u32 %s149, 1
          %s364 = smul.addr %s363, 32
          %s365 = scalar_lea.vmem [#allocation10], %s364
          %s366 = smul.u32 4, %s33
          %s368 = ssub.s32 512, 512
          %369 = vsyncadd %s362, %s368
          %s370 = smul.addr %s32, 8
          %s371 = sadd.s32 %s366, %s370
          %s372 = smul.addr %s371, 128
          %s373 = scalar_lea.hbm %s3, %s372
          %s374 = sshll.u32 %s365, 4
          %s375 = int_to_ptr.vmem [resolvable:$true] %s374
          %380 = dma.hbm_to_vmem [thread:$0]  %s373, 512, %s375, %s362, 128, 128, 8
        $region40: #{discriminator_block.3} parent=23 // pred_fallthru
          _
      $region24: #{discriminator_block.3} parent=5 // pred_fallthru
        _
      %p381 = scmp.le.s32.totalorder 1, %s25
      %p382 = scmp.lt.s32.totalorder %s25, 5
      %p383 = pnand %p381, %p382
      %p384 = pneg %p383
      // Predicated region
      $region41: #{discriminator_block.3} parent=5 // pred_check
        _
      $region42: #{discriminator_block.3} parent=5 // pred_check_branch
        %386 = sbr.rel (%p383) target = $region44
      $region43: #{discriminator_block.3} parent=5 // pred_region
        %s387 = ssub.s32 %s25, 1
        %s388 = sand.u32 %s60, 1
        %s389 = scalar_lea.sflag [#allocation5], %s388
        %s390 = sand.u32 %s60, 1
        %s391 = smul.addr %s390, 32
        %s392 = scalar_lea.vmem [#allocation4], %s391
        // Predicated region
        $region45: #{discriminator_block.3} parent=43 // pred_check
          %p393 = pneg %p73
        $region46: #{discriminator_block.3} parent=43 // pred_check_branch
          %395 = sbr.rel (%p393) target = $region48
        $region47: #{discriminator_block.3} parent=43 // pred_region
          %396 = dma.done %s389, 512
        $region48: #{discriminator_block.3} parent=43 // pred_fallthru
          _
        %s397 = sand.u32 %s30, 1
        %s398 = scalar_lea.sflag [#allocation8], %s397
        %s399 = sand.u32 %s88, 1
        %s400 = smul.addr %s399, 128
        %s401 = scalar_lea.vmem [#allocation7], %s400
        // Predicated region
        $region49: #{discriminator_block.3} parent=43 // pred_check
          %p402 = pneg %p101
        $region50: #{discriminator_block.3} parent=43 // pred_check_branch
          %404 = sbr.rel (%p402) target = $region52
        $region51: #{discriminator_block.3} parent=43 // pred_region
          %405 = dma.done %s398, 2048
        $region52: #{discriminator_block.3} parent=43 // pred_fallthru
          _
        %s406 = sand.u32 %s30, 1
        %s407 = scalar_lea.sflag [#allocation8], %s406
        %s408 = sand.u32 %s124, 1
        %s409 = smul.addr %s408, 32
        %s410 = scalar_lea.vmem [#allocation9], %s409
        // Predicated region
        $region53: #{discriminator_block.3} parent=43 // pred_check
          %p411 = pneg %p137
        $region54: #{discriminator_block.3} parent=43 // pred_check_branch
          %413 = sbr.rel (%p411) target = $region56
        $region55: #{discriminator_block.3} parent=43 // pred_region
          %414 = dma.done %s407, 512
        $region56: #{discriminator_block.3} parent=43 // pred_fallthru
          _
        %s415 = sand.u32 %s30, 1
        %s416 = scalar_lea.sflag [#allocation11], %s415
        %s417 = sand.u32 %s152, 1
        %s418 = smul.addr %s417, 32
        %s419 = scalar_lea.vmem [#allocation10], %s418
        // Predicated region
        $region57: #{discriminator_block.3} parent=43 // pred_check
          %p420 = pneg %p165
        $region58: #{discriminator_block.3} parent=43 // pred_check_branch
          %422 = sbr.rel (%p420) target = $region60
        $region59: #{discriminator_block.3} parent=43 // pred_region
          %423 = dma.done %s416, 512
        $region60: #{discriminator_block.3} parent=43 // pred_fallthru
          _
        // Predicated region
        $region61: #{discriminator_block.3} parent=43 // pred_check
          %p424 = pneg %p186
        $region62: #{discriminator_block.3} parent=43 // pred_check_branch
          %426 = sbr.rel (%p424) target = $region64
        $region63: #{discriminator_block.3} parent=43 // pred_region
          %427 = dma.done [#allocation11], 768
        $region64: #{discriminator_block.3} parent=43 // pred_fallthru
          _
        // Predicated region
        $region65: #{discriminator_block.3} parent=43 // pred_check
          %p428 = pneg %p207
        $region66: #{discriminator_block.3} parent=43 // pred_check_branch
          %430 = sbr.rel (%p428) target = $region68
        $region67: #{discriminator_block.3} parent=43 // pred_region
          %431 = dma.done [#allocation14], 16
        $region68: #{discriminator_block.3} parent=43 // pred_fallthru
          _
        %s432 = sand.u32 %s60, 1
        %s433 = scalar_lea.sflag [#allocation5], %s432
        %s434 = sand.u32 %s60, 1
        %s435 = smul.addr %s434, 32
        %s436 = scalar_lea.vmem [#allocation4], %s435
        %p437 = pneg %p73
        %p438 = pneg %p70
        %s439 = sand.u32 %s30, 1
        %s440 = scalar_lea.sflag [#allocation8], %s439
        %s441 = sand.u32 %s88, 1
        %s442 = smul.addr %s441, 128
        %s443 = scalar_lea.vmem [#allocation7], %s442
        %p444 = pneg %p101
        %p445 = pneg %p98
        %s446 = sand.u32 %s30, 1
        %s447 = scalar_lea.sflag [#allocation8], %s446
        %s448 = sand.u32 %s124, 1
        %s449 = smul.addr %s448, 32
        %s450 = scalar_lea.vmem [#allocation9], %s449
        %p451 = pneg %p137
        %p452 = pneg %p134
        %s453 = sand.u32 %s30, 1
        %s454 = scalar_lea.sflag [#allocation11], %s453
        %s455 = sand.u32 %s152, 1
        %s456 = smul.addr %s455, 32
        %s457 = scalar_lea.vmem [#allocation10], %s456
        %p458 = pneg %p165
        %p459 = pneg %p162
        %p460 = pneg %p186
        %p461 = pneg %p183
        %p462 = pneg %p207
        %p463 = pneg %p204
        %p464 = pneg %p235
        %p465 = pneg %p232
        %s466 = sand.u32 %s222, 1
        %s467 = scalar_lea.sflag [#allocation6], %s466
        %s468 = sand.u32 %s222, 1
        %s469 = smul.addr %s468, 32
        %s470 = scalar_lea.vmem [#allocation15], %s469
        %s471 = smul.u32 %s35, 4
        %s472 = ssub.s32 %s471, 1
        %p473 = scmp.gt.s32.totalorder %s472, 0
        %s474 = scalar_select %p473, %s472, 0
        %s475 = smul.u32 2, %s474
        %s476 = smul.u32 8, %s35
        %s477 = sadd.s32 %s35, 1
        %s478 = smul.u32 %s477, 4
        %p479 = scmp.lt.s32.totalorder %s478, 7
        %s480 = scalar_select %p479, %s478, 7
        %s481 = smul.u32 2, %s480
        %s482 = smul.u32 4, %s35
        %s483 = smul.u32 4, %s35
        %p484 = scmp.eq.s32.totalorder %s35, 0
        %p485 = scmp.eq.s32.totalorder %s35, 1
        %p486 = scmp.gt.s32.totalorder %s35, 0
        %s487 = scalar_select %p486, 1, 0
        %s488 = scvt.s32.f32 %s487
        %p489 = scmp.lt.s32.totalorder %s35, 1
        %s490 = scalar_select %p489, 1, 0
        %s491 = scvt.s32.f32 %s490
        %v492 = vld [vmem:[%s392] sm:$0xff]
        %v493 = vld [vmem:[%s392 + $0x8] sm:$0xff]
        %v494 = vld [vmem:[%s392 + $0x10] sm:$0xff]
        %v495 = vld [vmem:[%s392 + $0x18] sm:$0xff]
        %v496 = vstv %s488
        %v497 = vmul.f32 %v492, %v496
        %v498 = vmul.f32 %v493, %v496
        %v499 = vmul.f32 %v494, %v496
        %v500 = vmul.f32 %v495, %v496
        %vm505 = vcmask 1040384
        %v506 = vrot.slane %v497, 7
        %v507 = vrot.slane %v498, 7
        %v508 = vsel %vm505, %v506, %v507
        %v509 = vrot.slane %v499, 7
        %v510 = vrot.slane %v500, 7
        %v511 = vsel %vm505, %v509, %v510
        %v516 = vsel %vm505, 0.0, %v506
        %v517 = vsel %vm505, 0.0, %v509
        %vm518 = vcmask 1046528
        %v519 = vrot.slane %v497, 1
        %v520 = vrot.slane %v498, 1
        %v521 = vsel %vm518, %v519, %v520
        %v522 = vrot.slane %v499, 1
        %v523 = vrot.slane %v500, 1
        %v524 = vsel %vm518, %v522, %v523
        %v527 = vsel %vm518, %v520, 0.0
        %v528 = vsel %vm518, %v523, 0.0
        %529 = vrot.lane.b32.xlu0 %v497, 4
        %v530 = vpop.permute.xlu0 %529
        %531 = vrot.lane.b32.xlu0 %v498, 4
        %v532 = vpop.permute.xlu0 %531
        %533 = vrot.lane.b32.xlu0 %v499, 4
        %v534 = vpop.permute.xlu0 %533
        %535 = vrot.lane.b32.xlu0 %v500, 4
        %v536 = vpop.permute.xlu0 %535
        %543 = vrot.lane.b32.xlu0 %v521, 8
        %v544 = vpop.permute.xlu0 %543
        %545 = vrot.lane.b32.xlu0 %v527, 8
        %v546 = vpop.permute.xlu0 %545
        %547 = vrot.lane.b32.xlu0 %v524, 8
        %v548 = vpop.permute.xlu0 %547
        %549 = vrot.lane.b32.xlu0 %v528, 8
        %v550 = vpop.permute.xlu0 %549
        %vm555 = vcmask 31744
        %v556 = vsel %vm555, %v516, %v530
        %v557 = vsel %vm555, %v508, %v532
        %v558 = vsel %vm555, %v517, %v534
        %v559 = vsel %vm555, %v511, %v536
        %vm560 = vcmask 64512
        %v561 = vsel %vm560, %v556, %v544
        %v562 = vsel %vm560, %v557, %v546
        %v563 = vsel %vm560, %v558, %v548
        %v564 = vsel %vm560, %v559, %v550
        %vm565 = vcmask 97280
        %566 = vst.msk [vmem:[#allocation2] sm:$0xff] %vm565, %v561
        %567 = vst.msk [vmem:[#allocation2 + $0x8] sm:$0xff] %vm565, %v562
        %568 = vst.msk [vmem:[#allocation2 + $0x10] sm:$0xff] %vm565, %v563
        %569 = vst.msk [vmem:[#allocation2 + $0x18] sm:$0xff] %vm565, %v564
        %v570 = vld [vmem:[%s401] sm:$0xff]
        %v571 = vld [vmem:[%s401 + $0x8] sm:$0xff]
        %v572 = vld [vmem:[%s401 + $0x10] sm:$0xff]
        %v573 = vld [vmem:[%s401 + $0x18] sm:$0xff]
        %v574 = vld [vmem:[%s401 + $0x20] sm:$0xff]
        %v575 = vld [vmem:[%s401 + $0x28] sm:$0xff]
        %v576 = vld [vmem:[%s401 + $0x30] sm:$0xff]
        %v577 = vld [vmem:[%s401 + $0x38] sm:$0xff]
        %v578 = vld [vmem:[%s401 + $0x40] sm:$0xff]
        %v579 = vld [vmem:[%s401 + $0x48] sm:$0xff]
        %v580 = vld [vmem:[%s401 + $0x50] sm:$0xff]
        %v581 = vld [vmem:[%s401 + $0x58] sm:$0xff]
        %v582 = vld [vmem:[%s401 + $0x60] sm:$0xff]
        %v583 = vld [vmem:[%s401 + $0x68] sm:$0xff]
        %v584 = vld [vmem:[%s401 + $0x70] sm:$0xff]
        %v585 = vld [vmem:[%s401 + $0x78] sm:$0xff]
        %v602 = vrot.slane %v570, 7
        %v603 = vrot.slane %v571, 7
        %v604 = vsel %vm505, %v602, %v603
        %v605 = vrot.slane %v572, 7
        %v606 = vrot.slane %v573, 7
        %v607 = vsel %vm505, %v605, %v606
        %v608 = vrot.slane %v574, 7
        %v609 = vrot.slane %v575, 7
        %v610 = vsel %vm505, %v608, %v609
        %v611 = vrot.slane %v576, 7
        %v612 = vrot.slane %v577, 7
        %v613 = vsel %vm505, %v611, %v612
        %v614 = vrot.slane %v578, 7
        %v615 = vrot.slane %v579, 7
        %v616 = vsel %vm505, %v614, %v615
        %v617 = vrot.slane %v580, 7
        %v618 = vrot.slane %v581, 7
        %v619 = vsel %vm505, %v617, %v618
        %v620 = vrot.slane %v582, 7
        %v621 = vrot.slane %v583, 7
        %v622 = vsel %vm505, %v620, %v621
        %v623 = vrot.slane %v584, 7
        %v624 = vrot.slane %v585, 7
        %v625 = vsel %vm505, %v623, %v624
        %v642 = vsel %vm505, 0.0, %v602
        %v643 = vsel %vm505, 0.0, %v605
        %v644 = vsel %vm505, 0.0, %v608
        %v645 = vsel %vm505, 0.0, %v611
        %v646 = vsel %vm505, 0.0, %v614
        %v647 = vsel %vm505, 0.0, %v617
        %v648 = vsel %vm505, 0.0, %v620
        %v649 = vsel %vm505, 0.0, %v623
        %v650 = vrot.slane %v570, 1
        %v651 = vrot.slane %v571, 1
        %v652 = vsel %vm518, %v650, %v651
        %v653 = vrot.slane %v572, 1
        %v654 = vrot.slane %v573, 1
        %v655 = vsel %vm518, %v653, %v654
        %v656 = vrot.slane %v574, 1
        %v657 = vrot.slane %v575, 1
        %v658 = vsel %vm518, %v656, %v657
        %v659 = vrot.slane %v576, 1
        %v660 = vrot.slane %v577, 1
        %v661 = vsel %vm518, %v659, %v660
        %v662 = vrot.slane %v578, 1
        %v663 = vrot.slane %v579, 1
        %v664 = vsel %vm518, %v662, %v663
        %v665 = vrot.slane %v580, 1
        %v666 = vrot.slane %v581, 1
        %v667 = vsel %vm518, %v665, %v666
        %v668 = vrot.slane %v582, 1
        %v669 = vrot.slane %v583, 1
        %v670 = vsel %vm518, %v668, %v669
        %v671 = vrot.slane %v584, 1
        %v672 = vrot.slane %v585, 1
        %v673 = vsel %vm518, %v671, %v672
        %v682 = vsel %vm518, %v651, 0.0
        %v683 = vsel %vm518, %v654, 0.0
        %v684 = vsel %vm518, %v657, 0.0
        %v685 = vsel %vm518, %v660, 0.0
        %v686 = vsel %vm518, %v663, 0.0
        %v687 = vsel %vm518, %v666, 0.0
        %v688 = vsel %vm518, %v669, 0.0
        %v689 = vsel %vm518, %v672, 0.0
        %690 = vrot.lane.b32.xlu0 %v570, 4
        %v691 = vpop.permute.xlu0 %690
        %692 = vrot.lane.b32.xlu0 %v571, 4
        %v693 = vpop.permute.xlu0 %692
        %694 = vrot.lane.b32.xlu0 %v572, 4
        %v695 = vpop.permute.xlu0 %694
        %696 = vrot.lane.b32.xlu0 %v573, 4
        %v697 = vpop.permute.xlu0 %696
        %698 = vrot.lane.b32.xlu0 %v574, 4
        %v699 = vpop.permute.xlu0 %698
        %700 = vrot.lane.b32.xlu0 %v575, 4
        %v701 = vpop.permute.xlu0 %700
        %702 = vrot.lane.b32.xlu0 %v576, 4
        %v703 = vpop.permute.xlu0 %702
        %704 = vrot.lane.b32.xlu0 %v577, 4
        %v705 = vpop.permute.xlu0 %704
        %706 = vrot.lane.b32.xlu0 %v578, 4
        %v707 = vpop.permute.xlu0 %706
        %708 = vrot.lane.b32.xlu0 %v579, 4
        %v709 = vpop.permute.xlu0 %708
        %710 = vrot.lane.b32.xlu0 %v580, 4
        %v711 = vpop.permute.xlu0 %710
        %712 = vrot.lane.b32.xlu0 %v581, 4
        %v713 = vpop.permute.xlu0 %712
        %714 = vrot.lane.b32.xlu0 %v582, 4
        %v715 = vpop.permute.xlu0 %714
        %716 = vrot.lane.b32.xlu0 %v583, 4
        %v717 = vpop.permute.xlu0 %716
        %718 = vrot.lane.b32.xlu0 %v584, 4
        %v719 = vpop.permute.xlu0 %718
        %720 = vrot.lane.b32.xlu0 %v585, 4
        %v721 = vpop.permute.xlu0 %720
        %746 = vrot.lane.b32.xlu0 %v652, 8
        %v747 = vpop.permute.xlu0 %746
        %748 = vrot.lane.b32.xlu0 %v682, 8
        %v749 = vpop.permute.xlu0 %748
        %750 = vrot.lane.b32.xlu0 %v655, 8
        %v751 = vpop.permute.xlu0 %750
        %752 = vrot.lane.b32.xlu0 %v683, 8
        %v753 = vpop.permute.xlu0 %752
        %754 = vrot.lane.b32.xlu0 %v658, 8
        %v755 = vpop.permute.xlu0 %754
        %756 = vrot.lane.b32.xlu0 %v684, 8
        %v757 = vpop.permute.xlu0 %756
        %758 = vrot.lane.b32.xlu0 %v661, 8
        %v759 = vpop.permute.xlu0 %758
        %760 = vrot.lane.b32.xlu0 %v685, 8
        %v761 = vpop.permute.xlu0 %760
        %762 = vrot.lane.b32.xlu0 %v664, 8
        %v763 = vpop.permute.xlu0 %762
        %764 = vrot.lane.b32.xlu0 %v686, 8
        %v765 = vpop.permute.xlu0 %764
        %766 = vrot.lane.b32.xlu0 %v667, 8
        %v767 = vpop.permute.xlu0 %766
        %768 = vrot.lane.b32.xlu0 %v687, 8
        %v769 = vpop.permute.xlu0 %768
        %770 = vrot.lane.b32.xlu0 %v670, 8
        %v771 = vpop.permute.xlu0 %770
        %772 = vrot.lane.b32.xlu0 %v688, 8
        %v773 = vpop.permute.xlu0 %772
        %774 = vrot.lane.b32.xlu0 %v673, 8
        %v775 = vpop.permute.xlu0 %774
        %776 = vrot.lane.b32.xlu0 %v689, 8
        %v777 = vpop.permute.xlu0 %776
        %v794 = vsel %vm555, %v642, %v691
        %v795 = vsel %vm555, %v604, %v693
        %v796 = vsel %vm555, %v643, %v695
        %v797 = vsel %vm555, %v607, %v697
        %v798 = vsel %vm555, %v644, %v699
        %v799 = vsel %vm555, %v610, %v701
        %v800 = vsel %vm555, %v645, %v703
        %v801 = vsel %vm555, %v613, %v705
        %v802 = vsel %vm555, %v646, %v707
        %v803 = vsel %vm555, %v616, %v709
        %v804 = vsel %vm555, %v647, %v711
        %v805 = vsel %vm555, %v619, %v713
        %v806 = vsel %vm555, %v648, %v715
        %v807 = vsel %vm555, %v622, %v717
        %v808 = vsel %vm555, %v649, %v719
        %v809 = vsel %vm555, %v625, %v721
        %v810 = vsel %vm560, %v794, %v747
        %v811 = vsel %vm560, %v795, %v749
        %v812 = vsel %vm560, %v796, %v751
        %v813 = vsel %vm560, %v797, %v753
        %v814 = vsel %vm560, %v798, %v755
        %v815 = vsel %vm560, %v799, %v757
        %v816 = vsel %vm560, %v800, %v759
        %v817 = vsel %vm560, %v801, %v761
        %v818 = vsel %vm560, %v802, %v763
        %v819 = vsel %vm560, %v803, %v765
        %v820 = vsel %vm560, %v804, %v767
        %v821 = vsel %vm560, %v805, %v769
        %v822 = vsel %vm560, %v806, %v771
        %v823 = vsel %vm560, %v807, %v773
        %v824 = vsel %vm560, %v808, %v775
        %v825 = vsel %vm560, %v809, %v777
        %s826 = scalar_lea.vmem [#allocation2], 32
        %827 = vst.msk [vmem:[%s826] sm:$0xff] %vm565, %v810
        %828 = vst.msk [vmem:[%s826 + $0x8] sm:$0xff] %vm565, %v811
        %829 = vst.msk [vmem:[%s826 + $0x10] sm:$0xff] %vm565, %v812
        %830 = vst.msk [vmem:[%s826 + $0x18] sm:$0xff] %vm565, %v813
        %831 = vst.msk [vmem:[%s826 + $0x20] sm:$0xff] %vm565, %v814
        %832 = vst.msk [vmem:[%s826 + $0x28] sm:$0xff] %vm565, %v815
        %833 = vst.msk [vmem:[%s826 + $0x30] sm:$0xff] %vm565, %v816
        %834 = vst.msk [vmem:[%s826 + $0x38] sm:$0xff] %vm565, %v817
        %835 = vst.msk [vmem:[%s826 + $0x40] sm:$0xff] %vm565, %v818
        %836 = vst.msk [vmem:[%s826 + $0x48] sm:$0xff] %vm565, %v819
        %837 = vst.msk [vmem:[%s826 + $0x50] sm:$0xff] %vm565, %v820
        %838 = vst.msk [vmem:[%s826 + $0x58] sm:$0xff] %vm565, %v821
        %839 = vst.msk [vmem:[%s826 + $0x60] sm:$0xff] %vm565, %v822
        %840 = vst.msk [vmem:[%s826 + $0x68] sm:$0xff] %vm565, %v823
        %841 = vst.msk [vmem:[%s826 + $0x70] sm:$0xff] %vm565, %v824
        %842 = vst.msk [vmem:[%s826 + $0x78] sm:$0xff] %vm565, %v825
        %v843 = vld [vmem:[%s410] sm:$0xff]
        %v844 = vld [vmem:[%s410 + $0x8] sm:$0xff]
        %v845 = vld [vmem:[%s410 + $0x10] sm:$0xff]
        %v846 = vld [vmem:[%s410 + $0x18] sm:$0xff]
        %v847 = vstv %s491
        %v848 = vmul.f32 %v843, %v847
        %v849 = vmul.f32 %v844, %v847
        %v850 = vmul.f32 %v845, %v847
        %v851 = vmul.f32 %v846, %v847
        %v856 = vrot.slane %v848, 7
        %v857 = vrot.slane %v849, 7
        %v858 = vsel %vm505, %v856, %v857
        %v859 = vrot.slane %v850, 7
        %v860 = vrot.slane %v851, 7
        %v861 = vsel %vm505, %v859, %v860
        %v866 = vsel %vm505, 0.0, %v856
        %v867 = vsel %vm505, 0.0, %v859
        %v868 = vrot.slane %v848, 1
        %v869 = vrot.slane %v849, 1
        %v870 = vsel %vm518, %v868, %v869
        %v871 = vrot.slane %v850, 1
        %v872 = vrot.slane %v851, 1
        %v873 = vsel %vm518, %v871, %v872
        %v876 = vsel %vm518, %v869, 0.0
        %v877 = vsel %vm518, %v872, 0.0
        %878 = vrot.lane.b32.xlu0 %v848, 4
        %v879 = vpop.permute.xlu0 %878
        %880 = vrot.lane.b32.xlu0 %v849, 4
        %v881 = vpop.permute.xlu0 %880
        %882 = vrot.lane.b32.xlu0 %v850, 4
        %v883 = vpop.permute.xlu0 %882
        %884 = vrot.lane.b32.xlu0 %v851, 4
        %v885 = vpop.permute.xlu0 %884
        %892 = vrot.lane.b32.xlu0 %v870, 8
        %v893 = vpop.permute.xlu0 %892
        %894 = vrot.lane.b32.xlu0 %v876, 8
        %v895 = vpop.permute.xlu0 %894
        %896 = vrot.lane.b32.xlu0 %v873, 8
        %v897 = vpop.permute.xlu0 %896
        %898 = vrot.lane.b32.xlu0 %v877, 8
        %v899 = vpop.permute.xlu0 %898
        %v904 = vsel %vm555, %v866, %v879
        %v905 = vsel %vm555, %v858, %v881
        %v906 = vsel %vm555, %v867, %v883
        %v907 = vsel %vm555, %v861, %v885
        %v908 = vsel %vm560, %v904, %v893
        %v909 = vsel %vm560, %v905, %v895
        %v910 = vsel %vm560, %v906, %v897
        %v911 = vsel %vm560, %v907, %v899
        %s912 = scalar_lea.vmem [#allocation2], 160
        %913 = vst.msk [vmem:[%s912] sm:$0xff] %vm565, %v908
        %914 = vst.msk [vmem:[%s912 + $0x8] sm:$0xff] %vm565, %v909
        %915 = vst.msk [vmem:[%s912 + $0x10] sm:$0xff] %vm565, %v910
        %916 = vst.msk [vmem:[%s912 + $0x18] sm:$0xff] %vm565, %v911
        %v917 = vld [vmem:[#allocation2] sm:$0xff]
        %v918 = vld [vmem:[#allocation2 + $0x8] sm:$0xff]
        %v919 = vld [vmem:[#allocation2 + $0x10] sm:$0xff]
        %v920 = vld [vmem:[#allocation2 + $0x18] sm:$0xff]
        %v921 = vld [vmem:[#allocation2 + $0x20] sm:$0xff]
        %v922 = vld [vmem:[#allocation2 + $0x28] sm:$0xff]
        %v923 = vld [vmem:[#allocation2 + $0x30] sm:$0xff]
        %v924 = vld [vmem:[#allocation2 + $0x38] sm:$0xff]
        %v925 = vld [vmem:[#allocation2 + $0x40] sm:$0xff]
        %v926 = vld [vmem:[#allocation2 + $0x48] sm:$0xff]
        %v927 = vld [vmem:[#allocation2 + $0x50] sm:$0xff]
        %v928 = vld [vmem:[#allocation2 + $0x58] sm:$0xff]
        %v929 = vld [vmem:[#allocation2 + $0x60] sm:$0xff]
        %v930 = vld [vmem:[#allocation2 + $0x68] sm:$0xff]
        %v931 = vld [vmem:[#allocation2 + $0x70] sm:$0xff]
        %v932 = vld [vmem:[#allocation2 + $0x78] sm:$0xff]
        %v933 = vld [vmem:[#allocation2 + $0x80] sm:$0xff]
        %v934 = vld [vmem:[#allocation2 + $0x88] sm:$0xff]
        %v935 = vld [vmem:[#allocation2 + $0x90] sm:$0xff]
        %v936 = vld [vmem:[#allocation2 + $0x98] sm:$0xff]
        %v937 = vld [vmem:[#allocation12] sm:$0xff]
        %v938 = vld [vmem:[#allocation12 + $0x8] sm:$0xf]
        %s939 = scalar_lea.vmem [#allocation2], 16
        %v940 = vld [vmem:[%s939] sm:$0xff]
        %v941 = vld [vmem:[%s939 + $0x8] sm:$0xff]
        %v942 = vld [vmem:[%s939 + $0x10] sm:$0xff]
        %v943 = vld [vmem:[%s939 + $0x18] sm:$0xff]
        %v944 = vld [vmem:[%s939 + $0x20] sm:$0xff]
        %v945 = vld [vmem:[%s939 + $0x28] sm:$0xff]
        %v946 = vld [vmem:[%s939 + $0x30] sm:$0xff]
        %v947 = vld [vmem:[%s939 + $0x38] sm:$0xff]
        %v948 = vld [vmem:[%s939 + $0x40] sm:$0xff]
        %v949 = vld [vmem:[%s939 + $0x48] sm:$0xff]
        %v950 = vld [vmem:[%s939 + $0x50] sm:$0xff]
        %v951 = vld [vmem:[%s939 + $0x58] sm:$0xff]
        %v952 = vld [vmem:[%s939 + $0x60] sm:$0xff]
        %v953 = vld [vmem:[%s939 + $0x68] sm:$0xff]
        %v954 = vld [vmem:[%s939 + $0x70] sm:$0xff]
        %v955 = vld [vmem:[%s939 + $0x78] sm:$0xff]
        %v956 = vld [vmem:[%s939 + $0x80] sm:$0xff]
        %v957 = vld [vmem:[%s939 + $0x88] sm:$0xff]
        %v958 = vld [vmem:[%s939 + $0x90] sm:$0xff]
        %v959 = vld [vmem:[%s939 + $0x98] sm:$0xff]
        %s960 = scalar_lea.vmem [#allocation12], 16
        %v961 = vld [vmem:[%s960] sm:$0xff]
        %v962 = vld [vmem:[%s960 + $0x8] sm:$0xf]
        %v964 = vsel %vm565, %v940, 0
        %v967 = vsel %vm565, %v941, 0
        %v970 = vsel %vm565, %v942, 0
        %v973 = vsel %vm565, %v943, 0
        %v976 = vsel %vm565, %v944, 0
        %v979 = vsel %vm565, %v945, 0
        %v982 = vsel %vm565, %v946, 0
        %v985 = vsel %vm565, %v947, 0
        %v988 = vsel %vm565, %v948, 0
        %v991 = vsel %vm565, %v949, 0
        %v994 = vsel %vm565, %v950, 0
        %v997 = vsel %vm565, %v951, 0
        %v1000 = vsel %vm565, %v952, 0
        %v1003 = vsel %vm565, %v953, 0
        %v1006 = vsel %vm565, %v954, 0
        %v1009 = vsel %vm565, %v955, 0
        %v1012 = vsel %vm565, %v956, 0
        %v1015 = vsel %vm565, %v957, 0
        %v1018 = vsel %vm565, %v958, 0
        %v1021 = vsel %vm565, %v959, 0
        %vm1023 = vcmask 1043456
        %v1025 = vsel %vm1023, %v962, 0
        %1027 = vmatprep.subr.mxu0 0.0
        %1028 = vmatpush1.msra.mxu0 %v961
        %1029 = vmatprep.subr.mxu0 0.0
        %1030 = vmatpush1.msra.mxu0 %v1025
        %1031 = vmatprep.subr.mxu0 0.0
        %1032 = vmatpush1.msra.mxu0 0.0
        %1033 = vmatprep.subr.mxu0 0.0
        %1034 = vmatpush1.msra.mxu0 0.0
        %1035 = vmatprep.subr.mxu0 0.0
        %1036 = vmatpush1.msra.mxu0 0.0
        %1037 = vmatprep.subr.mxu0 0.0
        %1038 = vmatpush1.msra.mxu0 0.0
        %1039 = vmatprep.subr.mxu0 0.0
        %1040 = vmatpush1.msra.mxu0 0.0
        %1041 = vmatprep.subr.mxu0 0.0
        %1042 = vmatpush1.msra.mxu0 0.0
        %1043 = vmatprep.subr.mxu0 0.0
        %1044 = vmatpush1.msra.mxu0 0.0
        %1045 = vmatprep.subr.mxu0 0.0
        %1046 = vmatpush1.msra.mxu0 0.0
        %1047 = vmatprep.subr.mxu0 0.0
        %1048 = vmatpush1.msra.mxu0 0.0
        %1049 = vmatprep.subr.mxu0 0.0
        %1050 = vmatpush1.msra.mxu0 0.0
        %1051 = vmatprep.subr.mxu0 0.0
        %1052 = vmatpush1.msra.mxu0 0.0
        %1053 = vmatprep.subr.mxu0 0.0
        %1054 = vmatpush1.msra.mxu0 0.0
        %1055 = vmatprep.subr.mxu0 0.0
        %1056 = vmatpush1.msra.mxu0 0.0
        %1057 = vmatprep.subr.mxu0 0.0
        %1058 = vmatpush1.msra.mxu0 0.0
        %1059 = vmatprep.subr.mxu0 0.0
        %1060 = vmatpush1.msra.mxu0 0.0
        %1061 = vmatprep.subr.mxu0 0.0
        %1062 = vmatpush1.msra.mxu0 0.0
        %1063 = vmatprep.subr.mxu0 0.0
        %1064 = vmatpush1.msra.mxu0 0.0
        %1065 = vmatprep.subr.mxu0 0.0
        %1066 = vmatpush1.msra.mxu0 0.0
        %1067 = vmatprep.subr.mxu0 0.0
        %1068 = vmatpush1.msra.mxu0 0.0
        %1069 = vmatprep.subr.mxu0 0.0
        %1070 = vmatpush1.msra.mxu0 0.0
        %1071 = vmatprep.subr.mxu0 0.0
        %1072 = vmatpush1.msra.mxu0 0.0
        %1073 = vmatprep.subr.mxu0 0.0
        %1074 = vmatpush1.msra.mxu0 0.0
        %1075 = vmatprep.subr.mxu0 0.0
        %1076 = vmatpush1.msra.mxu0 0.0
        %1077 = vmatprep.subr.mxu0 0.0
        %1078 = vmatpush1.msra.mxu0 0.0
        %1079 = vmatprep.subr.mxu0 0.0
        %1080 = vmatpush1.msra.mxu0 0.0
        %1081 = vmatprep.subr.mxu0 0.0
        %1082 = vmatpush1.msra.mxu0 0.0
        %1083 = vmatprep.subr.mxu0 0.0
        %1084 = vmatpush1.msra.mxu0 0.0
        %1085 = vmatprep.subr.mxu0 0.0
        %1086 = vmatpush1.msra.mxu0 0.0
        %1087 = vmatprep.subr.mxu0 0.0
        %1088 = vmatpush1.msra.mxu0 0.0
        %1089 = vmatprep.subr.mxu0 0.0
        %1090 = vmatpush1.msra.mxu0 0.0
        %1091 = vmatprep.mubr.f32.mxu0 0.0
        %1092 = vmatmul.mubr.f32.gmra.mrb[0].mxu0 %v964
        %v1093 = vpop.f32.mrb[0].mxu0
        %v1094 = vadd.f32 0.0, %v1093
        %v1095 = vpop.f32.mrb[0].mxu0
        %1096 = vmatprep.mubr.f32.mxu0 0.0
        %1097 = vmatmul.mubr.f32.gmra.mrb[0].mxu0 %v967
        %v1098 = vpop.f32.mrb[0].mxu0
        %v1099 = vadd.f32 0.0, %v1098
        %v1100 = vpop.f32.mrb[0].mxu0
        %1101 = vmatprep.mubr.f32.mxu0 0.0
        %1102 = vmatmul.mubr.f32.gmra.mrb[0].mxu0 %v970
        %v1103 = vpop.f32.mrb[0].mxu0
        %v1104 = vadd.f32 0.0, %v1103
        %v1105 = vpop.f32.mrb[0].mxu0
        %1106 = vmatprep.mubr.f32.mxu0 0.0
        %1107 = vmatmul.mubr.f32.gmra.mrb[0].mxu0 %v973
        %v1108 = vpop.f32.mrb[0].mxu0
        %v1109 = vadd.f32 0.0, %v1108
        %v1110 = vpop.f32.mrb[0].mxu0
        %1111 = vmatprep.mubr.f32.mxu0 0.0
        %1112 = vmatmul.mubr.f32.gmra.mrb[0].mxu0 %v976
        %v1113 = vpop.f32.mrb[0].mxu0
        %v1114 = vadd.f32 0.0, %v1113
        %v1115 = vpop.f32.mrb[0].mxu0
        %1116 = vmatprep.mubr.f32.mxu0 0.0
        %1117 = vmatmul.mubr.f32.gmra.mrb[0].mxu0 %v979
        %v1118 = vpop.f32.mrb[0].mxu0
        %v1119 = vadd.f32 0.0, %v1118
        %v1120 = vpop.f32.mrb[0].mxu0
        %1121 = vmatprep.mubr.f32.mxu0 0.0
        %1122 = vmatmul.mubr.f32.gmra.mrb[0].mxu0 %v982
        %v1123 = vpop.f32.mrb[0].mxu0
        %v1124 = vadd.f32 0.0, %v1123
        %v1125 = vpop.f32.mrb[0].mxu0
        %1126 = vmatprep.mubr.f32.mxu0 0.0
        %1127 = vmatmul.mubr.f32.gmra.mrb[0].mxu0 %v985
        %v1128 = vpop.f32.mrb[0].mxu0
        %v1129 = vadd.f32 0.0, %v1128
        %v1130 = vpop.f32.mrb[0].mxu0
        %1131 = vmatprep.mubr.f32.mxu0 0.0
        %1132 = vmatmul.mubr.f32.gmra.mrb[0].mxu0 %v988
        %v1133 = vpop.f32.mrb[0].mxu0
        %v1134 = vadd.f32 0.0, %v1133
        %v1135 = vpop.f32.mrb[0].mxu0
        %1136 = vmatprep.mubr.f32.mxu0 0.0
        %1137 = vmatmul.mubr.f32.gmra.mrb[0].mxu0 %v991
        %v1138 = vpop.f32.mrb[0].mxu0
        %v1139 = vadd.f32 0.0, %v1138
        %v1140 = vpop.f32.mrb[0].mxu0
        %1141 = vmatprep.mubr.f32.mxu0 0.0
        %1142 = vmatmul.mubr.f32.gmra.mrb[0].mxu0 %v994
        %v1143 = vpop.f32.mrb[0].mxu0
        %v1144 = vadd.f32 0.0, %v1143
        %v1145 = vpop.f32.mrb[0].mxu0
        %1146 = vmatprep.mubr.f32.mxu0 0.0
        %1147 = vmatmul.mubr.f32.gmra.mrb[0].mxu0 %v997
        %v1148 = vpop.f32.mrb[0].mxu0
        %v1149 = vadd.f32 0.0, %v1148
        %v1150 = vpop.f32.mrb[0].mxu0
        %1151 = vmatprep.mubr.f32.mxu0 0.0
        %1152 = vmatmul.mubr.f32.gmra.mrb[0].mxu0 %v1000
        %v1153 = vpop.f32.mrb[0].mxu0
        %v1154 = vadd.f32 0.0, %v1153
        %v1155 = vpop.f32.mrb[0].mxu0
        %1156 = vmatprep.mubr.f32.mxu0 0.0
        %1157 = vmatmul.mubr.f32.gmra.mrb[0].mxu0 %v1003
        %v1158 = vpop.f32.mrb[0].mxu0
        %v1159 = vadd.f32 0.0, %v1158
        %v1160 = vpop.f32.mrb[0].mxu0
        %1161 = vmatprep.mubr.f32.mxu0 0.0
        %1162 = vmatmul.mubr.f32.gmra.mrb[0].mxu0 %v1006
        %v1163 = vpop.f32.mrb[0].mxu0
        %v1164 = vadd.f32 0.0, %v1163
        %v1165 = vpop.f32.mrb[0].mxu0
        %1166 = vmatprep.mubr.f32.mxu0 0.0
        %1167 = vmatmul.mubr.f32.gmra.mrb[0].mxu0 %v1009
        %v1168 = vpop.f32.mrb[0].mxu0
        %v1169 = vadd.f32 0.0, %v1168
        %v1170 = vpop.f32.mrb[0].mxu0
        %1171 = vmatprep.mubr.f32.mxu0 0.0
        %1172 = vmatmul.mubr.f32.gmra.mrb[0].mxu0 %v1012
        %v1173 = vpop.f32.mrb[0].mxu0
        %v1174 = vadd.f32 0.0, %v1173
        %v1175 = vpop.f32.mrb[0].mxu0
        %1176 = vmatprep.mubr.f32.mxu0 0.0
        %1177 = vmatmul.mubr.f32.gmra.mrb[0].mxu0 %v1015
        %v1178 = vpop.f32.mrb[0].mxu0
        %v1179 = vadd.f32 0.0, %v1178
        %v1180 = vpop.f32.mrb[0].mxu0
        %1181 = vmatprep.mubr.f32.mxu0 0.0
        %1182 = vmatmul.mubr.f32.gmra.mrb[0].mxu0 %v1018
        %v1183 = vpop.f32.mrb[0].mxu0
        %v1184 = vadd.f32 0.0, %v1183
        %v1185 = vpop.f32.mrb[0].mxu0
        %1186 = vmatprep.mubr.f32.mxu0 0.0
        %1187 = vmatmul.mubr.f32.gmra.mrb[0].mxu0 %v1021
        %v1188 = vpop.f32.mrb[0].mxu0
        %v1189 = vadd.f32 0.0, %v1188
        %v1190 = vpop.f32.mrb[0].mxu0
        %1191 = vdwg.mxu0
        %v1193 = vsel %vm565, %v917, 0
        %v1196 = vsel %vm565, %v918, 0
        %v1199 = vsel %vm565, %v919, 0
        %v1202 = vsel %vm565, %v920, 0
        %v1205 = vsel %vm565, %v921, 0
        %v1208 = vsel %vm565, %v922, 0
        %v1211 = vsel %vm565, %v923, 0
        %v1214 = vsel %vm565, %v924, 0
        %v1217 = vsel %vm565, %v925, 0
        %v1220 = vsel %vm565, %v926, 0
        %v1223 = vsel %vm565, %v927, 0
        %v1226 = vsel %vm565, %v928, 0
        %v1229 = vsel %vm565, %v929, 0
        %v1232 = vsel %vm565, %v930, 0
        %v1235 = vsel %vm565, %v931, 0
        %v1238 = vsel %vm565, %v932, 0
        %v1241 = vsel %vm565, %v933, 0
        %v1244 = vsel %vm565, %v934, 0
        %v1247 = vsel %vm565, %v935, 0
        %v1250 = vsel %vm565, %v936, 0
        %v1253 = vsel %vm1023, %v938, 0
        %1255 = vmatprep.subr.mxu0 0.0
        %1256 = vmatpush1.msra.mxu0 %v937
        %1257 = vmatprep.subr.mxu0 0.0
        %1258 = vmatpush1.msra.mxu0 %v1253
        %1259 = vmatprep.subr.mxu0 0.0
        %1260 = vmatpush1.msra.mxu0 0.0
        %1261 = vmatprep.subr.mxu0 0.0
        %1262 = vmatpush1.msra.mxu0 0.0
        %1263 = vmatprep.subr.mxu0 0.0
        %1264 = vmatpush1.msra.mxu0 0.0
        %1265 = vmatprep.subr.mxu0 0.0
        %1266 = vmatpush1.msra.mxu0 0.0
        %1267 = vmatprep.subr.mxu0 0.0
        %1268 = vmatpush1.msra.mxu0 0.0
        %1269 = vmatprep.subr.mxu0 0.0
        %1270 = vmatpush1.msra.mxu0 0.0
        %1271 = vmatprep.subr.mxu0 0.0
        %1272 = vmatpush1.msra.mxu0 0.0
        %1273 = vmatprep.subr.mxu0 0.0
        %1274 = vmatpush1.msra.mxu0 0.0
        %1275 = vmatprep.subr.mxu0 0.0
        %1276 = vmatpush1.msra.mxu0 0.0
        %1277 = vmatprep.subr.mxu0 0.0
        %1278 = vmatpush1.msra.mxu0 0.0
        %1279 = vmatprep.subr.mxu0 0.0
        %1280 = vmatpush1.msra.mxu0 0.0
        %1281 = vmatprep.subr.mxu0 0.0
        %1282 = vmatpush1.msra.mxu0 0.0
        %1283 = vmatprep.subr.mxu0 0.0
        %1284 = vmatpush1.msra.mxu0 0.0
        %1285 = vmatprep.subr.mxu0 0.0
        %1286 = vmatpush1.msra.mxu0 0.0
        %1287 = vmatprep.subr.mxu0 0.0
        %1288 = vmatpush1.msra.mxu0 0.0
        %1289 = vmatprep.subr.mxu0 0.0
        %1290 = vmatpush1.msra.mxu0 0.0
        %1291 = vmatprep.subr.mxu0 0.0
        %1292 = vmatpush1.msra.mxu0 0.0
        %1293 = vmatprep.subr.mxu0 0.0
        %1294 = vmatpush1.msra.mxu0 0.0
        %1295 = vmatprep.subr.mxu0 0.0
        %1296 = vmatpush1.msra.mxu0 0.0
        %1297 = vmatprep.subr.mxu0 0.0
        %1298 = vmatpush1.msra.mxu0 0.0
        %1299 = vmatprep.subr.mxu0 0.0
        %1300 = vmatpush1.msra.mxu0 0.0
        %1301 = vmatprep.subr.mxu0 0.0
        %1302 = vmatpush1.msra.mxu0 0.0
        %1303 = vmatprep.subr.mxu0 0.0
        %1304 = vmatpush1.msra.mxu0 0.0
        %1305 = vmatprep.subr.mxu0 0.0
        %1306 = vmatpush1.msra.mxu0 0.0
        %1307 = vmatprep.subr.mxu0 0.0
        %1308 = vmatpush1.msra.mxu0 0.0
        %1309 = vmatprep.subr.mxu0 0.0
        %1310 = vmatpush1.msra.mxu0 0.0
        %1311 = vmatprep.subr.mxu0 0.0
        %1312 = vmatpush1.msra.mxu0 0.0
        %1313 = vmatprep.subr.mxu0 0.0
        %1314 = vmatpush1.msra.mxu0 0.0
        %1315 = vmatprep.subr.mxu0 0.0
        %1316 = vmatpush1.msra.mxu0 0.0
        %1317 = vmatprep.subr.mxu0 0.0
        %1318 = vmatpush1.msra.mxu0 0.0
        %1319 = vmatprep.mubr.f32.mxu0 0.0
        %1320 = vmatmul.mubr.f32.gmra.mrb[0].mxu0 %v1193
        %v1321 = vpop.f32.mrb[0].mxu0
        %v1322 = vadd.f32 %v1094, %v1321
        %v1323 = vpop.f32.mrb[0].mxu0
        %1324 = vmatprep.mubr.f32.mxu0 0.0
        %1325 = vmatmul.mubr.f32.gmra.mrb[0].mxu0 %v1196
        %v1326 = vpop.f32.mrb[0].mxu0
        %v1327 = vadd.f32 %v1099, %v1326
        %v1328 = vpop.f32.mrb[0].mxu0
        %1329 = vmatprep.mubr.f32.mxu0 0.0
        %1330 = vmatmul.mubr.f32.gmra.mrb[0].mxu0 %v1199
        %v1331 = vpop.f32.mrb[0].mxu0
        %v1332 = vadd.f32 %v1104, %v1331
        %v1333 = vpop.f32.mrb[0].mxu0
        %1334 = vmatprep.mubr.f32.mxu0 0.0
        %1335 = vmatmul.mubr.f32.gmra.mrb[0].mxu0 %v1202
        %v1336 = vpop.f32.mrb[0].mxu0
        %v1337 = vadd.f32 %v1109, %v1336
        %v1338 = vpop.f32.mrb[0].mxu0
        %1339 = vmatprep.mubr.f32.mxu0 0.0
        %1340 = vmatmul.mubr.f32.gmra.mrb[0].mxu0 %v1205
        %v1341 = vpop.f32.mrb[0].mxu0
        %v1342 = vadd.f32 %v1114, %v1341
        %v1343 = vpop.f32.mrb[0].mxu0
        %1344 = vmatprep.mubr.f32.mxu0 0.0
        %1345 = vmatmul.mubr.f32.gmra.mrb[0].mxu0 %v1208
        %v1346 = vpop.f32.mrb[0].mxu0
        %v1347 = vadd.f32 %v1119, %v1346
        %v1348 = vpop.f32.mrb[0].mxu0
        %1349 = vmatprep.mubr.f32.mxu0 0.0
        %1350 = vmatmul.mubr.f32.gmra.mrb[0].mxu0 %v1211
        %v1351 = vpop.f32.mrb[0].mxu0
        %v1352 = vadd.f32 %v1124, %v1351
        %v1353 = vpop.f32.mrb[0].mxu0
        %1354 = vmatprep.mubr.f32.mxu0 0.0
        %1355 = vmatmul.mubr.f32.gmra.mrb[0].mxu0 %v1214
        %v1356 = vpop.f32.mrb[0].mxu0
        %v1357 = vadd.f32 %v1129, %v1356
        %v1358 = vpop.f32.mrb[0].mxu0
        %1359 = vmatprep.mubr.f32.mxu0 0.0
        %1360 = vmatmul.mubr.f32.gmra.mrb[0].mxu0 %v1217
        %v1361 = vpop.f32.mrb[0].mxu0
        %v1362 = vadd.f32 %v1134, %v1361
        %v1363 = vpop.f32.mrb[0].mxu0
        %1364 = vmatprep.mubr.f32.mxu0 0.0
        %1365 = vmatmul.mubr.f32.gmra.mrb[0].mxu0 %v1220
        %v1366 = vpop.f32.mrb[0].mxu0
        %v1367 = vadd.f32 %v1139, %v1366
        %v1368 = vpop.f32.mrb[0].mxu0
        %1369 = vmatprep.mubr.f32.mxu0 0.0
        %1370 = vmatmul.mubr.f32.gmra.mrb[0].mxu0 %v1223
        %v1371 = vpop.f32.mrb[0].mxu0
        %v1372 = vadd.f32 %v1144, %v1371
        %v1373 = vpop.f32.mrb[0].mxu0
        %1374 = vmatprep.mubr.f32.mxu0 0.0
        %1375 = vmatmul.mubr.f32.gmra.mrb[0].mxu0 %v1226
        %v1376 = vpop.f32.mrb[0].mxu0
        %v1377 = vadd.f32 %v1149, %v1376
        %v1378 = vpop.f32.mrb[0].mxu0
        %1379 = vmatprep.mubr.f32.mxu0 0.0
        %1380 = vmatmul.mubr.f32.gmra.mrb[0].mxu0 %v1229
        %v1381 = vpop.f32.mrb[0].mxu0
        %v1382 = vadd.f32 %v1154, %v1381
        %v1383 = vpop.f32.mrb[0].mxu0
        %1384 = vmatprep.mubr.f32.mxu0 0.0
        %1385 = vmatmul.mubr.f32.gmra.mrb[0].mxu0 %v1232
        %v1386 = vpop.f32.mrb[0].mxu0
        %v1387 = vadd.f32 %v1159, %v1386
        %v1388 = vpop.f32.mrb[0].mxu0
        %1389 = vmatprep.mubr.f32.mxu0 0.0
        %1390 = vmatmul.mubr.f32.gmra.mrb[0].mxu0 %v1235
        %v1391 = vpop.f32.mrb[0].mxu0
        %v1392 = vadd.f32 %v1164, %v1391
        %v1393 = vpop.f32.mrb[0].mxu0
        %1394 = vmatprep.mubr.f32.mxu0 0.0
        %1395 = vmatmul.mubr.f32.gmra.mrb[0].mxu0 %v1238
        %v1396 = vpop.f32.mrb[0].mxu0
        %v1397 = vadd.f32 %v1169, %v1396
        %v1398 = vpop.f32.mrb[0].mxu0
        %1399 = vmatprep.mubr.f32.mxu0 0.0
        %1400 = vmatmul.mubr.f32.gmra.mrb[0].mxu0 %v1241
        %v1401 = vpop.f32.mrb[0].mxu0
        %v1402 = vadd.f32 %v1174, %v1401
        %v1403 = vpop.f32.mrb[0].mxu0
        %1404 = vmatprep.mubr.f32.mxu0 0.0
        %1405 = vmatmul.mubr.f32.gmra.mrb[0].mxu0 %v1244
        %v1406 = vpop.f32.mrb[0].mxu0
        %v1407 = vadd.f32 %v1179, %v1406
        %v1408 = vpop.f32.mrb[0].mxu0
        %1409 = vmatprep.mubr.f32.mxu0 0.0
        %1410 = vmatmul.mubr.f32.gmra.mrb[0].mxu0 %v1247
        %v1411 = vpop.f32.mrb[0].mxu0
        %v1412 = vadd.f32 %v1184, %v1411
        %v1413 = vpop.f32.mrb[0].mxu0
        %1414 = vmatprep.mubr.f32.mxu0 0.0
        %1415 = vmatmul.mubr.f32.gmra.mrb[0].mxu0 %v1250
        %v1416 = vpop.f32.mrb[0].mxu0
        %v1417 = vadd.f32 %v1189, %v1416
        %v1418 = vpop.f32.mrb[0].mxu0
        %1419 = vdwg.mxu0
        %v1420 = vld [vmem:[%s826] sm:$0xff]
        %v1421 = vld [vmem:[%s826 + $0x8] sm:$0xff]
        %v1422 = vld [vmem:[%s826 + $0x10] sm:$0xff]
        %v1423 = vld [vmem:[%s826 + $0x18] sm:$0xff]
        %v1424 = vld [vmem:[%s826 + $0x20] sm:$0xff]
        %v1425 = vld [vmem:[%s826 + $0x28] sm:$0xff]
        %v1426 = vld [vmem:[%s826 + $0x30] sm:$0xff]
        %v1427 = vld [vmem:[%s826 + $0x38] sm:$0xff]
        %v1428 = vld [vmem:[%s826 + $0x40] sm:$0xff]
        %v1429 = vld [vmem:[%s826 + $0x48] sm:$0xff]
        %v1430 = vld [vmem:[%s826 + $0x50] sm:$0xff]
        %v1431 = vld [vmem:[%s826 + $0x58] sm:$0xff]
        %v1432 = vld [vmem:[%s826 + $0x60] sm:$0xff]
        %v1433 = vld [vmem:[%s826 + $0x68] sm:$0xff]
        %v1434 = vld [vmem:[%s826 + $0x70] sm:$0xff]
        %v1435 = vld [vmem:[%s826 + $0x78] sm:$0xff]
        %v1436 = vld [vmem:[%s826 + $0x80] sm:$0xff]
        %v1437 = vld [vmem:[%s826 + $0x88] sm:$0xff]
        %v1438 = vld [vmem:[%s826 + $0x90] sm:$0xff]
        %v1439 = vld [vmem:[%s826 + $0x98] sm:$0xff]
        %s1440 = scalar_lea.vmem [#allocation12], 32
        %v1441 = vld [vmem:[%s1440] sm:$0xff]
        %v1442 = vld [vmem:[%s1440 + $0x8] sm:$0xf]
        %v1444 = vsel %vm565, %v1420, 0
        %v1447 = vsel %vm565, %v1421, 0
        %v1450 = vsel %vm565, %v1422, 0
        %v1453 = vsel %vm565, %v1423, 0
        %v1456 = vsel %vm565, %v1424, 0
        %v1459 = vsel %vm565, %v1425, 0
        %v1462 = vsel %vm565, %v1426, 0
        %v1465 = vsel %vm565, %v1427, 0
        %v1468 = vsel %vm565, %v1428, 0
        %v1471 = vsel %vm565, %v1429, 0
        %v1474 = vsel %vm565, %v1430, 0
        %v1477 = vsel %vm565, %v1431, 0
        %v1480 = vsel %vm565, %v1432, 0
        %v1483 = vsel %vm565, %v1433, 0
        %v1486 = vsel %vm565, %v1434, 0
        %v1489 = vsel %vm565, %v1435, 0
        %v1492 = vsel %vm565, %v1436, 0
        %v1495 = vsel %vm565, %v1437, 0
        %v1498 = vsel %vm565, %v1438, 0
        %v1501 = vsel %vm565, %v1439, 0
        %v1504 = vsel %vm1023, %v1442, 0
        %1506 = vmatprep.subr.mxu0 0.0
        %1507 = vmatpush1.msra.mxu0 %v1441
        %1508 = vmatprep.subr.mxu0 0.0
        %1509 = vmatpush1.msra.mxu0 %v1504
        %1510 = vmatprep.subr.mxu0 0.0
        %1511 = vmatpush1.msra.mxu0 0.0
        %1512 = vmatprep.subr.mxu0 0.0
        %1513 = vmatpush1.msra.mxu0 0.0
        %1514 = vmatprep.subr.mxu0 0.0
        %1515 = vmatpush1.msra.mxu0 0.0
        %1516 = vmatprep.subr.mxu0 0.0
        %1517 = vmatpush1.msra.mxu0 0.0
        %1518 = vmatprep.subr.mxu0 0.0
        %1519 = vmatpush1.msra.mxu0 0.0
        %1520 = vmatprep.subr.mxu0 0.0
        %1521 = vmatpush1.msra.mxu0 0.0
        %1522 = vmatprep.subr.mxu0 0.0
        %1523 = vmatpush1.msra.mxu0 0.0
        %1524 = vmatprep.subr.mxu0 0.0
        %1525 = vmatpush1.msra.mxu0 0.0
        %1526 = vmatprep.subr.mxu0 0.0
        %1527 = vmatpush1.msra.mxu0 0.0
        %1528 = vmatprep.subr.mxu0 0.0
        %1529 = vmatpush1.msra.mxu0 0.0
        %1530 = vmatprep.subr.mxu0 0.0
        %1531 = vmatpush1.msra.mxu0 0.0
        %1532 = vmatprep.subr.mxu0 0.0
        %1533 = vmatpush1.msra.mxu0 0.0
        %1534 = vmatprep.subr.mxu0 0.0
        %1535 = vmatpush1.msra.mxu0 0.0
        %1536 = vmatprep.subr.mxu0 0.0
        %1537 = vmatpush1.msra.mxu0 0.0
        %1538 = vmatprep.subr.mxu0 0.0
        %1539 = vmatpush1.msra.mxu0 0.0
        %1540 = vmatprep.subr.mxu0 0.0
        %1541 = vmatpush1.msra.mxu0 0.0
        %1542 = vmatprep.subr.mxu0 0.0
        %1543 = vmatpush1.msra.mxu0 0.0
        %1544 = vmatprep.subr.mxu0 0.0
        %1545 = vmatpush1.msra.mxu0 0.0
        %1546 = vmatprep.subr.mxu0 0.0
        %1547 = vmatpush1.msra.mxu0 0.0
        %1548 = vmatprep.subr.mxu0 0.0
        %1549 = vmatpush1.msra.mxu0 0.0
        %1550 = vmatprep.subr.mxu0 0.0
        %1551 = vmatpush1.msra.mxu0 0.0
        %1552 = vmatprep.subr.mxu0 0.0
        %1553 = vmatpush1.msra.mxu0 0.0
        %1554 = vmatprep.subr.mxu0 0.0
        %1555 = vmatpush1.msra.mxu0 0.0
        %1556 = vmatprep.subr.mxu0 0.0
        %1557 = vmatpush1.msra.mxu0 0.0
        %1558 = vmatprep.subr.mxu0 0.0
        %1559 = vmatpush1.msra.mxu0 0.0
        %1560 = vmatprep.subr.mxu0 0.0
        %1561 = vmatpush1.msra.mxu0 0.0
        %1562 = vmatprep.subr.mxu0 0.0
        %1563 = vmatpush1.msra.mxu0 0.0
        %1564 = vmatprep.subr.mxu0 0.0
        %1565 = vmatpush1.msra.mxu0 0.0
        %1566 = vmatprep.subr.mxu0 0.0
        %1567 = vmatpush1.msra.mxu0 0.0
        %1568 = vmatprep.subr.mxu0 0.0
        %1569 = vmatpush1.msra.mxu0 0.0
        %1570 = vmatprep.mubr.f32.mxu0 0.0
        %1571 = vmatmul.mubr.f32.gmra.mrb[0].mxu0 %v1444
        %v1572 = vpop.f32.mrb[0].mxu0
        %v1573 = vadd.f32 0.0, %v1572
        %v1574 = vpop.f32.mrb[0].mxu0
        %1575 = vmatprep.mubr.f32.mxu0 0.0
        %1576 = vmatmul.mubr.f32.gmra.mrb[0].mxu0 %v1447
        %v1577 = vpop.f32.mrb[0].mxu0
        %v1578 = vadd.f32 0.0, %v1577
        %v1579 = vpop.f32.mrb[0].mxu0
        %1580 = vmatprep.mubr.f32.mxu0 0.0
        %1581 = vmatmul.mubr.f32.gmra.mrb[0].mxu0 %v1450
        %v1582 = vpop.f32.mrb[0].mxu0
        %v1583 = vadd.f32 0.0, %v1582
        %v1584 = vpop.f32.mrb[0].mxu0
        %1585 = vmatprep.mubr.f32.mxu0 0.0
        %1586 = vmatmul.mubr.f32.gmra.mrb[0].mxu0 %v1453
        %v1587 = vpop.f32.mrb[0].mxu0
        %v1588 = vadd.f32 0.0, %v1587
        %v1589 = vpop.f32.mrb[0].mxu0
        %1590 = vmatprep.mubr.f32.mxu0 0.0
        %1591 = vmatmul.mubr.f32.gmra.mrb[0].mxu0 %v1456
        %v1592 = vpop.f32.mrb[0].mxu0
        %v1593 = vadd.f32 0.0, %v1592
        %v1594 = vpop.f32.mrb[0].mxu0
        %1595 = vmatprep.mubr.f32.mxu0 0.0
        %1596 = vmatmul.mubr.f32.gmra.mrb[0].mxu0 %v1459
        %v1597 = vpop.f32.mrb[0].mxu0
        %v1598 = vadd.f32 0.0, %v1597
        %v1599 = vpop.f32.mrb[0].mxu0
        %1600 = vmatprep.mubr.f32.mxu0 0.0
        %1601 = vmatmul.mubr.f32.gmra.mrb[0].mxu0 %v1462
        %v1602 = vpop.f32.mrb[0].mxu0
        %v1603 = vadd.f32 0.0, %v1602
        %v1604 = vpop.f32.mrb[0].mxu0
        %1605 = vmatprep.mubr.f32.mxu0 0.0
        %1606 = vmatmul.mubr.f32.gmra.mrb[0].mxu0 %v1465
        %v1607 = vpop.f32.mrb[0].mxu0
        %v1608 = vadd.f32 0.0, %v1607
        %v1609 = vpop.f32.mrb[0].mxu0
        %1610 = vmatprep.mubr.f32.mxu0 0.0
        %1611 = vmatmul.mubr.f32.gmra.mrb[0].mxu0 %v1468
        %v1612 = vpop.f32.mrb[0].mxu0
        %v1613 = vadd.f32 0.0, %v1612
        %v1614 = vpop.f32.mrb[0].mxu0
        %1615 = vmatprep.mubr.f32.mxu0 0.0
        %1616 = vmatmul.mubr.f32.gmra.mrb[0].mxu0 %v1471
        %v1617 = vpop.f32.mrb[0].mxu0
        %v1618 = vadd.f32 0.0, %v1617
        %v1619 = vpop.f32.mrb[0].mxu0
        %1620 = vmatprep.mubr.f32.mxu0 0.0
        %1621 = vmatmul.mubr.f32.gmra.mrb[0].mxu0 %v1474
        %v1622 = vpop.f32.mrb[0].mxu0
        %v1623 = vadd.f32 0.0, %v1622
        %v1624 = vpop.f32.mrb[0].mxu0
        %1625 = vmatprep.mubr.f32.mxu0 0.0
        %1626 = vmatmul.mubr.f32.gmra.mrb[0].mxu0 %v1477
        %v1627 = vpop.f32.mrb[0].mxu0
        %v1628 = vadd.f32 0.0, %v1627
        %v1629 = vpop.f32.mrb[0].mxu0
        %1630 = vmatprep.mubr.f32.mxu0 0.0
        %1631 = vmatmul.mubr.f32.gmra.mrb[0].mxu0 %v1480
        %v1632 = vpop.f32.mrb[0].mxu0
        %v1633 = vadd.f32 0.0, %v1632
        %v1634 = vpop.f32.mrb[0].mxu0
        %1635 = vmatprep.mubr.f32.mxu0 0.0
        %1636 = vmatmul.mubr.f32.gmra.mrb[0].mxu0 %v1483
        %v1637 = vpop.f32.mrb[0].mxu0
        %v1638 = vadd.f32 0.0, %v1637
        %v1639 = vpop.f32.mrb[0].mxu0
        %1640 = vmatprep.mubr.f32.mxu0 0.0
        %1641 = vmatmul.mubr.f32.gmra.mrb[0].mxu0 %v1486
        %v1642 = vpop.f32.mrb[0].mxu0
        %v1643 = vadd.f32 0.0, %v1642
        %v1644 = vpop.f32.mrb[0].mxu0
        %1645 = vmatprep.mubr.f32.mxu0 0.0
        %1646 = vmatmul.mubr.f32.gmra.mrb[0].mxu0 %v1489
        %v1647 = vpop.f32.mrb[0].mxu0
        %v1648 = vadd.f32 0.0, %v1647
        %v1649 = vpop.f32.mrb[0].mxu0
        %1650 = vmatprep.mubr.f32.mxu0 0.0
        %1651 = vmatmul.mubr.f32.gmra.mrb[0].mxu0 %v1492
        %v1652 = vpop.f32.mrb[0].mxu0
        %v1653 = vadd.f32 0.0, %v1652
        %v1654 = vpop.f32.mrb[0].mxu0
        %1655 = vmatprep.mubr.f32.mxu0 0.0
        %1656 = vmatmul.mubr.f32.gmra.mrb[0].mxu0 %v1495
        %v1657 = vpop.f32.mrb[0].mxu0
        %v1658 = vadd.f32 0.0, %v1657
        %v1659 = vpop.f32.mrb[0].mxu0
        %1660 = vmatprep.mubr.f32.mxu0 0.0
        %1661 = vmatmul.mubr.f32.gmra.mrb[0].mxu0 %v1498
        %v1662 = vpop.f32.mrb[0].mxu0
        %v1663 = vadd.f32 0.0, %v1662
        %v1664 = vpop.f32.mrb[0].mxu0
        %1665 = vmatprep.mubr.f32.mxu0 0.0
        %1666 = vmatmul.mubr.f32.gmra.mrb[0].mxu0 %v1501
        %v1667 = vpop.f32.mrb[0].mxu0
        %v1668 = vadd.f32 0.0, %v1667
        %v1669 = vpop.f32.mrb[0].mxu0
        %1670 = vdwg.mxu0
        %v1671 = vadd.f32 %v1322, %v1573
        %v1672 = vadd.f32 %v1327, %v1578
        %v1673 = vadd.f32 %v1332, %v1583
        %v1674 = vadd.f32 %v1337, %v1588
        %v1675 = vadd.f32 %v1342, %v1593
        %v1676 = vadd.f32 %v1347, %v1598
        %v1677 = vadd.f32 %v1352, %v1603
        %v1678 = vadd.f32 %v1357, %v1608
        %v1679 = vadd.f32 %v1362, %v1613
        %v1680 = vadd.f32 %v1367, %v1618
        %v1681 = vadd.f32 %v1372, %v1623
        %v1682 = vadd.f32 %v1377, %v1628
        %v1683 = vadd.f32 %v1382, %v1633
        %v1684 = vadd.f32 %v1387, %v1638
        %v1685 = vadd.f32 %v1392, %v1643
        %v1686 = vadd.f32 %v1397, %v1648
        %v1687 = vadd.f32 %v1402, %v1653
        %v1688 = vadd.f32 %v1407, %v1658
        %v1689 = vadd.f32 %v1412, %v1663
        %v1690 = vadd.f32 %v1417, %v1668
        %v1691 = vld [vmem:[#allocation13] sm:$0x1]
        %v1693 = vlaneseq
        %v1694 = vshrl.u32 %v1693, 7
        %v1695 = vsub.s32 0, %v1694
        %v1696 = vrot.slane %v1691, %v1695
        %v1698 = vadd.f32 %v1671, %v1696
        %v1699 = vadd.f32 %v1672, %v1696
        %v1700 = vadd.f32 %v1673, %v1696
        %v1701 = vadd.f32 %v1674, %v1696
        %v1702 = vadd.f32 %v1675, %v1696
        %v1703 = vadd.f32 %v1676, %v1696
        %v1704 = vadd.f32 %v1677, %v1696
        %v1705 = vadd.f32 %v1678, %v1696
        %v1706 = vadd.f32 %v1679, %v1696
        %v1707 = vadd.f32 %v1680, %v1696
        %v1708 = vadd.f32 %v1681, %v1696
        %v1709 = vadd.f32 %v1682, %v1696
        %v1710 = vadd.f32 %v1683, %v1696
        %v1711 = vadd.f32 %v1684, %v1696
        %v1712 = vadd.f32 %v1685, %v1696
        %v1713 = vadd.f32 %v1686, %v1696
        %v1714 = vadd.f32 %v1687, %v1696
        %v1715 = vadd.f32 %v1688, %v1696
        %v1716 = vadd.f32 %v1689, %v1696
        %v1717 = vadd.f32 %v1690, %v1696
        %v1718 = vmul.f32 %v1698, 0.2
        %v1719 = vmul.f32 %v1699, 0.2
        %v1720 = vmul.f32 %v1700, 0.2
        %v1721 = vmul.f32 %v1701, 0.2
        %v1722 = vmul.f32 %v1702, 0.2
        %v1723 = vmul.f32 %v1703, 0.2
        %v1724 = vmul.f32 %v1704, 0.2
        %v1725 = vmul.f32 %v1705, 0.2
        %v1726 = vmul.f32 %v1706, 0.2
        %v1727 = vmul.f32 %v1707, 0.2
        %v1728 = vmul.f32 %v1708, 0.2
        %v1729 = vmul.f32 %v1709, 0.2
        %v1730 = vmul.f32 %v1710, 0.2
        %v1731 = vmul.f32 %v1711, 0.2
        %v1732 = vmul.f32 %v1712, 0.2
        %v1733 = vmul.f32 %v1713, 0.2
        %v1734 = vmul.f32 %v1714, 0.2
        %v1735 = vmul.f32 %v1715, 0.2
        %v1736 = vmul.f32 %v1716, 0.2
        %v1737 = vmul.f32 %v1717, 0.2
        %v1738 = vmax.f32 %v1698, %v1718
        %v1739 = vmax.f32 %v1699, %v1719
        %v1740 = vmax.f32 %v1700, %v1720
        %v1741 = vmax.f32 %v1701, %v1721
        %v1742 = vmax.f32 %v1702, %v1722
        %v1743 = vmax.f32 %v1703, %v1723
        %v1744 = vmax.f32 %v1704, %v1724
        %v1745 = vmax.f32 %v1705, %v1725
        %v1746 = vmax.f32 %v1706, %v1726
        %v1747 = vmax.f32 %v1707, %v1727
        %v1748 = vmax.f32 %v1708, %v1728
        %v1749 = vmax.f32 %v1709, %v1729
        %v1750 = vmax.f32 %v1710, %v1730
        %v1751 = vmax.f32 %v1711, %v1731
        %v1752 = vmax.f32 %v1712, %v1732
        %v1753 = vmax.f32 %v1713, %v1733
        %v1754 = vmax.f32 %v1714, %v1734
        %v1755 = vmax.f32 %v1715, %v1735
        %v1756 = vmax.f32 %v1716, %v1736
        %v1757 = vmax.f32 %v1717, %v1737
        %1758 = vst.msk [vmem:[#allocation3] sm:$0xff] %vm560, %v1738
        %1759 = vst.msk [vmem:[#allocation3 + $0x8] sm:$0xff] %vm560, %v1739
        %1760 = vst.msk [vmem:[#allocation3 + $0x10] sm:$0xff] %vm560, %v1740
        %1761 = vst.msk [vmem:[#allocation3 + $0x18] sm:$0xff] %vm560, %v1741
        %1762 = vst.msk [vmem:[#allocation3 + $0x20] sm:$0xff] %vm560, %v1742
        %1763 = vst.msk [vmem:[#allocation3 + $0x28] sm:$0xff] %vm560, %v1743
        %1764 = vst.msk [vmem:[#allocation3 + $0x30] sm:$0xff] %vm560, %v1744
        %1765 = vst.msk [vmem:[#allocation3 + $0x38] sm:$0xff] %vm560, %v1745
        %1766 = vst.msk [vmem:[#allocation3 + $0x40] sm:$0xff] %vm560, %v1746
        %1767 = vst.msk [vmem:[#allocation3 + $0x48] sm:$0xff] %vm560, %v1747
        %1768 = vst.msk [vmem:[#allocation3 + $0x50] sm:$0xff] %vm560, %v1748
        %1769 = vst.msk [vmem:[#allocation3 + $0x58] sm:$0xff] %vm560, %v1749
        %1770 = vst.msk [vmem:[#allocation3 + $0x60] sm:$0xff] %vm560, %v1750
        %1771 = vst.msk [vmem:[#allocation3 + $0x68] sm:$0xff] %vm560, %v1751
        %1772 = vst.msk [vmem:[#allocation3 + $0x70] sm:$0xff] %vm560, %v1752
        %1773 = vst.msk [vmem:[#allocation3 + $0x78] sm:$0xff] %vm560, %v1753
        %1774 = vst.msk [vmem:[#allocation3 + $0x80] sm:$0xff] %vm560, %v1754
        %1775 = vst.msk [vmem:[#allocation3 + $0x88] sm:$0xff] %vm560, %v1755
        %1776 = vst.msk [vmem:[#allocation3 + $0x90] sm:$0xff] %vm560, %v1756
        %1777 = vst.msk [vmem:[#allocation3 + $0x98] sm:$0xff] %vm560, %v1757
        // Predicated region
        $region69: #{discriminator_block.3} parent=43 // pred_check
          %p1778 = pneg %p484
        $region70: #{discriminator_block.3} parent=43 // pred_check_branch
          %1780 = sbr.rel (%p1778) target = $region72
        $region71: #{discriminator_block.3} parent=43 // pred_region
          %s1781 = scalar_lea.vmem [#allocation3], 16
          %v1782 = vld [vmem:[%s1781] sm:$0xff]
          %v1783 = vld [vmem:[%s1781 + $0x8] sm:$0xff]
          %1784 = vst.msk [vmem:[#allocation3] sm:$0xff] %vm560, %v1782
          %1785 = vst.msk [vmem:[#allocation3 + $0x8] sm:$0xff] %vm560, %v1783
        $region72: #{discriminator_block.3} parent=43 // pred_fallthru
          _
        // Predicated region
        $region73: #{discriminator_block.3} parent=43 // pred_check
          %p1786 = pneg %p485
        $region74: #{discriminator_block.3} parent=43 // pred_check_branch
          %1788 = sbr.rel (%p1786) target = $region76
        $region75: #{discriminator_block.3} parent=43 // pred_region
          %s1789 = scalar_lea.vmem [#allocation3], 128
          %v1790 = vld [vmem:[%s1789] sm:$0xff]
          %v1791 = vld [vmem:[%s1789 + $0x8] sm:$0xff]
          %s1792 = scalar_lea.vmem [#allocation3], 144
          %1793 = vst.msk [vmem:[%s1792] sm:$0xff] %vm560, %v1790
          %1794 = vst.msk [vmem:[%s1792 + $0x8] sm:$0xff] %vm560, %v1791
        $region76: #{discriminator_block.3} parent=43 // pred_fallthru
          _
        %v1795 = vld [vmem:[#allocation3] ss:$2 sm:$0xff]
        %s1796 = scalar_lea.vmem [#allocation3], 16
        %v1797 = vld [vmem:[%s1796] ss:$2 sm:$0xff]
        %s1798 = scalar_lea.vmem [#allocation3], 32
        %v1799 = vld [vmem:[%s1798] ss:$2 sm:$0xff]
        %s1800 = scalar_lea.vmem [#allocation3], 48
        %v1801 = vld [vmem:[%s1800] ss:$2 sm:$0xff]
        %s1802 = scalar_lea.vmem [#allocation3], 64
        %v1803 = vld [vmem:[%s1802] ss:$2 sm:$0xff]
        %s1804 = scalar_lea.vmem [#allocation3], 80
        %v1805 = vld [vmem:[%s1804] ss:$2 sm:$0xff]
        %s1806 = scalar_lea.vmem [#allocation3], 96
        %v1807 = vld [vmem:[%s1806] ss:$2 sm:$0xff]
        %s1808 = scalar_lea.vmem [#allocation3], 112
        %v1809 = vld [vmem:[%s1808] ss:$2 sm:$0xff]
        %s1810 = scalar_lea.vmem [#allocation3], 128
        %v1811 = vld [vmem:[%s1810] ss:$2 sm:$0xff]
        %s1812 = scalar_lea.vmem [#allocation3], 144
        %v1813 = vld [vmem:[%s1812] ss:$2 sm:$0xff]
        %s1814 = scalar_lea.vmem [#allocation3], 1
        %v1815 = vld [vmem:[%s1814] ss:$2 sm:$0xff]
        %s1816 = scalar_lea.vmem [#allocation3], 17
        %v1817 = vld [vmem:[%s1816] ss:$2 sm:$0xff]
        %s1818 = scalar_lea.vmem [#allocation3], 33
        %v1819 = vld [vmem:[%s1818] ss:$2 sm:$0xff]
        %s1820 = scalar_lea.vmem [#allocation3], 49
        %v1821 = vld [vmem:[%s1820] ss:$2 sm:$0xff]
        %s1822 = scalar_lea.vmem [#allocation3], 65
        %v1823 = vld [vmem:[%s1822] ss:$2 sm:$0xff]
        %s1824 = scalar_lea.vmem [#allocation3], 81
        %v1825 = vld [vmem:[%s1824] ss:$2 sm:$0xff]
        %s1826 = scalar_lea.vmem [#allocation3], 97
        %v1827 = vld [vmem:[%s1826] ss:$2 sm:$0xff]
        %s1828 = scalar_lea.vmem [#allocation3], 113
        %v1829 = vld [vmem:[%s1828] ss:$2 sm:$0xff]
        %s1830 = scalar_lea.vmem [#allocation3], 129
        %v1831 = vld [vmem:[%s1830] ss:$2 sm:$0xff]
        %s1832 = scalar_lea.vmem [#allocation3], 145
        %v1833 = vld [vmem:[%s1832] ss:$2 sm:$0xff]
        %v1844 = vrot.slane %v1815, 7
        %v1845 = vrot.slane %v1817, 7
        %v1846 = vrot.slane %v1819, 7
        %v1847 = vrot.slane %v1821, 7
        %v1848 = vrot.slane %v1823, 7
        %v1849 = vrot.slane %v1825, 7
        %v1850 = vrot.slane %v1827, 7
        %v1851 = vrot.slane %v1829, 7
        %v1852 = vrot.slane %v1831, 7
        %v1853 = vrot.slane %v1833, 7
        %v1864 = vsel %vm505, %v1795, %v1844
        %v1865 = vsel %vm505, %v1797, %v1845
        %v1866 = vsel %vm505, %v1799, %v1846
        %v1867 = vsel %vm505, %v1801, %v1847
        %v1868 = vsel %vm505, %v1803, %v1848
        %v1869 = vsel %vm505, %v1805, %v1849
        %v1870 = vsel %vm505, %v1807, %v1850
        %v1871 = vsel %vm505, %v1809, %v1851
        %v1872 = vsel %vm505, %v1811, %v1852
        %v1873 = vsel %vm505, %v1813, %v1853
        %v1884 = vrot.slane %v1795, 1
        %v1885 = vrot.slane %v1797, 1
        %v1886 = vrot.slane %v1799, 1
        %v1887 = vrot.slane %v1801, 1
        %v1888 = vrot.slane %v1803, 1
        %v1889 = vrot.slane %v1805, 1
        %v1890 = vrot.slane %v1807, 1
        %v1891 = vrot.slane %v1809, 1
        %v1892 = vrot.slane %v1811, 1
        %v1893 = vrot.slane %v1813, 1
        %v1904 = vsel %vm518, %v1884, %v1815
        %v1905 = vsel %vm518, %v1885, %v1817
        %v1906 = vsel %vm518, %v1886, %v1819
        %v1907 = vsel %vm518, %v1887, %v1821
        %v1908 = vsel %vm518, %v1888, %v1823
        %v1909 = vsel %vm518, %v1889, %v1825
        %v1910 = vsel %vm518, %v1890, %v1827
        %v1911 = vsel %vm518, %v1891, %v1829
        %v1912 = vsel %vm518, %v1892, %v1831
        %v1913 = vsel %vm518, %v1893, %v1833
        %v1914 = vmul.f32 %v1795, 3.0
        %v1915 = vmul.f32 %v1797, 3.0
        %v1916 = vmul.f32 %v1799, 3.0
        %v1917 = vmul.f32 %v1801, 3.0
        %v1918 = vmul.f32 %v1803, 3.0
        %v1919 = vmul.f32 %v1805, 3.0
        %v1920 = vmul.f32 %v1807, 3.0
        %v1921 = vmul.f32 %v1809, 3.0
        %v1922 = vmul.f32 %v1811, 3.0
        %v1923 = vmul.f32 %v1813, 3.0
        %v1924 = vadd.f32 %v1864, %v1914
        %v1925 = vadd.f32 %v1865, %v1915
        %v1926 = vadd.f32 %v1866, %v1916
        %v1927 = vadd.f32 %v1867, %v1917
        %v1928 = vadd.f32 %v1868, %v1918
        %v1929 = vadd.f32 %v1869, %v1919
        %v1930 = vadd.f32 %v1870, %v1920
        %v1931 = vadd.f32 %v1871, %v1921
        %v1932 = vadd.f32 %v1872, %v1922
        %v1933 = vadd.f32 %v1873, %v1923
        %v1934 = vmul.f32 %v1815, 3.0
        %v1935 = vmul.f32 %v1817, 3.0
        %v1936 = vmul.f32 %v1819, 3.0
        %v1937 = vmul.f32 %v1821, 3.0
        %v1938 = vmul.f32 %v1823, 3.0
        %v1939 = vmul.f32 %v1825, 3.0
        %v1940 = vmul.f32 %v1827, 3.0
        %v1941 = vmul.f32 %v1829, 3.0
        %v1942 = vmul.f32 %v1831, 3.0
        %v1943 = vmul.f32 %v1833, 3.0
        %v1944 = vadd.f32 %v1924, %v1934
        %v1945 = vadd.f32 %v1925, %v1935
        %v1946 = vadd.f32 %v1926, %v1936
        %v1947 = vadd.f32 %v1927, %v1937
        %v1948 = vadd.f32 %v1928, %v1938
        %v1949 = vadd.f32 %v1929, %v1939
        %v1950 = vadd.f32 %v1930, %v1940
        %v1951 = vadd.f32 %v1931, %v1941
        %v1952 = vadd.f32 %v1932, %v1942
        %v1953 = vadd.f32 %v1933, %v1943
        %v1954 = vadd.f32 %v1944, %v1904
        %v1955 = vadd.f32 %v1945, %v1905
        %v1956 = vadd.f32 %v1946, %v1906
        %v1957 = vadd.f32 %v1947, %v1907
        %v1958 = vadd.f32 %v1948, %v1908
        %v1959 = vadd.f32 %v1949, %v1909
        %v1960 = vadd.f32 %v1950, %v1910
        %v1961 = vadd.f32 %v1951, %v1911
        %v1962 = vadd.f32 %v1952, %v1912
        %v1963 = vadd.f32 %v1953, %v1913
        %v1964 = vmul.f32 %v1954, 0.125
        %v1965 = vmul.f32 %v1955, 0.125
        %v1966 = vmul.f32 %v1956, 0.125
        %v1967 = vmul.f32 %v1957, 0.125
        %v1968 = vmul.f32 %v1958, 0.125
        %v1969 = vmul.f32 %v1959, 0.125
        %v1970 = vmul.f32 %v1960, 0.125
        %v1971 = vmul.f32 %v1961, 0.125
        %v1972 = vmul.f32 %v1962, 0.125
        %v1973 = vmul.f32 %v1963, 0.125
        %v1974 = vmul.f32 %v1965, 3.0
        %v1975 = vmul.f32 %v1967, 3.0
        %v1976 = vmul.f32 %v1969, 3.0
        %v1977 = vmul.f32 %v1971, 3.0
        %v1978 = vadd.f32 %v1964, %v1974
        %v1979 = vadd.f32 %v1966, %v1975
        %v1980 = vadd.f32 %v1968, %v1976
        %v1981 = vadd.f32 %v1970, %v1977
        %v1982 = vmul.f32 %v1966, 3.0
        %v1983 = vmul.f32 %v1968, 3.0
        %v1984 = vmul.f32 %v1970, 3.0
        %v1985 = vmul.f32 %v1972, 3.0
        %v1986 = vadd.f32 %v1978, %v1982
        %v1987 = vadd.f32 %v1979, %v1983
        %v1988 = vadd.f32 %v1980, %v1984
        %v1989 = vadd.f32 %v1981, %v1985
        %v1990 = vadd.f32 %v1986, %v1967
        %v1991 = vadd.f32 %v1987, %v1969
        %v1992 = vadd.f32 %v1988, %v1971
        %v1993 = vadd.f32 %v1989, %v1973
        %v1994 = vmul.f32 %v1990, 0.125
        %v1995 = vmul.f32 %v1991, 0.125
        %v1996 = vmul.f32 %v1992, 0.125
        %v1997 = vmul.f32 %v1993, 0.125
        %v1998 = vld [vmem:[%s419] sm:$0xff]
        %v1999 = vld [vmem:[%s419 + $0x8] sm:$0xff]
        %v2000 = vld [vmem:[%s419 + $0x10] sm:$0xff]
        %v2001 = vld [vmem:[%s419 + $0x18] sm:$0xff]
        %v2002 = vadd.f32 %v1994, %v1998
        %v2003 = vadd.f32 %v1995, %v1999
        %v2004 = vadd.f32 %v1996, %v2000
        %v2005 = vadd.f32 %v1997, %v2001
        %v2006 = vmul.f32 %v2002, 0.70710677
        %v2007 = vmul.f32 %v2003, 0.70710677
        %v2008 = vmul.f32 %v2004, 0.70710677
        %v2009 = vmul.f32 %v2005, 0.70710677
        %2010 = vst.msk [vmem:[%s470] sm:$0xff] %vm560, %v2006
        %2011 = vst.msk [vmem:[%s470 + $0x8] sm:$0xff] %vm560, %v2007
        %2012 = vst.msk [vmem:[%s470 + $0x10] sm:$0xff] %vm560, %v2008
        %2013 = vst.msk [vmem:[%s470 + $0x18] sm:$0xff] %vm560, %v2009
        %s2014 = sand.u32 %s222, 1
        %s2015 = scalar_lea.sflag [#allocation6], %s2014
        %s2016 = sand.u32 %s222, 1
        %s2017 = smul.addr %s2016, 32
        %s2018 = scalar_lea.vmem [#allocation15], %s2017
        // Predicated region
        $region77: #{discriminator_block.3} parent=43 // pred_check
          %p2019 = pneg %p232
        $region78: #{discriminator_block.3} parent=43 // pred_check_branch
          %2021 = sbr.rel (%p2019) target = $region80
        $region79: #{discriminator_block.3} parent=43 // pred_region
          %s2022 = smul.u32 4, %s35
          %s2024 = ssub.s32 512, 512
          %2025 = vsyncadd %s2015, %s2024
          %s2026 = smul.addr %s34, 8
          %s2027 = sadd.s32 %s2022, %s2026
          %s2028 = smul.addr %s2027, 128
          %s2029 = scalar_lea.hbm %s6, %s2028
          %s2030 = sshll.u32 %s2018, 4
          %s2031 = int_to_ptr.vmem [resolvable:$true] %s2030
          %2036 = dma.vmem_to_hbm [thread:$0]  %s2031, 512, %s2029, %s2015, 128, 128, 8
        $region80: #{discriminator_block.3} parent=43 // pred_fallthru
          _
      $region44: #{discriminator_block.3} parent=5 // pred_fallthru
        _
      %p2037 = scmp.le.s32.totalorder 2, %s25
      // Predicated region
      $region81: #{discriminator_block.3} parent=5 // pred_check
        %p2038 = pneg %p2037
      $region82: #{discriminator_block.3} parent=5 // pred_check_branch
        %2040 = sbr.rel (%p2038) target = $region84
      $region83: #{discriminator_block.3} parent=5 // pred_region
        %s2041 = ssub.s32 %s25, 2
        // Predicated region
        $region85: #{discriminator_block.3} parent=83 // pred_check
          %p2042 = pneg %p238
        $region86: #{discriminator_block.3} parent=83 // pred_check_branch
          %2044 = sbr.rel (%p2042) target = $region88
        $region87: #{discriminator_block.3} parent=83 // pred_region
          %s2045 = sand.u32 %s223, 1
          %s2046 = scalar_lea.sflag [#allocation6], %s2045
          %s2047 = sand.u32 %s223, 1
          %s2048 = smul.addr %s2047, 32
          %s2049 = scalar_lea.vmem [#allocation15], %s2048
          %2050 = dma.done %s2046, 512
        $region88: #{discriminator_block.3} parent=83 // pred_fallthru
          _
      $region84: #{discriminator_block.3} parent=5 // pred_fallthru
        _
    $region6: #{discriminator_block.3} parent=1 // loop_footer
      %s29 = sadd.s32 1, %s25
    $region7: #{discriminator_block.3} parent=1 // loop_footer_branch
      %24 = sbr.rel target = $region3
    $region8: #{discriminator_block.3} parent=1 // loop_exit
      _
    %2051 = vsyncpa [#allocation5], 1
    %s2052 = scalar_lea.sflag [#allocation5], 1
    %2053 = vsyncpa %s2052, 1
    %2054 = vsyncpa [#allocation8], 1
    %s2055 = scalar_lea.sflag [#allocation8], 1
    %2056 = vsyncpa %s2055, 1
    %2057 = vsyncpa [#allocation11], 1
    %s2058 = scalar_lea.sflag [#allocation11], 1
    %2059 = vsyncpa %s2058, 1
    %2060 = vsyncpa [#allocation14], 1
    %2061 = vsyncpa [#allocation6], 1
    %s2062 = scalar_lea.sflag [#allocation6], 1
    %2063 = vsyncpa %s2062, 1

</llo_original>
